<compile_context>
chip_gen: v7x
topology: tpu7x:2x2x1
jax: 0.10.0
libtpu: 0.0.40
codegen_flags: <defaults>
</compile_context>

<pallas_src>
import jax
import jax.numpy as jnp
from jax import lax
from jax.experimental import pallas as pl
from jax.experimental.pallas import tpu as pltpu


_NEG = -1e30                   # logit filler for padded vocab columns
_LANE = 128                    # TPU lane width
_SUB = 8                       # f32 sublane count
WEIGHT_DTYPE = jnp.bfloat16    # MXU-native dtype for weights / dot operands


def _round_up(n, m):
    return ((n + m - 1) // m) * m


def _pad_gate_packed(w, H, Hp):
    """(K, 4H) packed [i|f|o|z] -> (K, 4Hp) with each gate block widened to Hp."""
    blocks = [jnp.pad(w[:, g * H:(g + 1) * H], ((0, 0), (0, Hp - H)))
              for g in range(4)]
    return jnp.concatenate(blocks, axis=1)


def _decoder_lstm_kernel(x0_ref, h0_ref, c0_ref, whx_ref, b_ref,
                         lw_ref, lb_ref, emb_ref, logit_ref, cst_ref, hx_ref):
    S = logit_ref.shape[0]
    Hp = h0_ref.shape[-1]
    Vp = logit_ref.shape[-1]

    # Persistent [h | x] operand slab for the fused gate matmul (f32 carry
    # precision; cast to bf16 only at the dot).
    hx_ref[:, :Hp] = h0_ref[...]
    hx_ref[:, Hp:] = x0_ref[...]

    def step(t, c):
        # Weights are re-read from VMEM inside the loop body (not hoisted),
        # so they never sit live in vregs across unrolled iterations.
        gates = jnp.dot(hx_ref[...].astype(WEIGHT_DTYPE), whx_ref[...],
                        preferred_element_type=jnp.float32) + b_ref[...]
        i = jax.nn.sigmoid(gates[:, 0 * Hp:1 * Hp])       # lane-aligned slices
        f = jax.nn.sigmoid(gates[:, 1 * Hp:2 * Hp])
        o = jax.nn.sigmoid(gates[:, 2 * Hp:3 * Hp])
        z = jnp.tanh(gates[:, 3 * Hp:4 * Hp])
        c_new = i * z + f * c
        h_new = o * jnp.tanh(c_new)
        hx_ref[:, :Hp] = h_new                            # gate operand for t+1

        # linear_list index quirk of the reference loop: output steps 0 and 1
        # both use linear_list[0], then t-1 afterwards.
        lin_idx = jnp.maximum(t - 1, 0)
        logits = jnp.dot(h_new.astype(WEIGHT_DTYPE), lw_ref[lin_idx],
                         preferred_element_type=jnp.float32) + lb_ref[lin_idx]

        # Argmax feedback straight from the logits (softmax-invariant,
        # first-index tie-break like torch/jnp argmax).
        iota = lax.broadcasted_iota(jnp.int32, logits.shape, 1)
        lmax = jnp.max(logits, axis=-1, keepdims=True)
        idx = jnp.min(jnp.where(logits == lmax, iota, Vp), axis=-1,
                      keepdims=True)
        onehot = (iota == idx).astype(WEIGHT_DTYPE)
        # TODO(synk): at realistic vocab sizes replace this one-hot matmul
        #             with a scalar-index row gather / small DMA gather;
        #             vector->scalar extraction for dynamic VMEM indexing is
        #             not a lowering path exercised here, so the (proven)
        #             matmul form is kept for the feedback.
        x_next = jnp.dot(onehot, emb_ref[...], preferred_element_type=jnp.float32)
        hx_ref[:, Hp:] = x_next

        # Only raw logits are emitted; softmax is a parallel post-pass.
        logit_ref[t] = logits
        cst_ref[t] = c_new
        return c_new

    lax.fori_loop(0, S, step, c0_ref[...], unroll=min(S, 8))


@jax.jit
def decoder_lstm_forward(x, h0, c0, Wx, Wh, b, lin_w, lin_b, emb):
    """Pallas implementation of DecoderLSTM.forward.

    Args:
      x:     (B, S, X) float32  (only x[:, 0, :] is consumed, like the module)
      h0,c0: (B, H)    float32
      Wx:    (X, 4H)   packed [W_xi|W_xf|W_xo|W_xz]
      Wh:    (H, 4H)   packed [W_hi|W_hf|W_ho|W_hz]
      b:     (1, 4H)   packed [b_i|b_f|b_o|b_z]
      lin_w: (S, H, V) per-step linear weights (already transposed for h @ W)
      lin_b: (S, V)    per-step linear biases
      emb:   (V, X)    embedding table for the autoregressive feedback
    Returns:
      outputs:     (B, S, V)
      cell_states: (B, S, H)
    """
    B, S, X = x.shape
    H = h0.shape[-1]
    V = lin_w.shape[-1]
    Hp = _round_up(H, _LANE)
    Xp = _round_up(X, _LANE)
    Vp = _round_up(V, _LANE)
    Bp = _round_up(B, _SUB)
    # Megacore batch split: 2 grid blocks when each block keeps full 8-row
    # sublane groups; grid=(1,) otherwise (single TC on v5e/v6e either way).
    n_bblk = 2 if (Bp % (2 * _SUB) == 0) else 1
    BB = Bp // n_bblk

    # ---- lane/sublane-pad parameters & state (padding is mathematically inert:
    # padded gate columns/bias are 0 so padded h/c stay exactly 0; padded vocab
    # bias is -1e30 so argmax/softmax ignore those columns) ----
    whp = jnp.pad(_pad_gate_packed(Wh, H, Hp), ((0, Hp - H), (0, 0)))
    wxp = jnp.pad(_pad_gate_packed(Wx, H, Hp), ((0, Xp - X), (0, 0)))
    whx = jnp.concatenate([whp, wxp], axis=0).astype(WEIGHT_DTYPE)  # (Hp+Xp, 4Hp)
    bp = _pad_gate_packed(b, H, Hp)                                  # (1, 4Hp) f32
    lwp = jnp.pad(lin_w, ((0, 0), (0, Hp - H), (0, Vp - V))).astype(WEIGHT_DTYPE)
    lbp = jnp.pad(lin_b, ((0, 0), (0, Vp - V)),
                  constant_values=_NEG)[:, None, :]                  # (S, 1, Vp)
    embp = jnp.pad(emb, ((0, Vp - V), (0, Xp - X))).astype(WEIGHT_DTYPE)
    h0p = jnp.pad(h0, ((0, Bp - B), (0, Hp - H)))
    c0p = jnp.pad(c0, ((0, Bp - B), (0, Hp - H)))
    x0p = jnp.pad(x[:, 0, :], ((0, Bp - B), (0, Xp - X)))

    # Explicit scoped-VMEM limit sized from the resident footprint + headroom.
    def _nbytes(a):
        return a.size * a.dtype.itemsize
    in_bytes = (sum(_nbytes(a) for a in (whx, bp, lwp, lbp, embp))
                + (_nbytes(x0p) + _nbytes(h0p) + _nbytes(c0p)) // n_bblk)
    out_bytes = S * BB * (Vp + Hp) * 4
    scratch_bytes = BB * (Hp + Xp) * 4
    vmem_limit = int(min(max(32 * 2**20, 2 * (in_bytes + out_bytes) + scratch_bytes),
                         100 * 2**20))

    logit_seq, c_seq = pl.pallas_call(
        _decoder_lstm_kernel,
        out_shape=(jax.ShapeDtypeStruct((S, Bp, Vp), jnp.float32),
                   jax.ShapeDtypeStruct((S, Bp, Hp), jnp.float32)),
        grid=(n_bblk,),
        in_specs=[
            pl.BlockSpec((BB, Xp), lambda bb: (bb, 0)),          # x0
            pl.BlockSpec((BB, Hp), lambda bb: (bb, 0)),          # h0
            pl.BlockSpec((BB, Hp), lambda bb: (bb, 0)),          # c0
            pl.BlockSpec((Hp + Xp, 4 * Hp), lambda bb: (0, 0)),  # whx
            pl.BlockSpec((1, 4 * Hp), lambda bb: (0, 0)),        # bias
            pl.BlockSpec((S, Hp, Vp), lambda bb: (0, 0, 0)),     # lin_w stack
            pl.BlockSpec((S, 1, Vp), lambda bb: (0, 0, 0)),      # lin_b stack
            pl.BlockSpec((Vp, Xp), lambda bb: (0, 0)),           # embedding
        ],
        out_specs=(pl.BlockSpec((S, BB, Vp), lambda bb: (0, bb, 0)),
                   pl.BlockSpec((S, BB, Hp), lambda bb: (0, bb, 0))),
        scratch_shapes=[pltpu.VMEM((BB, Hp + Xp), jnp.float32)],
        compiler_params=pltpu.CompilerParams(
            dimension_semantics=("parallel",),
            vmem_limit_bytes=vmem_limit),
    )(x0p, h0p, c0p, whx, bp, lwp, lbp, embp)

    # Softmax + batch-major transpose + pad-slice as one fused, fully parallel
    # XLA post-pass (the serial kernel only ever stored raw logits).
    y = jax.nn.softmax(logit_seq, axis=-1)
    return (y.transpose(1, 0, 2)[:B, :, :V],
            c_seq.transpose(1, 0, 2)[:B, :, :H])


def decoder_lstm_reference(x, h0, c0, Wx, Wh, b, lin_w, lin_b, emb):
    """Pure-JAX reference mirroring the PyTorch forward semantics, with the
    same bf16 weight / dot-operand quantization the kernel uses."""
    B, S, X = x.shape
    H = h0.shape[-1]
    whx = jnp.concatenate([Wh, Wx], axis=0).astype(WEIGHT_DTYPE)   # (H+X, 4H)
    lwq = lin_w.astype(WEIGHT_DTYPE)
    embq = emb.astype(WEIGHT_DTYPE).astype(jnp.float32)
    h, c = h0, c0
    xt = x[:, 0, :]
    ys, cs = [], []
    for s in range(S):
        lin_idx = max(s - 1, 0)  # same index quirk as the PyTorch loop
        hx = jnp.concatenate([h, xt], axis=-1).astype(WEIGHT_DTYPE)
        gates = jnp.dot(hx, whx, preferred_element_type=jnp.float32) + b
        i = jax.nn.sigmoid(gates[:, :H])
        f = jax.nn.sigmoid(gates[:, H:2 * H])
        o = jax.nn.sigmoid(gates[:, 2 * H:3 * H])
        z = jnp.tanh(gates[:, 3 * H:])
        c = i * z + f * c
        h = o * jnp.tanh(c)
        logits = jnp.dot(h.astype(WEIGHT_DTYPE), lwq[lin_idx],
                         preferred_element_type=jnp.float32) + lin_b[lin_idx]
        y = jax.nn.softmax(logits, axis=-1)
        tok = jnp.argmax(logits, axis=-1)
        xt = embq[tok]
        ys.append(y)
        cs.append(c)
    return jnp.stack(ys, axis=1), jnp.stack(cs, axis=1)


if __name__ == "__main__":
    B, S, X, H, V = 8, 8, 16, 32, 64

    key = jax.random.PRNGKey(0)
    keys = jax.random.split(key, 12)

    # LSTM parameters (randn * 0.1, biases zero -- as in __init__).
    W_xi = jax.random.normal(keys[0], (X, H), jnp.float32) * 0.1
    W_xf = jax.random.normal(keys[1], (X, H), jnp.float32) * 0.1
    W_xo = jax.random.normal(keys[2], (X, H), jnp.float32) * 0.1
    W_xz = jax.random.normal(keys[3], (X, H), jnp.float32) * 0.1
    W_hi = jax.random.normal(keys[4], (H, H), jnp.float32) * 0.1
    W_hf = jax.random.normal(keys[5], (H, H), jnp.float32) * 0.1
    W_ho = jax.random.normal(keys[6], (H, H), jnp.float32) * 0.1
    W_hz = jax.random.normal(keys[7], (H, H), jnp.float32) * 0.1
    Wx = jnp.concatenate([W_xi, W_xf, W_xo, W_xz], axis=1)   # (X, 4H)
    Wh = jnp.concatenate([W_hi, W_hf, W_ho, W_hz], axis=1)   # (H, 4H)
    b = jnp.zeros((1, 4 * H), jnp.float32)

    # clones() makes S identical linears -> tile one deterministic init.
    lin_w_single = jax.random.normal(keys[8], (H, V), jnp.float32) * 0.1
    lin_w = jnp.tile(lin_w_single[None], (S, 1, 1))          # (S, H, V)
    lin_b = jnp.zeros((S, V), jnp.float32)

    # External embedding_layer -> fixed deterministic table.
    emb = jax.random.normal(keys[9], (V, X), jnp.float32) * 0.1

    # Inputs.
    x = jax.random.normal(keys[10], (B, S, X), jnp.float32)
    h0 = jax.random.normal(keys[11], (B, H), jnp.float32) * 0.1
    c0 = jnp.zeros((B, H), jnp.float32)

    y_out, c_out = decoder_lstm_forward(x, h0, c0, Wx, Wh, b, lin_w, lin_b, emb)
    y_out, c_out = jax.block_until_ready((y_out, c_out))

    y_ref, c_ref = decoder_lstm_reference(x, h0, c0, Wx, Wh, b, lin_w, lin_b, emb)

    assert y_out.shape == (B, S, V) and c_out.shape == (B, S, H)
    assert jnp.allclose(y_out, y_ref, atol=1e-3, rtol=1e-3)
    assert jnp.allclose(c_out, c_ref, atol=1e-3, rtol=1e-3)

    print("KERNEL_OK")
</pallas_src>

<mosaic_0001>
module attributes {stable_mosaic.version = 11 : i64} {
  func.func @_decoder_lstm_kernel(%arg0: i32, %arg1: memref<8x128xf32, #tpu.memory_space<vmem>>, %arg2: memref<8x128xf32, #tpu.memory_space<vmem>>, %arg3: memref<8x128xf32, #tpu.memory_space<vmem>>, %arg4: memref<256x512xbf16, #tpu.memory_space<vmem>>, %arg5: memref<1x512xf32, #tpu.memory_space<vmem>>, %arg6: memref<8x128x128xbf16, #tpu.memory_space<vmem>>, %arg7: memref<8x1x128xf32, #tpu.memory_space<vmem>>, %arg8: memref<128x128xbf16, #tpu.memory_space<vmem>>, %arg9: memref<8x8x128xf32, #tpu.memory_space<vmem>>, %arg10: memref<8x8x128xf32, #tpu.memory_space<vmem>>, %arg11: memref<8x256xf32, #tpu.memory_space<vmem>>) attributes {dimension_semantics = [#tpu.dimension_semantics<parallel>], iteration_bounds = array<i64: 1>, scalar_prefetch = 0 : i64, scratch_operands = 1 : i64, tpu.core_type = #tpu.core_type<tc>, window_params = [{transform_indices = @transform_0, window_bounds = array<i64: 8, 128>}, {transform_indices = @transform_1, window_bounds = array<i64: 8, 128>}, {transform_indices = @transform_2, window_bounds = array<i64: 8, 128>}, {pipeline_mode = #tpu.pipeline_mode<synchronous>, transform_indices = @transform_3, window_bounds = array<i64: 256, 512>}, {pipeline_mode = #tpu.pipeline_mode<synchronous>, transform_indices = @transform_4, window_bounds = array<i64: 1, 512>}, {pipeline_mode = #tpu.pipeline_mode<synchronous>, transform_indices = @transform_5, window_bounds = array<i64: 8, 128, 128>}, {pipeline_mode = #tpu.pipeline_mode<synchronous>, transform_indices = @transform_6, window_bounds = array<i64: 8, 1, 128>}, {pipeline_mode = #tpu.pipeline_mode<synchronous>, transform_indices = @transform_7, window_bounds = array<i64: 128, 128>}, {transform_indices = @transform_8, window_bounds = array<i64: 8, 8, 128>}, {transform_indices = @transform_9, window_bounds = array<i64: 8, 8, 128>}]} {
    %c0 = arith.constant 0 : index
    %c0_0 = arith.constant 0 : index
    %0 = vector.load %arg2[%c0, %c0_0] : memref<8x128xf32, #tpu.memory_space<vmem>>, vector<8x128xf32>
    %c0_1 = arith.constant 0 : index
    %c0_2 = arith.constant 0 : index
    %1 = vector.load %arg11[%c0_1, %c0_2] : memref<8x256xf32, #tpu.memory_space<vmem>>, vector<8x128xf32>
    tpu.vector_store %arg11[%c0_1, %c0_2], %0 {strides = array<i32>} : memref<8x256xf32, #tpu.memory_space<vmem>>, vector<8x128xf32>,
    %c0_3 = arith.constant 0 : index
    %c0_4 = arith.constant 0 : index
    %2 = vector.load %arg1[%c0_3, %c0_4] : memref<8x128xf32, #tpu.memory_space<vmem>>, vector<8x128xf32>
    %c0_5 = arith.constant 0 : index
    %c128 = arith.constant 128 : index
    %3 = vector.load %arg11[%c0_5, %c128] : memref<8x256xf32, #tpu.memory_space<vmem>>, vector<8x128xf32>
    tpu.vector_store %arg11[%c0_5, %c128], %2 {strides = array<i32>} : memref<8x256xf32, #tpu.memory_space<vmem>>, vector<8x128xf32>,
    %c0_6 = arith.constant 0 : index
    %c0_7 = arith.constant 0 : index
    %4 = vector.load %arg3[%c0_6, %c0_7] : memref<8x128xf32, #tpu.memory_space<vmem>>, vector<8x128xf32>
    %c0_i32 = arith.constant 0 : i32
    %c0_8 = arith.constant 0 : index
    %c0_9 = arith.constant 0 : index
    %5 = vector.load %arg11[%c0_8, %c0_9] : memref<8x256xf32, #tpu.memory_space<vmem>>, vector<8x256xf32>
    %6 = arith.truncf %5 : vector<8x256xf32> to vector<8x256xbf16>
    %c0_10 = arith.constant 0 : index
    %c0_11 = arith.constant 0 : index
    %7 = vector.load %arg4[%c0_10, %c0_11] : memref<256x512xbf16, #tpu.memory_space<vmem>>, vector<256x512xbf16>
    %cst = arith.constant dense<0.000000e+00> : vector<8x512xf32>
    %8 = tpu.matmul %6, %7, %cst {dimension_numbers = #tpu.dot_dimension_numbers<[1], [0], [0], [1], [0, 0, 1, 1], [], []>} : vector<8x256xbf16>, vector<256x512xbf16>, vector<8x512xf32> -> vector<8x512xf32>
    %c0_12 = arith.constant 0 : index
    %c0_13 = arith.constant 0 : index
    %9 = vector.load %arg5[%c0_12, %c0_13] : memref<1x512xf32, #tpu.memory_space<vmem>>, vector<1x512xf32>
    %10 = vector.broadcast %9 : vector<1x512xf32> to vector<8x512xf32>
    %11 = arith.addf %8, %10 : vector<8x512xf32>
    %12 = vector.extract_strided_slice %11 {offsets = [0, 0], sizes = [8, 128], strides = [1, 1]} : vector<8x512xf32> to vector<8x128xf32>
    %13 = arith.negf %12 : vector<8x128xf32>
    %14 = math.exp %13 : vector<8x128xf32>
    %cst_14 = arith.constant 1.000000e+00 : f32
    %15 = vector.broadcast %cst_14 : f32 to vector<8x128xf32>
    %16 = arith.addf %15, %14 : vector<8x128xf32>
    %17 = arith.divf %15, %16 : vector<8x128xf32>
    %18 = vector.extract_strided_slice %11 {offsets = [0, 128], sizes = [8, 128], strides = [1, 1]} : vector<8x512xf32> to vector<8x128xf32>
    %19 = arith.negf %18 : vector<8x128xf32>
    %20 = math.exp %19 : vector<8x128xf32>
    %cst_15 = arith.constant 1.000000e+00 : f32
    %21 = vector.broadcast %cst_15 : f32 to vector<8x128xf32>
    %22 = arith.addf %21, %20 : vector<8x128xf32>
    %23 = arith.divf %21, %22 : vector<8x128xf32>
    %24 = vector.extract_strided_slice %11 {offsets = [0, 256], sizes = [8, 128], strides = [1, 1]} : vector<8x512xf32> to vector<8x128xf32>
    %25 = arith.negf %24 : vector<8x128xf32>
    %26 = math.exp %25 : vector<8x128xf32>
    %cst_16 = arith.constant 1.000000e+00 : f32
    %27 = vector.broadcast %cst_16 : f32 to vector<8x128xf32>
    %28 = arith.addf %27, %26 : vector<8x128xf32>
    %29 = arith.divf %27, %28 : vector<8x128xf32>
    %30 = vector.extract_strided_slice %11 {offsets = [0, 384], sizes = [8, 128], strides = [1, 1]} : vector<8x512xf32> to vector<8x128xf32>
    %31 = math.tanh %30 : vector<8x128xf32>
    %32 = arith.mulf %17, %31 : vector<8x128xf32>
    %33 = arith.mulf %23, %4 : vector<8x128xf32>
    %34 = arith.addf %32, %33 : vector<8x128xf32>
    %35 = math.tanh %34 : vector<8x128xf32>
    %36 = arith.mulf %29, %35 : vector<8x128xf32>
    %c0_17 = arith.constant 0 : index
    %c0_18 = arith.constant 0 : index
    %37 = vector.load %arg11[%c0_17, %c0_18] : memref<8x256xf32, #tpu.memory_space<vmem>>, vector<8x128xf32>
    tpu.vector_store %arg11[%c0_17, %c0_18], %36 {strides = array<i32>} : memref<8x256xf32, #tpu.memory_space<vmem>>, vector<8x128xf32>,
    %c1_i32 = arith.constant 1 : i32
    %38 = arith.subi %c0_i32, %c1_i32 : i32
    %c0_i32_19 = arith.constant 0 : i32
    %39 = arith.maxsi %38, %c0_i32_19 : i32
    %40 = arith.truncf %36 : vector<8x128xf32> to vector<8x128xbf16>
    %41 = arith.index_cast %39 : i32 to index
    %c0_20 = arith.constant 0 : index
    %c0_21 = arith.constant 0 : index
    %42 = vector.load %arg6[%41, %c0_20, %c0_21] : memref<8x128x128xbf16, #tpu.memory_space<vmem>>, vector<1x128x128xbf16>
    %43 = vector.shape_cast %42 : vector<1x128x128xbf16> to vector<128x128xbf16>
    %cst_22 = arith.constant dense<0.000000e+00> : vector<8x128xf32>
    %44 = tpu.matmul %40, %43, %cst_22 {dimension_numbers = #tpu.dot_dimension_numbers<[1], [0], [0], [1], [0, 0, 1, 1], [], []>} : vector<8x128xbf16>, vector<128x128xbf16>, vector<8x128xf32> -> vector<8x128xf32>
    %45 = arith.index_cast %39 : i32 to index
    %c0_23 = arith.constant 0 : index
    %c0_24 = arith.constant 0 : index
    %46 = vector.load %arg7[%45, %c0_23, %c0_24] : memref<8x1x128xf32, #tpu.memory_space<vmem>>, vector<1x1x128xf32>
    %47 = vector.shape_cast %46 : vector<1x1x128xf32> to vector<1x128xf32>
    %48 = vector.broadcast %47 : vector<1x128xf32> to vector<8x128xf32>
    %49 = arith.addf %44, %48 : vector<8x128xf32>
    %50 = tpu.iota {dimensions = array<i32: 1>} : vector<8x128xi32>
    %cst_25 = arith.constant dense<0xFF800000> : vector<8xf32>
    %51 = vector.multi_reduction <maximumf>, %49, %cst_25 [1] : vector<8x128xf32> to vector<8xf32>
    %52 = vector.shape_cast %51 : vector<8xf32> to vector<8x1xf32>
    %53 = vector.broadcast %52 : vector<8x1xf32> to vector<8x128xf32>
    %54 = arith.cmpf oeq, %49, %53 : vector<8x128xf32>
    %c128_i32 = arith.constant 128 : i32
    %55 = vector.broadcast %c128_i32 : i32 to vector<8x128xi32>
    %56 = arith.select %54, %50, %55 : vector<8x128xi1>, vector<8x128xi32>
    %cst_26 = arith.constant dense<2147483647> : vector<8xi32>
    %57 = vector.multi_reduction <minsi>, %56, %cst_26 [1] : vector<8x128xi32> to vector<8xi32>
    %58 = vector.shape_cast %57 : vector<8xi32> to vector<8x1xi32>
    %59 = vector.broadcast %58 : vector<8x1xi32> to vector<8x128xi32>
    %60 = arith.cmpi eq, %50, %59 : vector<8x128xi32>
    %61 = arith.extui %60 : vector<8x128xi1> to vector<8x128xi32>
    %62 = arith.sitofp %61 : vector<8x128xi32> to vector<8x128xf32>
    %63 = arith.truncf %62 : vector<8x128xf32> to vector<8x128xbf16>
    %c0_27 = arith.constant 0 : index
    %c0_28 = arith.constant 0 : index
    %64 = vector.load %arg8[%c0_27, %c0_28] : memref<128x128xbf16, #tpu.memory_space<vmem>>, vector<128x128xbf16>
    %cst_29 = arith.constant dense<0.000000e+00> : vector<8x128xf32>
    %65 = tpu.matmul %63, %64, %cst_29 {dimension_numbers = #tpu.dot_dimension_numbers<[1], [0], [0], [1], [0, 0, 1, 1], [], []>} : vector<8x128xbf16>, vector<128x128xbf16>, vector<8x128xf32> -> vector<8x128xf32>
    %c0_30 = arith.constant 0 : index
    %c128_31 = arith.constant 128 : index
    %66 = vector.load %arg11[%c0_30, %c128_31] : memref<8x256xf32, #tpu.memory_space<vmem>>, vector<8x128xf32>
    tpu.vector_store %arg11[%c0_30, %c128_31], %65 {strides = array<i32>} : memref<8x256xf32, #tpu.memory_space<vmem>>, vector<8x128xf32>,
    %67 = arith.index_cast %c0_i32 : i32 to index
    %c0_32 = arith.constant 0 : index
    %c0_33 = arith.constant 0 : index
    %68 = vector.load %arg9[%67, %c0_32, %c0_33] : memref<8x8x128xf32, #tpu.memory_space<vmem>>, vector<1x8x128xf32>
    %69 = vector.shape_cast %68 : vector<1x8x128xf32> to vector<8x128xf32>
    %70 = vector.shape_cast %49 : vector<8x128xf32> to vector<1x8x128xf32>
    tpu.vector_store %arg9[%67, %c0_32, %c0_33], %70 {strides = array<i32>} : memref<8x8x128xf32, #tpu.memory_space<vmem>>, vector<1x8x128xf32>,
    %71 = arith.index_cast %c0_i32 : i32 to index
    %c0_34 = arith.constant 0 : index
    %c0_35 = arith.constant 0 : index
    %72 = vector.load %arg10[%71, %c0_34, %c0_35] : memref<8x8x128xf32, #tpu.memory_space<vmem>>, vector<1x8x128xf32>
    %73 = vector.shape_cast %72 : vector<1x8x128xf32> to vector<8x128xf32>
    %74 = vector.shape_cast %34 : vector<8x128xf32> to vector<1x8x128xf32>
    tpu.vector_store %arg10[%71, %c0_34, %c0_35], %74 {strides = array<i32>} : memref<8x8x128xf32, #tpu.memory_space<vmem>>, vector<1x8x128xf32>,
    %c1_i32_36 = arith.constant 1 : i32
    %c0_37 = arith.constant 0 : index
    %c0_38 = arith.constant 0 : index
    %75 = vector.load %arg11[%c0_37, %c0_38] : memref<8x256xf32, #tpu.memory_space<vmem>>, vector<8x256xf32>
    %76 = arith.truncf %75 : vector<8x256xf32> to vector<8x256xbf16>
    %c0_39 = arith.constant 0 : index
    %c0_40 = arith.constant 0 : index
    %77 = vector.load %arg4[%c0_39, %c0_40] : memref<256x512xbf16, #tpu.memory_space<vmem>>, vector<256x512xbf16>
    %cst_41 = arith.constant dense<0.000000e+00> : vector<8x512xf32>
    %78 = tpu.matmul %76, %77, %cst_41 {dimension_numbers = #tpu.dot_dimension_numbers<[1], [0], [0], [1], [0, 0, 1, 1], [], []>} : vector<8x256xbf16>, vector<256x512xbf16>, vector<8x512xf32> -> vector<8x512xf32>
    %c0_42 = arith.constant 0 : index
    %c0_43 = arith.constant 0 : index
    %79 = vector.load %arg5[%c0_42, %c0_43] : memref<1x512xf32, #tpu.memory_space<vmem>>, vector<1x512xf32>
    %80 = vector.broadcast %79 : vector<1x512xf32> to vector<8x512xf32>
    %81 = arith.addf %78, %80 : vector<8x512xf32>
    %82 = vector.extract_strided_slice %81 {offsets = [0, 0], sizes = [8, 128], strides = [1, 1]} : vector<8x512xf32> to vector<8x128xf32>
    %83 = arith.negf %82 : vector<8x128xf32>
    %84 = math.exp %83 : vector<8x128xf32>
    %cst_44 = arith.constant 1.000000e+00 : f32
    %85 = vector.broadcast %cst_44 : f32 to vector<8x128xf32>
    %86 = arith.addf %85, %84 : vector<8x128xf32>
    %87 = arith.divf %85, %86 : vector<8x128xf32>
    %88 = vector.extract_strided_slice %81 {offsets = [0, 128], sizes = [8, 128], strides = [1, 1]} : vector<8x512xf32> to vector<8x128xf32>
    %89 = arith.negf %88 : vector<8x128xf32>
    %90 = math.exp %89 : vector<8x128xf32>
    %cst_45 = arith.constant 1.000000e+00 : f32
    %91 = vector.broadcast %cst_45 : f32 to vector<8x128xf32>
    %92 = arith.addf %91, %90 : vector<8x128xf32>
    %93 = arith.divf %91, %92 : vector<8x128xf32>
    %94 = vector.extract_strided_slice %81 {offsets = [0, 256], sizes = [8, 128], strides = [1, 1]} : vector<8x512xf32> to vector<8x128xf32>
    %95 = arith.negf %94 : vector<8x128xf32>
    %96 = math.exp %95 : vector<8x128xf32>
    %cst_46 = arith.constant 1.000000e+00 : f32
    %97 = vector.broadcast %cst_46 : f32 to vector<8x128xf32>
    %98 = arith.addf %97, %96 : vector<8x128xf32>
    %99 = arith.divf %97, %98 : vector<8x128xf32>
    %100 = vector.extract_strided_slice %81 {offsets = [0, 384], sizes = [8, 128], strides = [1, 1]} : vector<8x512xf32> to vector<8x128xf32>
    %101 = math.tanh %100 : vector<8x128xf32>
    %102 = arith.mulf %87, %101 : vector<8x128xf32>
    %103 = arith.mulf %93, %34 : vector<8x128xf32>
    %104 = arith.addf %102, %103 : vector<8x128xf32>
    %105 = math.tanh %104 : vector<8x128xf32>
    %106 = arith.mulf %99, %105 : vector<8x128xf32>
    %c0_47 = arith.constant 0 : index
    %c0_48 = arith.constant 0 : index
    %107 = vector.load %arg11[%c0_47, %c0_48] : memref<8x256xf32, #tpu.memory_space<vmem>>, vector<8x128xf32>
    tpu.vector_store %arg11[%c0_47, %c0_48], %106 {strides = array<i32>} : memref<8x256xf32, #tpu.memory_space<vmem>>, vector<8x128xf32>,
    %c1_i32_49 = arith.constant 1 : i32
    %108 = arith.subi %c1_i32_36, %c1_i32_49 : i32
    %c0_i32_50 = arith.constant 0 : i32
    %109 = arith.maxsi %108, %c0_i32_50 : i32
    %110 = arith.truncf %106 : vector<8x128xf32> to vector<8x128xbf16>
    %111 = arith.index_cast %109 : i32 to index
    %c0_51 = arith.constant 0 : index
    %c0_52 = arith.constant 0 : index
    %112 = vector.load %arg6[%111, %c0_51, %c0_52] : memref<8x128x128xbf16, #tpu.memory_space<vmem>>, vector<1x128x128xbf16>
    %113 = vector.shape_cast %112 : vector<1x128x128xbf16> to vector<128x128xbf16>
    %cst_53 = arith.constant dense<0.000000e+00> : vector<8x128xf32>
    %114 = tpu.matmul %110, %113, %cst_53 {dimension_numbers = #tpu.dot_dimension_numbers<[1], [0], [0], [1], [0, 0, 1, 1], [], []>} : vector<8x128xbf16>, vector<128x128xbf16>, vector<8x128xf32> -> vector<8x128xf32>
    %115 = arith.index_cast %109 : i32 to index
    %c0_54 = arith.constant 0 : index
    %c0_55 = arith.constant 0 : index
    %116 = vector.load %arg7[%115, %c0_54, %c0_55] : memref<8x1x128xf32, #tpu.memory_space<vmem>>, vector<1x1x128xf32>
    %117 = vector.shape_cast %116 : vector<1x1x128xf32> to vector<1x128xf32>
    %118 = vector.broadcast %117 : vector<1x128xf32> to vector<8x128xf32>
    %119 = arith.addf %114, %118 : vector<8x128xf32>
    %120 = tpu.iota {dimensions = array<i32: 1>} : vector<8x128xi32>
    %cst_56 = arith.constant dense<0xFF800000> : vector<8xf32>
    %121 = vector.multi_reduction <maximumf>, %119, %cst_56 [1] : vector<8x128xf32> to vector<8xf32>
    %122 = vector.shape_cast %121 : vector<8xf32> to vector<8x1xf32>
    %123 = vector.broadcast %122 : vector<8x1xf32> to vector<8x128xf32>
    %124 = arith.cmpf oeq, %119, %123 : vector<8x128xf32>
    %c128_i32_57 = arith.constant 128 : i32
    %125 = vector.broadcast %c128_i32_57 : i32 to vector<8x128xi32>
    %126 = arith.select %124, %120, %125 : vector<8x128xi1>, vector<8x128xi32>
    %cst_58 = arith.constant dense<2147483647> : vector<8xi32>
    %127 = vector.multi_reduction <minsi>, %126, %cst_58 [1] : vector<8x128xi32> to vector<8xi32>
    %128 = vector.shape_cast %127 : vector<8xi32> to vector<8x1xi32>
    %129 = vector.broadcast %128 : vector<8x1xi32> to vector<8x128xi32>
    %130 = arith.cmpi eq, %120, %129 : vector<8x128xi32>
    %131 = arith.extui %130 : vector<8x128xi1> to vector<8x128xi32>
    %132 = arith.sitofp %131 : vector<8x128xi32> to vector<8x128xf32>
    %133 = arith.truncf %132 : vector<8x128xf32> to vector<8x128xbf16>
    %c0_59 = arith.constant 0 : index
    %c0_60 = arith.constant 0 : index
    %134 = vector.load %arg8[%c0_59, %c0_60] : memref<128x128xbf16, #tpu.memory_space<vmem>>, vector<128x128xbf16>
    %cst_61 = arith.constant dense<0.000000e+00> : vector<8x128xf32>
    %135 = tpu.matmul %133, %134, %cst_61 {dimension_numbers = #tpu.dot_dimension_numbers<[1], [0], [0], [1], [0, 0, 1, 1], [], []>} : vector<8x128xbf16>, vector<128x128xbf16>, vector<8x128xf32> -> vector<8x128xf32>
    %c0_62 = arith.constant 0 : index
    %c128_63 = arith.constant 128 : index
    %136 = vector.load %arg11[%c0_62, %c128_63] : memref<8x256xf32, #tpu.memory_space<vmem>>, vector<8x128xf32>
    tpu.vector_store %arg11[%c0_62, %c128_63], %135 {strides = array<i32>} : memref<8x256xf32, #tpu.memory_space<vmem>>, vector<8x128xf32>,
    %137 = arith.index_cast %c1_i32_36 : i32 to index
    %c0_64 = arith.constant 0 : index
    %c0_65 = arith.constant 0 : index
    %138 = vector.load %arg9[%137, %c0_64, %c0_65] : memref<8x8x128xf32, #tpu.memory_space<vmem>>, vector<1x8x128xf32>
    %139 = vector.shape_cast %138 : vector<1x8x128xf32> to vector<8x128xf32>
    %140 = vector.shape_cast %119 : vector<8x128xf32> to vector<1x8x128xf32>
    tpu.vector_store %arg9[%137, %c0_64, %c0_65], %140 {strides = array<i32>} : memref<8x8x128xf32, #tpu.memory_space<vmem>>, vector<1x8x128xf32>,
    %141 = arith.index_cast %c1_i32_36 : i32 to index
    %c0_66 = arith.constant 0 : index
    %c0_67 = arith.constant 0 : index
    %142 = vector.load %arg10[%141, %c0_66, %c0_67] : memref<8x8x128xf32, #tpu.memory_space<vmem>>, vector<1x8x128xf32>
    %143 = vector.shape_cast %142 : vector<1x8x128xf32> to vector<8x128xf32>
    %144 = vector.shape_cast %104 : vector<8x128xf32> to vector<1x8x128xf32>
    tpu.vector_store %arg10[%141, %c0_66, %c0_67], %144 {strides = array<i32>} : memref<8x8x128xf32, #tpu.memory_space<vmem>>, vector<1x8x128xf32>,
    %c2_i32 = arith.constant 2 : i32
    %c0_68 = arith.constant 0 : index
    %c0_69 = arith.constant 0 : index
    %145 = vector.load %arg11[%c0_68, %c0_69] : memref<8x256xf32, #tpu.memory_space<vmem>>, vector<8x256xf32>
    %146 = arith.truncf %145 : vector<8x256xf32> to vector<8x256xbf16>
    %c0_70 = arith.constant 0 : index
    %c0_71 = arith.constant 0 : index
    %147 = vector.load %arg4[%c0_70, %c0_71] : memref<256x512xbf16, #tpu.memory_space<vmem>>, vector<256x512xbf16>
    %cst_72 = arith.constant dense<0.000000e+00> : vector<8x512xf32>
    %148 = tpu.matmul %146, %147, %cst_72 {dimension_numbers = #tpu.dot_dimension_numbers<[1], [0], [0], [1], [0, 0, 1, 1], [], []>} : vector<8x256xbf16>, vector<256x512xbf16>, vector<8x512xf32> -> vector<8x512xf32>
    %c0_73 = arith.constant 0 : index
    %c0_74 = arith.constant 0 : index
    %149 = vector.load %arg5[%c0_73, %c0_74] : memref<1x512xf32, #tpu.memory_space<vmem>>, vector<1x512xf32>
    %150 = vector.broadcast %149 : vector<1x512xf32> to vector<8x512xf32>
    %151 = arith.addf %148, %150 : vector<8x512xf32>
    %152 = vector.extract_strided_slice %151 {offsets = [0, 0], sizes = [8, 128], strides = [1, 1]} : vector<8x512xf32> to vector<8x128xf32>
    %153 = arith.negf %152 : vector<8x128xf32>
    %154 = math.exp %153 : vector<8x128xf32>
    %cst_75 = arith.constant 1.000000e+00 : f32
    %155 = vector.broadcast %cst_75 : f32 to vector<8x128xf32>
    %156 = arith.addf %155, %154 : vector<8x128xf32>
    %157 = arith.divf %155, %156 : vector<8x128xf32>
    %158 = vector.extract_strided_slice %151 {offsets = [0, 128], sizes = [8, 128], strides = [1, 1]} : vector<8x512xf32> to vector<8x128xf32>
    %159 = arith.negf %158 : vector<8x128xf32>
    %160 = math.exp %159 : vector<8x128xf32>
    %cst_76 = arith.constant 1.000000e+00 : f32
    %161 = vector.broadcast %cst_76 : f32 to vector<8x128xf32>
    %162 = arith.addf %161, %160 : vector<8x128xf32>
    %163 = arith.divf %161, %162 : vector<8x128xf32>
    %164 = vector.extract_strided_slice %151 {offsets = [0, 256], sizes = [8, 128], strides = [1, 1]} : vector<8x512xf32> to vector<8x128xf32>
    %165 = arith.negf %164 : vector<8x128xf32>
    %166 = math.exp %165 : vector<8x128xf32>
    %cst_77 = arith.constant 1.000000e+00 : f32
    %167 = vector.broadcast %cst_77 : f32 to vector<8x128xf32>
    %168 = arith.addf %167, %166 : vector<8x128xf32>
    %169 = arith.divf %167, %168 : vector<8x128xf32>
    %170 = vector.extract_strided_slice %151 {offsets = [0, 384], sizes = [8, 128], strides = [1, 1]} : vector<8x512xf32> to vector<8x128xf32>
    %171 = math.tanh %170 : vector<8x128xf32>
    %172 = arith.mulf %157, %171 : vector<8x128xf32>
    %173 = arith.mulf %163, %104 : vector<8x128xf32>
    %174 = arith.addf %172, %173 : vector<8x128xf32>
    %175 = math.tanh %174 : vector<8x128xf32>
    %176 = arith.mulf %169, %175 : vector<8x128xf32>
    %c0_78 = arith.constant 0 : index
    %c0_79 = arith.constant 0 : index
    %177 = vector.load %arg11[%c0_78, %c0_79] : memref<8x256xf32, #tpu.memory_space<vmem>>, vector<8x128xf32>
    tpu.vector_store %arg11[%c0_78, %c0_79], %176 {strides = array<i32>} : memref<8x256xf32, #tpu.memory_space<vmem>>, vector<8x128xf32>,
    %c1_i32_80 = arith.constant 1 : i32
    %178 = arith.subi %c2_i32, %c1_i32_80 : i32
    %c0_i32_81 = arith.constant 0 : i32
    %179 = arith.maxsi %178, %c0_i32_81 : i32
    %180 = arith.truncf %176 : vector<8x128xf32> to vector<8x128xbf16>
    %181 = arith.index_cast %179 : i32 to index
    %c0_82 = arith.constant 0 : index
    %c0_83 = arith.constant 0 : index
    %182 = vector.load %arg6[%181, %c0_82, %c0_83] : memref<8x128x128xbf16, #tpu.memory_space<vmem>>, vector<1x128x128xbf16>
    %183 = vector.shape_cast %182 : vector<1x128x128xbf16> to vector<128x128xbf16>
    %cst_84 = arith.constant dense<0.000000e+00> : vector<8x128xf32>
    %184 = tpu.matmul %180, %183, %cst_84 {dimension_numbers = #tpu.dot_dimension_numbers<[1], [0], [0], [1], [0, 0, 1, 1], [], []>} : vector<8x128xbf16>, vector<128x128xbf16>, vector<8x128xf32> -> vector<8x128xf32>
    %185 = arith.index_cast %179 : i32 to index
    %c0_85 = arith.constant 0 : index
    %c0_86 = arith.constant 0 : index
    %186 = vector.load %arg7[%185, %c0_85, %c0_86] : memref<8x1x128xf32, #tpu.memory_space<vmem>>, vector<1x1x128xf32>
    %187 = vector.shape_cast %186 : vector<1x1x128xf32> to vector<1x128xf32>
    %188 = vector.broadcast %187 : vector<1x128xf32> to vector<8x128xf32>
    %189 = arith.addf %184, %188 : vector<8x128xf32>
    %190 = tpu.iota {dimensions = array<i32: 1>} : vector<8x128xi32>
    %cst_87 = arith.constant dense<0xFF800000> : vector<8xf32>
    %191 = vector.multi_reduction <maximumf>, %189, %cst_87 [1] : vector<8x128xf32> to vector<8xf32>
    %192 = vector.shape_cast %191 : vector<8xf32> to vector<8x1xf32>
    %193 = vector.broadcast %192 : vector<8x1xf32> to vector<8x128xf32>
    %194 = arith.cmpf oeq, %189, %193 : vector<8x128xf32>
    %c128_i32_88 = arith.constant 128 : i32
    %195 = vector.broadcast %c128_i32_88 : i32 to vector<8x128xi32>
    %196 = arith.select %194, %190, %195 : vector<8x128xi1>, vector<8x128xi32>
    %cst_89 = arith.constant dense<2147483647> : vector<8xi32>
    %197 = vector.multi_reduction <minsi>, %196, %cst_89 [1] : vector<8x128xi32> to vector<8xi32>
    %198 = vector.shape_cast %197 : vector<8xi32> to vector<8x1xi32>
    %199 = vector.broadcast %198 : vector<8x1xi32> to vector<8x128xi32>
    %200 = arith.cmpi eq, %190, %199 : vector<8x128xi32>
    %201 = arith.extui %200 : vector<8x128xi1> to vector<8x128xi32>
    %202 = arith.sitofp %201 : vector<8x128xi32> to vector<8x128xf32>
    %203 = arith.truncf %202 : vector<8x128xf32> to vector<8x128xbf16>
    %c0_90 = arith.constant 0 : index
    %c0_91 = arith.constant 0 : index
    %204 = vector.load %arg8[%c0_90, %c0_91] : memref<128x128xbf16, #tpu.memory_space<vmem>>, vector<128x128xbf16>
    %cst_92 = arith.constant dense<0.000000e+00> : vector<8x128xf32>
    %205 = tpu.matmul %203, %204, %cst_92 {dimension_numbers = #tpu.dot_dimension_numbers<[1], [0], [0], [1], [0, 0, 1, 1], [], []>} : vector<8x128xbf16>, vector<128x128xbf16>, vector<8x128xf32> -> vector<8x128xf32>
    %c0_93 = arith.constant 0 : index
    %c128_94 = arith.constant 128 : index
    %206 = vector.load %arg11[%c0_93, %c128_94] : memref<8x256xf32, #tpu.memory_space<vmem>>, vector<8x128xf32>
    tpu.vector_store %arg11[%c0_93, %c128_94], %205 {strides = array<i32>} : memref<8x256xf32, #tpu.memory_space<vmem>>, vector<8x128xf32>,
    %207 = arith.index_cast %c2_i32 : i32 to index
    %c0_95 = arith.constant 0 : index
    %c0_96 = arith.constant 0 : index
    %208 = vector.load %arg9[%207, %c0_95, %c0_96] : memref<8x8x128xf32, #tpu.memory_space<vmem>>, vector<1x8x128xf32>
    %209 = vector.shape_cast %208 : vector<1x8x128xf32> to vector<8x128xf32>
    %210 = vector.shape_cast %189 : vector<8x128xf32> to vector<1x8x128xf32>
    tpu.vector_store %arg9[%207, %c0_95, %c0_96], %210 {strides = array<i32>} : memref<8x8x128xf32, #tpu.memory_space<vmem>>, vector<1x8x128xf32>,
    %211 = arith.index_cast %c2_i32 : i32 to index
    %c0_97 = arith.constant 0 : index
    %c0_98 = arith.constant 0 : index
    %212 = vector.load %arg10[%211, %c0_97, %c0_98] : memref<8x8x128xf32, #tpu.memory_space<vmem>>, vector<1x8x128xf32>
    %213 = vector.shape_cast %212 : vector<1x8x128xf32> to vector<8x128xf32>
    %214 = vector.shape_cast %174 : vector<8x128xf32> to vector<1x8x128xf32>
    tpu.vector_store %arg10[%211, %c0_97, %c0_98], %214 {strides = array<i32>} : memref<8x8x128xf32, #tpu.memory_space<vmem>>, vector<1x8x128xf32>,
    %c3_i32 = arith.constant 3 : i32
    %c0_99 = arith.constant 0 : index
    %c0_100 = arith.constant 0 : index
    %215 = vector.load %arg11[%c0_99, %c0_100] : memref<8x256xf32, #tpu.memory_space<vmem>>, vector<8x256xf32>
    %216 = arith.truncf %215 : vector<8x256xf32> to vector<8x256xbf16>
    %c0_101 = arith.constant 0 : index
    %c0_102 = arith.constant 0 : index
    %217 = vector.load %arg4[%c0_101, %c0_102] : memref<256x512xbf16, #tpu.memory_space<vmem>>, vector<256x512xbf16>
    %cst_103 = arith.constant dense<0.000000e+00> : vector<8x512xf32>
    %218 = tpu.matmul %216, %217, %cst_103 {dimension_numbers = #tpu.dot_dimension_numbers<[1], [0], [0], [1], [0, 0, 1, 1], [], []>} : vector<8x256xbf16>, vector<256x512xbf16>, vector<8x512xf32> -> vector<8x512xf32>
    %c0_104 = arith.constant 0 : index
    %c0_105 = arith.constant 0 : index
    %219 = vector.load %arg5[%c0_104, %c0_105] : memref<1x512xf32, #tpu.memory_space<vmem>>, vector<1x512xf32>
    %220 = vector.broadcast %219 : vector<1x512xf32> to vector<8x512xf32>
    %221 = arith.addf %218, %220 : vector<8x512xf32>
    %222 = vector.extract_strided_slice %221 {offsets = [0, 0], sizes = [8, 128], strides = [1, 1]} : vector<8x512xf32> to vector<8x128xf32>
    %223 = arith.negf %222 : vector<8x128xf32>
    %224 = math.exp %223 : vector<8x128xf32>
    %cst_106 = arith.constant 1.000000e+00 : f32
    %225 = vector.broadcast %cst_106 : f32 to vector<8x128xf32>
    %226 = arith.addf %225, %224 : vector<8x128xf32>
    %227 = arith.divf %225, %226 : vector<8x128xf32>
    %228 = vector.extract_strided_slice %221 {offsets = [0, 128], sizes = [8, 128], strides = [1, 1]} : vector<8x512xf32> to vector<8x128xf32>
    %229 = arith.negf %228 : vector<8x128xf32>
    %230 = math.exp %229 : vector<8x128xf32>
    %cst_107 = arith.constant 1.000000e+00 : f32
    %231 = vector.broadcast %cst_107 : f32 to vector<8x128xf32>
    %232 = arith.addf %231, %230 : vector<8x128xf32>
    %233 = arith.divf %231, %232 : vector<8x128xf32>
    %234 = vector.extract_strided_slice %221 {offsets = [0, 256], sizes = [8, 128], strides = [1, 1]} : vector<8x512xf32> to vector<8x128xf32>
    %235 = arith.negf %234 : vector<8x128xf32>
    %236 = math.exp %235 : vector<8x128xf32>
    %cst_108 = arith.constant 1.000000e+00 : f32
    %237 = vector.broadcast %cst_108 : f32 to vector<8x128xf32>
    %238 = arith.addf %237, %236 : vector<8x128xf32>
    %239 = arith.divf %237, %238 : vector<8x128xf32>
    %240 = vector.extract_strided_slice %221 {offsets = [0, 384], sizes = [8, 128], strides = [1, 1]} : vector<8x512xf32> to vector<8x128xf32>
    %241 = math.tanh %240 : vector<8x128xf32>
    %242 = arith.mulf %227, %241 : vector<8x128xf32>
    %243 = arith.mulf %233, %174 : vector<8x128xf32>
    %244 = arith.addf %242, %243 : vector<8x128xf32>
    %245 = math.tanh %244 : vector<8x128xf32>
    %246 = arith.mulf %239, %245 : vector<8x128xf32>
    %c0_109 = arith.constant 0 : index
    %c0_110 = arith.constant 0 : index
    %247 = vector.load %arg11[%c0_109, %c0_110] : memref<8x256xf32, #tpu.memory_space<vmem>>, vector<8x128xf32>
    tpu.vector_store %arg11[%c0_109, %c0_110], %246 {strides = array<i32>} : memref<8x256xf32, #tpu.memory_space<vmem>>, vector<8x128xf32>,
    %c1_i32_111 = arith.constant 1 : i32
    %248 = arith.subi %c3_i32, %c1_i32_111 : i32
    %c0_i32_112 = arith.constant 0 : i32
    %249 = arith.maxsi %248, %c0_i32_112 : i32
    %250 = arith.truncf %246 : vector<8x128xf32> to vector<8x128xbf16>
    %251 = arith.index_cast %249 : i32 to index
    %c0_113 = arith.constant 0 : index
    %c0_114 = arith.constant 0 : index
    %252 = vector.load %arg6[%251, %c0_113, %c0_114] : memref<8x128x128xbf16, #tpu.memory_space<vmem>>, vector<1x128x128xbf16>
    %253 = vector.shape_cast %252 : vector<1x128x128xbf16> to vector<128x128xbf16>
    %cst_115 = arith.constant dense<0.000000e+00> : vector<8x128xf32>
    %254 = tpu.matmul %250, %253, %cst_115 {dimension_numbers = #tpu.dot_dimension_numbers<[1], [0], [0], [1], [0, 0, 1, 1], [], []>} : vector<8x128xbf16>, vector<128x128xbf16>, vector<8x128xf32> -> vector<8x128xf32>
    %255 = arith.index_cast %249 : i32 to index
    %c0_116 = arith.constant 0 : index
    %c0_117 = arith.constant 0 : index
    %256 = vector.load %arg7[%255, %c0_116, %c0_117] : memref<8x1x128xf32, #tpu.memory_space<vmem>>, vector<1x1x128xf32>
    %257 = vector.shape_cast %256 : vector<1x1x128xf32> to vector<1x128xf32>
    %258 = vector.broadcast %257 : vector<1x128xf32> to vector<8x128xf32>
    %259 = arith.addf %254, %258 : vector<8x128xf32>
    %260 = tpu.iota {dimensions = array<i32: 1>} : vector<8x128xi32>
    %cst_118 = arith.constant dense<0xFF800000> : vector<8xf32>
    %261 = vector.multi_reduction <maximumf>, %259, %cst_118 [1] : vector<8x128xf32> to vector<8xf32>
    %262 = vector.shape_cast %261 : vector<8xf32> to vector<8x1xf32>
    %263 = vector.broadcast %262 : vector<8x1xf32> to vector<8x128xf32>
    %264 = arith.cmpf oeq, %259, %263 : vector<8x128xf32>
    %c128_i32_119 = arith.constant 128 : i32
    %265 = vector.broadcast %c128_i32_119 : i32 to vector<8x128xi32>
    %266 = arith.select %264, %260, %265 : vector<8x128xi1>, vector<8x128xi32>
    %cst_120 = arith.constant dense<2147483647> : vector<8xi32>
    %267 = vector.multi_reduction <minsi>, %266, %cst_120 [1] : vector<8x128xi32> to vector<8xi32>
    %268 = vector.shape_cast %267 : vector<8xi32> to vector<8x1xi32>
    %269 = vector.broadcast %268 : vector<8x1xi32> to vector<8x128xi32>
    %270 = arith.cmpi eq, %260, %269 : vector<8x128xi32>
    %271 = arith.extui %270 : vector<8x128xi1> to vector<8x128xi32>
    %272 = arith.sitofp %271 : vector<8x128xi32> to vector<8x128xf32>
    %273 = arith.truncf %272 : vector<8x128xf32> to vector<8x128xbf16>
    %c0_121 = arith.constant 0 : index
    %c0_122 = arith.constant 0 : index
    %274 = vector.load %arg8[%c0_121, %c0_122] : memref<128x128xbf16, #tpu.memory_space<vmem>>, vector<128x128xbf16>
    %cst_123 = arith.constant dense<0.000000e+00> : vector<8x128xf32>
    %275 = tpu.matmul %273, %274, %cst_123 {dimension_numbers = #tpu.dot_dimension_numbers<[1], [0], [0], [1], [0, 0, 1, 1], [], []>} : vector<8x128xbf16>, vector<128x128xbf16>, vector<8x128xf32> -> vector<8x128xf32>
    %c0_124 = arith.constant 0 : index
    %c128_125 = arith.constant 128 : index
    %276 = vector.load %arg11[%c0_124, %c128_125] : memref<8x256xf32, #tpu.memory_space<vmem>>, vector<8x128xf32>
    tpu.vector_store %arg11[%c0_124, %c128_125], %275 {strides = array<i32>} : memref<8x256xf32, #tpu.memory_space<vmem>>, vector<8x128xf32>,
    %277 = arith.index_cast %c3_i32 : i32 to index
    %c0_126 = arith.constant 0 : index
    %c0_127 = arith.constant 0 : index
    %278 = vector.load %arg9[%277, %c0_126, %c0_127] : memref<8x8x128xf32, #tpu.memory_space<vmem>>, vector<1x8x128xf32>
    %279 = vector.shape_cast %278 : vector<1x8x128xf32> to vector<8x128xf32>
    %280 = vector.shape_cast %259 : vector<8x128xf32> to vector<1x8x128xf32>
    tpu.vector_store %arg9[%277, %c0_126, %c0_127], %280 {strides = array<i32>} : memref<8x8x128xf32, #tpu.memory_space<vmem>>, vector<1x8x128xf32>,
    %281 = arith.index_cast %c3_i32 : i32 to index
    %c0_128 = arith.constant 0 : index
    %c0_129 = arith.constant 0 : index
    %282 = vector.load %arg10[%281, %c0_128, %c0_129] : memref<8x8x128xf32, #tpu.memory_space<vmem>>, vector<1x8x128xf32>
    %283 = vector.shape_cast %282 : vector<1x8x128xf32> to vector<8x128xf32>
    %284 = vector.shape_cast %244 : vector<8x128xf32> to vector<1x8x128xf32>
    tpu.vector_store %arg10[%281, %c0_128, %c0_129], %284 {strides = array<i32>} : memref<8x8x128xf32, #tpu.memory_space<vmem>>, vector<1x8x128xf32>,
    %c4_i32 = arith.constant 4 : i32
    %c0_130 = arith.constant 0 : index
    %c0_131 = arith.constant 0 : index
    %285 = vector.load %arg11[%c0_130, %c0_131] : memref<8x256xf32, #tpu.memory_space<vmem>>, vector<8x256xf32>
    %286 = arith.truncf %285 : vector<8x256xf32> to vector<8x256xbf16>
    %c0_132 = arith.constant 0 : index
    %c0_133 = arith.constant 0 : index
    %287 = vector.load %arg4[%c0_132, %c0_133] : memref<256x512xbf16, #tpu.memory_space<vmem>>, vector<256x512xbf16>
    %cst_134 = arith.constant dense<0.000000e+00> : vector<8x512xf32>
    %288 = tpu.matmul %286, %287, %cst_134 {dimension_numbers = #tpu.dot_dimension_numbers<[1], [0], [0], [1], [0, 0, 1, 1], [], []>} : vector<8x256xbf16>, vector<256x512xbf16>, vector<8x512xf32> -> vector<8x512xf32>
    %c0_135 = arith.constant 0 : index
    %c0_136 = arith.constant 0 : index
    %289 = vector.load %arg5[%c0_135, %c0_136] : memref<1x512xf32, #tpu.memory_space<vmem>>, vector<1x512xf32>
    %290 = vector.broadcast %289 : vector<1x512xf32> to vector<8x512xf32>
    %291 = arith.addf %288, %290 : vector<8x512xf32>
    %292 = vector.extract_strided_slice %291 {offsets = [0, 0], sizes = [8, 128], strides = [1, 1]} : vector<8x512xf32> to vector<8x128xf32>
    %293 = arith.negf %292 : vector<8x128xf32>
    %294 = math.exp %293 : vector<8x128xf32>
    %cst_137 = arith.constant 1.000000e+00 : f32
    %295 = vector.broadcast %cst_137 : f32 to vector<8x128xf32>
    %296 = arith.addf %295, %294 : vector<8x128xf32>
    %297 = arith.divf %295, %296 : vector<8x128xf32>
    %298 = vector.extract_strided_slice %291 {offsets = [0, 128], sizes = [8, 128], strides = [1, 1]} : vector<8x512xf32> to vector<8x128xf32>
    %299 = arith.negf %298 : vector<8x128xf32>
    %300 = math.exp %299 : vector<8x128xf32>
    %cst_138 = arith.constant 1.000000e+00 : f32
    %301 = vector.broadcast %cst_138 : f32 to vector<8x128xf32>
    %302 = arith.addf %301, %300 : vector<8x128xf32>
    %303 = arith.divf %301, %302 : vector<8x128xf32>
    %304 = vector.extract_strided_slice %291 {offsets = [0, 256], sizes = [8, 128], strides = [1, 1]} : vector<8x512xf32> to vector<8x128xf32>
    %305 = arith.negf %304 : vector<8x128xf32>
    %306 = math.exp %305 : vector<8x128xf32>
    %cst_139 = arith.constant 1.000000e+00 : f32
    %307 = vector.broadcast %cst_139 : f32 to vector<8x128xf32>
    %308 = arith.addf %307, %306 : vector<8x128xf32>
    %309 = arith.divf %307, %308 : vector<8x128xf32>
    %310 = vector.extract_strided_slice %291 {offsets = [0, 384], sizes = [8, 128], strides = [1, 1]} : vector<8x512xf32> to vector<8x128xf32>
    %311 = math.tanh %310 : vector<8x128xf32>
    %312 = arith.mulf %297, %311 : vector<8x128xf32>
    %313 = arith.mulf %303, %244 : vector<8x128xf32>
    %314 = arith.addf %312, %313 : vector<8x128xf32>
    %315 = math.tanh %314 : vector<8x128xf32>
    %316 = arith.mulf %309, %315 : vector<8x128xf32>
    %c0_140 = arith.constant 0 : index
    %c0_141 = arith.constant 0 : index
    %317 = vector.load %arg11[%c0_140, %c0_141] : memref<8x256xf32, #tpu.memory_space<vmem>>, vector<8x128xf32>
    tpu.vector_store %arg11[%c0_140, %c0_141], %316 {strides = array<i32>} : memref<8x256xf32, #tpu.memory_space<vmem>>, vector<8x128xf32>,
    %c1_i32_142 = arith.constant 1 : i32
    %318 = arith.subi %c4_i32, %c1_i32_142 : i32
    %c0_i32_143 = arith.constant 0 : i32
    %319 = arith.maxsi %318, %c0_i32_143 : i32
    %320 = arith.truncf %316 : vector<8x128xf32> to vector<8x128xbf16>
    %321 = arith.index_cast %319 : i32 to index
    %c0_144 = arith.constant 0 : index
    %c0_145 = arith.constant 0 : index
    %322 = vector.load %arg6[%321, %c0_144, %c0_145] : memref<8x128x128xbf16, #tpu.memory_space<vmem>>, vector<1x128x128xbf16>
    %323 = vector.shape_cast %322 : vector<1x128x128xbf16> to vector<128x128xbf16>
    %cst_146 = arith.constant dense<0.000000e+00> : vector<8x128xf32>
    %324 = tpu.matmul %320, %323, %cst_146 {dimension_numbers = #tpu.dot_dimension_numbers<[1], [0], [0], [1], [0, 0, 1, 1], [], []>} : vector<8x128xbf16>, vector<128x128xbf16>, vector<8x128xf32> -> vector<8x128xf32>
    %325 = arith.index_cast %319 : i32 to index
    %c0_147 = arith.constant 0 : index
    %c0_148 = arith.constant 0 : index
    %326 = vector.load %arg7[%325, %c0_147, %c0_148] : memref<8x1x128xf32, #tpu.memory_space<vmem>>, vector<1x1x128xf32>
    %327 = vector.shape_cast %326 : vector<1x1x128xf32> to vector<1x128xf32>
    %328 = vector.broadcast %327 : vector<1x128xf32> to vector<8x128xf32>
    %329 = arith.addf %324, %328 : vector<8x128xf32>
    %330 = tpu.iota {dimensions = array<i32: 1>} : vector<8x128xi32>
    %cst_149 = arith.constant dense<0xFF800000> : vector<8xf32>
    %331 = vector.multi_reduction <maximumf>, %329, %cst_149 [1] : vector<8x128xf32> to vector<8xf32>
    %332 = vector.shape_cast %331 : vector<8xf32> to vector<8x1xf32>
    %333 = vector.broadcast %332 : vector<8x1xf32> to vector<8x128xf32>
    %334 = arith.cmpf oeq, %329, %333 : vector<8x128xf32>
    %c128_i32_150 = arith.constant 128 : i32
    %335 = vector.broadcast %c128_i32_150 : i32 to vector<8x128xi32>
    %336 = arith.select %334, %330, %335 : vector<8x128xi1>, vector<8x128xi32>
    %cst_151 = arith.constant dense<2147483647> : vector<8xi32>
    %337 = vector.multi_reduction <minsi>, %336, %cst_151 [1] : vector<8x128xi32> to vector<8xi32>
    %338 = vector.shape_cast %337 : vector<8xi32> to vector<8x1xi32>
    %339 = vector.broadcast %338 : vector<8x1xi32> to vector<8x128xi32>
    %340 = arith.cmpi eq, %330, %339 : vector<8x128xi32>
    %341 = arith.extui %340 : vector<8x128xi1> to vector<8x128xi32>
    %342 = arith.sitofp %341 : vector<8x128xi32> to vector<8x128xf32>
    %343 = arith.truncf %342 : vector<8x128xf32> to vector<8x128xbf16>
    %c0_152 = arith.constant 0 : index
    %c0_153 = arith.constant 0 : index
    %344 = vector.load %arg8[%c0_152, %c0_153] : memref<128x128xbf16, #tpu.memory_space<vmem>>, vector<128x128xbf16>
    %cst_154 = arith.constant dense<0.000000e+00> : vector<8x128xf32>
    %345 = tpu.matmul %343, %344, %cst_154 {dimension_numbers = #tpu.dot_dimension_numbers<[1], [0], [0], [1], [0, 0, 1, 1], [], []>} : vector<8x128xbf16>, vector<128x128xbf16>, vector<8x128xf32> -> vector<8x128xf32>
    %c0_155 = arith.constant 0 : index
    %c128_156 = arith.constant 128 : index
    %346 = vector.load %arg11[%c0_155, %c128_156] : memref<8x256xf32, #tpu.memory_space<vmem>>, vector<8x128xf32>
    tpu.vector_store %arg11[%c0_155, %c128_156], %345 {strides = array<i32>} : memref<8x256xf32, #tpu.memory_space<vmem>>, vector<8x128xf32>,
    %347 = arith.index_cast %c4_i32 : i32 to index
    %c0_157 = arith.constant 0 : index
    %c0_158 = arith.constant 0 : index
    %348 = vector.load %arg9[%347, %c0_157, %c0_158] : memref<8x8x128xf32, #tpu.memory_space<vmem>>, vector<1x8x128xf32>
    %349 = vector.shape_cast %348 : vector<1x8x128xf32> to vector<8x128xf32>
    %350 = vector.shape_cast %329 : vector<8x128xf32> to vector<1x8x128xf32>
    tpu.vector_store %arg9[%347, %c0_157, %c0_158], %350 {strides = array<i32>} : memref<8x8x128xf32, #tpu.memory_space<vmem>>, vector<1x8x128xf32>,
    %351 = arith.index_cast %c4_i32 : i32 to index
    %c0_159 = arith.constant 0 : index
    %c0_160 = arith.constant 0 : index
    %352 = vector.load %arg10[%351, %c0_159, %c0_160] : memref<8x8x128xf32, #tpu.memory_space<vmem>>, vector<1x8x128xf32>
    %353 = vector.shape_cast %352 : vector<1x8x128xf32> to vector<8x128xf32>
    %354 = vector.shape_cast %314 : vector<8x128xf32> to vector<1x8x128xf32>
    tpu.vector_store %arg10[%351, %c0_159, %c0_160], %354 {strides = array<i32>} : memref<8x8x128xf32, #tpu.memory_space<vmem>>, vector<1x8x128xf32>,
    %c5_i32 = arith.constant 5 : i32
    %c0_161 = arith.constant 0 : index
    %c0_162 = arith.constant 0 : index
    %355 = vector.load %arg11[%c0_161, %c0_162] : memref<8x256xf32, #tpu.memory_space<vmem>>, vector<8x256xf32>
    %356 = arith.truncf %355 : vector<8x256xf32> to vector<8x256xbf16>
    %c0_163 = arith.constant 0 : index
    %c0_164 = arith.constant 0 : index
    %357 = vector.load %arg4[%c0_163, %c0_164] : memref<256x512xbf16, #tpu.memory_space<vmem>>, vector<256x512xbf16>
    %cst_165 = arith.constant dense<0.000000e+00> : vector<8x512xf32>
    %358 = tpu.matmul %356, %357, %cst_165 {dimension_numbers = #tpu.dot_dimension_numbers<[1], [0], [0], [1], [0, 0, 1, 1], [], []>} : vector<8x256xbf16>, vector<256x512xbf16>, vector<8x512xf32> -> vector<8x512xf32>
    %c0_166 = arith.constant 0 : index
    %c0_167 = arith.constant 0 : index
    %359 = vector.load %arg5[%c0_166, %c0_167] : memref<1x512xf32, #tpu.memory_space<vmem>>, vector<1x512xf32>
    %360 = vector.broadcast %359 : vector<1x512xf32> to vector<8x512xf32>
    %361 = arith.addf %358, %360 : vector<8x512xf32>
    %362 = vector.extract_strided_slice %361 {offsets = [0, 0], sizes = [8, 128], strides = [1, 1]} : vector<8x512xf32> to vector<8x128xf32>
    %363 = arith.negf %362 : vector<8x128xf32>
    %364 = math.exp %363 : vector<8x128xf32>
    %cst_168 = arith.constant 1.000000e+00 : f32
    %365 = vector.broadcast %cst_168 : f32 to vector<8x128xf32>
    %366 = arith.addf %365, %364 : vector<8x128xf32>
    %367 = arith.divf %365, %366 : vector<8x128xf32>
    %368 = vector.extract_strided_slice %361 {offsets = [0, 128], sizes = [8, 128], strides = [1, 1]} : vector<8x512xf32> to vector<8x128xf32>
    %369 = arith.negf %368 : vector<8x128xf32>
    %370 = math.exp %369 : vector<8x128xf32>
    %cst_169 = arith.constant 1.000000e+00 : f32
    %371 = vector.broadcast %cst_169 : f32 to vector<8x128xf32>
    %372 = arith.addf %371, %370 : vector<8x128xf32>
    %373 = arith.divf %371, %372 : vector<8x128xf32>
    %374 = vector.extract_strided_slice %361 {offsets = [0, 256], sizes = [8, 128], strides = [1, 1]} : vector<8x512xf32> to vector<8x128xf32>
    %375 = arith.negf %374 : vector<8x128xf32>
    %376 = math.exp %375 : vector<8x128xf32>
    %cst_170 = arith.constant 1.000000e+00 : f32
    %377 = vector.broadcast %cst_170 : f32 to vector<8x128xf32>
    %378 = arith.addf %377, %376 : vector<8x128xf32>
    %379 = arith.divf %377, %378 : vector<8x128xf32>
    %380 = vector.extract_strided_slice %361 {offsets = [0, 384], sizes = [8, 128], strides = [1, 1]} : vector<8x512xf32> to vector<8x128xf32>
    %381 = math.tanh %380 : vector<8x128xf32>
    %382 = arith.mulf %367, %381 : vector<8x128xf32>
    %383 = arith.mulf %373, %314 : vector<8x128xf32>
    %384 = arith.addf %382, %383 : vector<8x128xf32>
    %385 = math.tanh %384 : vector<8x128xf32>
    %386 = arith.mulf %379, %385 : vector<8x128xf32>
    %c0_171 = arith.constant 0 : index
    %c0_172 = arith.constant 0 : index
    %387 = vector.load %arg11[%c0_171, %c0_172] : memref<8x256xf32, #tpu.memory_space<vmem>>, vector<8x128xf32>
    tpu.vector_store %arg11[%c0_171, %c0_172], %386 {strides = array<i32>} : memref<8x256xf32, #tpu.memory_space<vmem>>, vector<8x128xf32>,
    %c1_i32_173 = arith.constant 1 : i32
    %388 = arith.subi %c5_i32, %c1_i32_173 : i32
    %c0_i32_174 = arith.constant 0 : i32
    %389 = arith.maxsi %388, %c0_i32_174 : i32
    %390 = arith.truncf %386 : vector<8x128xf32> to vector<8x128xbf16>
    %391 = arith.index_cast %389 : i32 to index
    %c0_175 = arith.constant 0 : index
    %c0_176 = arith.constant 0 : index
    %392 = vector.load %arg6[%391, %c0_175, %c0_176] : memref<8x128x128xbf16, #tpu.memory_space<vmem>>, vector<1x128x128xbf16>
    %393 = vector.shape_cast %392 : vector<1x128x128xbf16> to vector<128x128xbf16>
    %cst_177 = arith.constant dense<0.000000e+00> : vector<8x128xf32>
    %394 = tpu.matmul %390, %393, %cst_177 {dimension_numbers = #tpu.dot_dimension_numbers<[1], [0], [0], [1], [0, 0, 1, 1], [], []>} : vector<8x128xbf16>, vector<128x128xbf16>, vector<8x128xf32> -> vector<8x128xf32>
    %395 = arith.index_cast %389 : i32 to index
    %c0_178 = arith.constant 0 : index
    %c0_179 = arith.constant 0 : index
    %396 = vector.load %arg7[%395, %c0_178, %c0_179] : memref<8x1x128xf32, #tpu.memory_space<vmem>>, vector<1x1x128xf32>
    %397 = vector.shape_cast %396 : vector<1x1x128xf32> to vector<1x128xf32>
    %398 = vector.broadcast %397 : vector<1x128xf32> to vector<8x128xf32>
    %399 = arith.addf %394, %398 : vector<8x128xf32>
    %400 = tpu.iota {dimensions = array<i32: 1>} : vector<8x128xi32>
    %cst_180 = arith.constant dense<0xFF800000> : vector<8xf32>
    %401 = vector.multi_reduction <maximumf>, %399, %cst_180 [1] : vector<8x128xf32> to vector<8xf32>
    %402 = vector.shape_cast %401 : vector<8xf32> to vector<8x1xf32>
    %403 = vector.broadcast %402 : vector<8x1xf32> to vector<8x128xf32>
    %404 = arith.cmpf oeq, %399, %403 : vector<8x128xf32>
    %c128_i32_181 = arith.constant 128 : i32
    %405 = vector.broadcast %c128_i32_181 : i32 to vector<8x128xi32>
    %406 = arith.select %404, %400, %405 : vector<8x128xi1>, vector<8x128xi32>
    %cst_182 = arith.constant dense<2147483647> : vector<8xi32>
    %407 = vector.multi_reduction <minsi>, %406, %cst_182 [1] : vector<8x128xi32> to vector<8xi32>
    %408 = vector.shape_cast %407 : vector<8xi32> to vector<8x1xi32>
    %409 = vector.broadcast %408 : vector<8x1xi32> to vector<8x128xi32>
    %410 = arith.cmpi eq, %400, %409 : vector<8x128xi32>
    %411 = arith.extui %410 : vector<8x128xi1> to vector<8x128xi32>
    %412 = arith.sitofp %411 : vector<8x128xi32> to vector<8x128xf32>
    %413 = arith.truncf %412 : vector<8x128xf32> to vector<8x128xbf16>
    %c0_183 = arith.constant 0 : index
    %c0_184 = arith.constant 0 : index
    %414 = vector.load %arg8[%c0_183, %c0_184] : memref<128x128xbf16, #tpu.memory_space<vmem>>, vector<128x128xbf16>
    %cst_185 = arith.constant dense<0.000000e+00> : vector<8x128xf32>
    %415 = tpu.matmul %413, %414, %cst_185 {dimension_numbers = #tpu.dot_dimension_numbers<[1], [0], [0], [1], [0, 0, 1, 1], [], []>} : vector<8x128xbf16>, vector<128x128xbf16>, vector<8x128xf32> -> vector<8x128xf32>
    %c0_186 = arith.constant 0 : index
    %c128_187 = arith.constant 128 : index
    %416 = vector.load %arg11[%c0_186, %c128_187] : memref<8x256xf32, #tpu.memory_space<vmem>>, vector<8x128xf32>
    tpu.vector_store %arg11[%c0_186, %c128_187], %415 {strides = array<i32>} : memref<8x256xf32, #tpu.memory_space<vmem>>, vector<8x128xf32>,
    %417 = arith.index_cast %c5_i32 : i32 to index
    %c0_188 = arith.constant 0 : index
    %c0_189 = arith.constant 0 : index
    %418 = vector.load %arg9[%417, %c0_188, %c0_189] : memref<8x8x128xf32, #tpu.memory_space<vmem>>, vector<1x8x128xf32>
    %419 = vector.shape_cast %418 : vector<1x8x128xf32> to vector<8x128xf32>
    %420 = vector.shape_cast %399 : vector<8x128xf32> to vector<1x8x128xf32>
    tpu.vector_store %arg9[%417, %c0_188, %c0_189], %420 {strides = array<i32>} : memref<8x8x128xf32, #tpu.memory_space<vmem>>, vector<1x8x128xf32>,
    %421 = arith.index_cast %c5_i32 : i32 to index
    %c0_190 = arith.constant 0 : index
    %c0_191 = arith.constant 0 : index
    %422 = vector.load %arg10[%421, %c0_190, %c0_191] : memref<8x8x128xf32, #tpu.memory_space<vmem>>, vector<1x8x128xf32>
    %423 = vector.shape_cast %422 : vector<1x8x128xf32> to vector<8x128xf32>
    %424 = vector.shape_cast %384 : vector<8x128xf32> to vector<1x8x128xf32>
    tpu.vector_store %arg10[%421, %c0_190, %c0_191], %424 {strides = array<i32>} : memref<8x8x128xf32, #tpu.memory_space<vmem>>, vector<1x8x128xf32>,
    %c6_i32 = arith.constant 6 : i32
    %c0_192 = arith.constant 0 : index
    %c0_193 = arith.constant 0 : index
    %425 = vector.load %arg11[%c0_192, %c0_193] : memref<8x256xf32, #tpu.memory_space<vmem>>, vector<8x256xf32>
    %426 = arith.truncf %425 : vector<8x256xf32> to vector<8x256xbf16>
    %c0_194 = arith.constant 0 : index
    %c0_195 = arith.constant 0 : index
    %427 = vector.load %arg4[%c0_194, %c0_195] : memref<256x512xbf16, #tpu.memory_space<vmem>>, vector<256x512xbf16>
    %cst_196 = arith.constant dense<0.000000e+00> : vector<8x512xf32>
    %428 = tpu.matmul %426, %427, %cst_196 {dimension_numbers = #tpu.dot_dimension_numbers<[1], [0], [0], [1], [0, 0, 1, 1], [], []>} : vector<8x256xbf16>, vector<256x512xbf16>, vector<8x512xf32> -> vector<8x512xf32>
    %c0_197 = arith.constant 0 : index
    %c0_198 = arith.constant 0 : index
    %429 = vector.load %arg5[%c0_197, %c0_198] : memref<1x512xf32, #tpu.memory_space<vmem>>, vector<1x512xf32>
    %430 = vector.broadcast %429 : vector<1x512xf32> to vector<8x512xf32>
    %431 = arith.addf %428, %430 : vector<8x512xf32>
    %432 = vector.extract_strided_slice %431 {offsets = [0, 0], sizes = [8, 128], strides = [1, 1]} : vector<8x512xf32> to vector<8x128xf32>
    %433 = arith.negf %432 : vector<8x128xf32>
    %434 = math.exp %433 : vector<8x128xf32>
    %cst_199 = arith.constant 1.000000e+00 : f32
    %435 = vector.broadcast %cst_199 : f32 to vector<8x128xf32>
    %436 = arith.addf %435, %434 : vector<8x128xf32>
    %437 = arith.divf %435, %436 : vector<8x128xf32>
    %438 = vector.extract_strided_slice %431 {offsets = [0, 128], sizes = [8, 128], strides = [1, 1]} : vector<8x512xf32> to vector<8x128xf32>
    %439 = arith.negf %438 : vector<8x128xf32>
    %440 = math.exp %439 : vector<8x128xf32>
    %cst_200 = arith.constant 1.000000e+00 : f32
    %441 = vector.broadcast %cst_200 : f32 to vector<8x128xf32>
    %442 = arith.addf %441, %440 : vector<8x128xf32>
    %443 = arith.divf %441, %442 : vector<8x128xf32>
    %444 = vector.extract_strided_slice %431 {offsets = [0, 256], sizes = [8, 128], strides = [1, 1]} : vector<8x512xf32> to vector<8x128xf32>
    %445 = arith.negf %444 : vector<8x128xf32>
    %446 = math.exp %445 : vector<8x128xf32>
    %cst_201 = arith.constant 1.000000e+00 : f32
    %447 = vector.broadcast %cst_201 : f32 to vector<8x128xf32>
    %448 = arith.addf %447, %446 : vector<8x128xf32>
    %449 = arith.divf %447, %448 : vector<8x128xf32>
    %450 = vector.extract_strided_slice %431 {offsets = [0, 384], sizes = [8, 128], strides = [1, 1]} : vector<8x512xf32> to vector<8x128xf32>
    %451 = math.tanh %450 : vector<8x128xf32>
    %452 = arith.mulf %437, %451 : vector<8x128xf32>
    %453 = arith.mulf %443, %384 : vector<8x128xf32>
    %454 = arith.addf %452, %453 : vector<8x128xf32>
    %455 = math.tanh %454 : vector<8x128xf32>
    %456 = arith.mulf %449, %455 : vector<8x128xf32>
    %c0_202 = arith.constant 0 : index
    %c0_203 = arith.constant 0 : index
    %457 = vector.load %arg11[%c0_202, %c0_203] : memref<8x256xf32, #tpu.memory_space<vmem>>, vector<8x128xf32>
    tpu.vector_store %arg11[%c0_202, %c0_203], %456 {strides = array<i32>} : memref<8x256xf32, #tpu.memory_space<vmem>>, vector<8x128xf32>,
    %c1_i32_204 = arith.constant 1 : i32
    %458 = arith.subi %c6_i32, %c1_i32_204 : i32
    %c0_i32_205 = arith.constant 0 : i32
    %459 = arith.maxsi %458, %c0_i32_205 : i32
    %460 = arith.truncf %456 : vector<8x128xf32> to vector<8x128xbf16>
    %461 = arith.index_cast %459 : i32 to index
    %c0_206 = arith.constant 0 : index
    %c0_207 = arith.constant 0 : index
    %462 = vector.load %arg6[%461, %c0_206, %c0_207] : memref<8x128x128xbf16, #tpu.memory_space<vmem>>, vector<1x128x128xbf16>
    %463 = vector.shape_cast %462 : vector<1x128x128xbf16> to vector<128x128xbf16>
    %cst_208 = arith.constant dense<0.000000e+00> : vector<8x128xf32>
    %464 = tpu.matmul %460, %463, %cst_208 {dimension_numbers = #tpu.dot_dimension_numbers<[1], [0], [0], [1], [0, 0, 1, 1], [], []>} : vector<8x128xbf16>, vector<128x128xbf16>, vector<8x128xf32> -> vector<8x128xf32>
    %465 = arith.index_cast %459 : i32 to index
    %c0_209 = arith.constant 0 : index
    %c0_210 = arith.constant 0 : index
    %466 = vector.load %arg7[%465, %c0_209, %c0_210] : memref<8x1x128xf32, #tpu.memory_space<vmem>>, vector<1x1x128xf32>
    %467 = vector.shape_cast %466 : vector<1x1x128xf32> to vector<1x128xf32>
    %468 = vector.broadcast %467 : vector<1x128xf32> to vector<8x128xf32>
    %469 = arith.addf %464, %468 : vector<8x128xf32>
    %470 = tpu.iota {dimensions = array<i32: 1>} : vector<8x128xi32>
    %cst_211 = arith.constant dense<0xFF800000> : vector<8xf32>
    %471 = vector.multi_reduction <maximumf>, %469, %cst_211 [1] : vector<8x128xf32> to vector<8xf32>
    %472 = vector.shape_cast %471 : vector<8xf32> to vector<8x1xf32>
    %473 = vector.broadcast %472 : vector<8x1xf32> to vector<8x128xf32>
    %474 = arith.cmpf oeq, %469, %473 : vector<8x128xf32>
    %c128_i32_212 = arith.constant 128 : i32
    %475 = vector.broadcast %c128_i32_212 : i32 to vector<8x128xi32>
    %476 = arith.select %474, %470, %475 : vector<8x128xi1>, vector<8x128xi32>
    %cst_213 = arith.constant dense<2147483647> : vector<8xi32>
    %477 = vector.multi_reduction <minsi>, %476, %cst_213 [1] : vector<8x128xi32> to vector<8xi32>
    %478 = vector.shape_cast %477 : vector<8xi32> to vector<8x1xi32>
    %479 = vector.broadcast %478 : vector<8x1xi32> to vector<8x128xi32>
    %480 = arith.cmpi eq, %470, %479 : vector<8x128xi32>
    %481 = arith.extui %480 : vector<8x128xi1> to vector<8x128xi32>
    %482 = arith.sitofp %481 : vector<8x128xi32> to vector<8x128xf32>
    %483 = arith.truncf %482 : vector<8x128xf32> to vector<8x128xbf16>
    %c0_214 = arith.constant 0 : index
    %c0_215 = arith.constant 0 : index
    %484 = vector.load %arg8[%c0_214, %c0_215] : memref<128x128xbf16, #tpu.memory_space<vmem>>, vector<128x128xbf16>
    %cst_216 = arith.constant dense<0.000000e+00> : vector<8x128xf32>
    %485 = tpu.matmul %483, %484, %cst_216 {dimension_numbers = #tpu.dot_dimension_numbers<[1], [0], [0], [1], [0, 0, 1, 1], [], []>} : vector<8x128xbf16>, vector<128x128xbf16>, vector<8x128xf32> -> vector<8x128xf32>
    %c0_217 = arith.constant 0 : index
    %c128_218 = arith.constant 128 : index
    %486 = vector.load %arg11[%c0_217, %c128_218] : memref<8x256xf32, #tpu.memory_space<vmem>>, vector<8x128xf32>
    tpu.vector_store %arg11[%c0_217, %c128_218], %485 {strides = array<i32>} : memref<8x256xf32, #tpu.memory_space<vmem>>, vector<8x128xf32>,
    %487 = arith.index_cast %c6_i32 : i32 to index
    %c0_219 = arith.constant 0 : index
    %c0_220 = arith.constant 0 : index
    %488 = vector.load %arg9[%487, %c0_219, %c0_220] : memref<8x8x128xf32, #tpu.memory_space<vmem>>, vector<1x8x128xf32>
    %489 = vector.shape_cast %488 : vector<1x8x128xf32> to vector<8x128xf32>
    %490 = vector.shape_cast %469 : vector<8x128xf32> to vector<1x8x128xf32>
    tpu.vector_store %arg9[%487, %c0_219, %c0_220], %490 {strides = array<i32>} : memref<8x8x128xf32, #tpu.memory_space<vmem>>, vector<1x8x128xf32>,
    %491 = arith.index_cast %c6_i32 : i32 to index
    %c0_221 = arith.constant 0 : index
    %c0_222 = arith.constant 0 : index
    %492 = vector.load %arg10[%491, %c0_221, %c0_222] : memref<8x8x128xf32, #tpu.memory_space<vmem>>, vector<1x8x128xf32>
    %493 = vector.shape_cast %492 : vector<1x8x128xf32> to vector<8x128xf32>
    %494 = vector.shape_cast %454 : vector<8x128xf32> to vector<1x8x128xf32>
    tpu.vector_store %arg10[%491, %c0_221, %c0_222], %494 {strides = array<i32>} : memref<8x8x128xf32, #tpu.memory_space<vmem>>, vector<1x8x128xf32>,
    %c7_i32 = arith.constant 7 : i32
    %c0_223 = arith.constant 0 : index
    %c0_224 = arith.constant 0 : index
    %495 = vector.load %arg11[%c0_223, %c0_224] : memref<8x256xf32, #tpu.memory_space<vmem>>, vector<8x256xf32>
    %496 = arith.truncf %495 : vector<8x256xf32> to vector<8x256xbf16>
    %c0_225 = arith.constant 0 : index
    %c0_226 = arith.constant 0 : index
    %497 = vector.load %arg4[%c0_225, %c0_226] : memref<256x512xbf16, #tpu.memory_space<vmem>>, vector<256x512xbf16>
    %cst_227 = arith.constant dense<0.000000e+00> : vector<8x512xf32>
    %498 = tpu.matmul %496, %497, %cst_227 {dimension_numbers = #tpu.dot_dimension_numbers<[1], [0], [0], [1], [0, 0, 1, 1], [], []>} : vector<8x256xbf16>, vector<256x512xbf16>, vector<8x512xf32> -> vector<8x512xf32>
    %c0_228 = arith.constant 0 : index
    %c0_229 = arith.constant 0 : index
    %499 = vector.load %arg5[%c0_228, %c0_229] : memref<1x512xf32, #tpu.memory_space<vmem>>, vector<1x512xf32>
    %500 = vector.broadcast %499 : vector<1x512xf32> to vector<8x512xf32>
    %501 = arith.addf %498, %500 : vector<8x512xf32>
    %502 = vector.extract_strided_slice %501 {offsets = [0, 0], sizes = [8, 128], strides = [1, 1]} : vector<8x512xf32> to vector<8x128xf32>
    %503 = arith.negf %502 : vector<8x128xf32>
    %504 = math.exp %503 : vector<8x128xf32>
    %cst_230 = arith.constant 1.000000e+00 : f32
    %505 = vector.broadcast %cst_230 : f32 to vector<8x128xf32>
    %506 = arith.addf %505, %504 : vector<8x128xf32>
    %507 = arith.divf %505, %506 : vector<8x128xf32>
    %508 = vector.extract_strided_slice %501 {offsets = [0, 128], sizes = [8, 128], strides = [1, 1]} : vector<8x512xf32> to vector<8x128xf32>
    %509 = arith.negf %508 : vector<8x128xf32>
    %510 = math.exp %509 : vector<8x128xf32>
    %cst_231 = arith.constant 1.000000e+00 : f32
    %511 = vector.broadcast %cst_231 : f32 to vector<8x128xf32>
    %512 = arith.addf %511, %510 : vector<8x128xf32>
    %513 = arith.divf %511, %512 : vector<8x128xf32>
    %514 = vector.extract_strided_slice %501 {offsets = [0, 256], sizes = [8, 128], strides = [1, 1]} : vector<8x512xf32> to vector<8x128xf32>
    %515 = arith.negf %514 : vector<8x128xf32>
    %516 = math.exp %515 : vector<8x128xf32>
    %cst_232 = arith.constant 1.000000e+00 : f32
    %517 = vector.broadcast %cst_232 : f32 to vector<8x128xf32>
    %518 = arith.addf %517, %516 : vector<8x128xf32>
    %519 = arith.divf %517, %518 : vector<8x128xf32>
    %520 = vector.extract_strided_slice %501 {offsets = [0, 384], sizes = [8, 128], strides = [1, 1]} : vector<8x512xf32> to vector<8x128xf32>
    %521 = math.tanh %520 : vector<8x128xf32>
    %522 = arith.mulf %507, %521 : vector<8x128xf32>
    %523 = arith.mulf %513, %454 : vector<8x128xf32>
    %524 = arith.addf %522, %523 : vector<8x128xf32>
    %525 = math.tanh %524 : vector<8x128xf32>
    %526 = arith.mulf %519, %525 : vector<8x128xf32>
    %c0_233 = arith.constant 0 : index
    %c0_234 = arith.constant 0 : index
    %527 = vector.load %arg11[%c0_233, %c0_234] : memref<8x256xf32, #tpu.memory_space<vmem>>, vector<8x128xf32>
    tpu.vector_store %arg11[%c0_233, %c0_234], %526 {strides = array<i32>} : memref<8x256xf32, #tpu.memory_space<vmem>>, vector<8x128xf32>,
    %c1_i32_235 = arith.constant 1 : i32
    %528 = arith.subi %c7_i32, %c1_i32_235 : i32
    %c0_i32_236 = arith.constant 0 : i32
    %529 = arith.maxsi %528, %c0_i32_236 : i32
    %530 = arith.truncf %526 : vector<8x128xf32> to vector<8x128xbf16>
    %531 = arith.index_cast %529 : i32 to index
    %c0_237 = arith.constant 0 : index
    %c0_238 = arith.constant 0 : index
    %532 = vector.load %arg6[%531, %c0_237, %c0_238] : memref<8x128x128xbf16, #tpu.memory_space<vmem>>, vector<1x128x128xbf16>
    %533 = vector.shape_cast %532 : vector<1x128x128xbf16> to vector<128x128xbf16>
    %cst_239 = arith.constant dense<0.000000e+00> : vector<8x128xf32>
    %534 = tpu.matmul %530, %533, %cst_239 {dimension_numbers = #tpu.dot_dimension_numbers<[1], [0], [0], [1], [0, 0, 1, 1], [], []>} : vector<8x128xbf16>, vector<128x128xbf16>, vector<8x128xf32> -> vector<8x128xf32>
    %535 = arith.index_cast %529 : i32 to index
    %c0_240 = arith.constant 0 : index
    %c0_241 = arith.constant 0 : index
    %536 = vector.load %arg7[%535, %c0_240, %c0_241] : memref<8x1x128xf32, #tpu.memory_space<vmem>>, vector<1x1x128xf32>
    %537 = vector.shape_cast %536 : vector<1x1x128xf32> to vector<1x128xf32>
    %538 = vector.broadcast %537 : vector<1x128xf32> to vector<8x128xf32>
    %539 = arith.addf %534, %538 : vector<8x128xf32>
    %540 = tpu.iota {dimensions = array<i32: 1>} : vector<8x128xi32>
    %cst_242 = arith.constant dense<0xFF800000> : vector<8xf32>
    %541 = vector.multi_reduction <maximumf>, %539, %cst_242 [1] : vector<8x128xf32> to vector<8xf32>
    %542 = vector.shape_cast %541 : vector<8xf32> to vector<8x1xf32>
    %543 = vector.broadcast %542 : vector<8x1xf32> to vector<8x128xf32>
    %544 = arith.cmpf oeq, %539, %543 : vector<8x128xf32>
    %c128_i32_243 = arith.constant 128 : i32
    %545 = vector.broadcast %c128_i32_243 : i32 to vector<8x128xi32>
    %546 = arith.select %544, %540, %545 : vector<8x128xi1>, vector<8x128xi32>
    %cst_244 = arith.constant dense<2147483647> : vector<8xi32>
    %547 = vector.multi_reduction <minsi>, %546, %cst_244 [1] : vector<8x128xi32> to vector<8xi32>
    %548 = vector.shape_cast %547 : vector<8xi32> to vector<8x1xi32>
    %549 = vector.broadcast %548 : vector<8x1xi32> to vector<8x128xi32>
    %550 = arith.cmpi eq, %540, %549 : vector<8x128xi32>
    %551 = arith.extui %550 : vector<8x128xi1> to vector<8x128xi32>
    %552 = arith.sitofp %551 : vector<8x128xi32> to vector<8x128xf32>
    %553 = arith.truncf %552 : vector<8x128xf32> to vector<8x128xbf16>
    %c0_245 = arith.constant 0 : index
    %c0_246 = arith.constant 0 : index
    %554 = vector.load %arg8[%c0_245, %c0_246] : memref<128x128xbf16, #tpu.memory_space<vmem>>, vector<128x128xbf16>
    %cst_247 = arith.constant dense<0.000000e+00> : vector<8x128xf32>
    %555 = tpu.matmul %553, %554, %cst_247 {dimension_numbers = #tpu.dot_dimension_numbers<[1], [0], [0], [1], [0, 0, 1, 1], [], []>} : vector<8x128xbf16>, vector<128x128xbf16>, vector<8x128xf32> -> vector<8x128xf32>
    %c0_248 = arith.constant 0 : index
    %c128_249 = arith.constant 128 : index
    %556 = vector.load %arg11[%c0_248, %c128_249] : memref<8x256xf32, #tpu.memory_space<vmem>>, vector<8x128xf32>
    tpu.vector_store %arg11[%c0_248, %c128_249], %555 {strides = array<i32>} : memref<8x256xf32, #tpu.memory_space<vmem>>, vector<8x128xf32>,
    %557 = arith.index_cast %c7_i32 : i32 to index
    %c0_250 = arith.constant 0 : index
    %c0_251 = arith.constant 0 : index
    %558 = vector.load %arg9[%557, %c0_250, %c0_251] : memref<8x8x128xf32, #tpu.memory_space<vmem>>, vector<1x8x128xf32>
    %559 = vector.shape_cast %558 : vector<1x8x128xf32> to vector<8x128xf32>
    %560 = vector.shape_cast %539 : vector<8x128xf32> to vector<1x8x128xf32>
    tpu.vector_store %arg9[%557, %c0_250, %c0_251], %560 {strides = array<i32>} : memref<8x8x128xf32, #tpu.memory_space<vmem>>, vector<1x8x128xf32>,
    %561 = arith.index_cast %c7_i32 : i32 to index
    %c0_252 = arith.constant 0 : index
    %c0_253 = arith.constant 0 : index
    %562 = vector.load %arg10[%561, %c0_252, %c0_253] : memref<8x8x128xf32, #tpu.memory_space<vmem>>, vector<1x8x128xf32>
    %563 = vector.shape_cast %562 : vector<1x8x128xf32> to vector<8x128xf32>
    %564 = vector.shape_cast %524 : vector<8x128xf32> to vector<1x8x128xf32>
    tpu.vector_store %arg10[%561, %c0_252, %c0_253], %564 {strides = array<i32>} : memref<8x8x128xf32, #tpu.memory_space<vmem>>, vector<1x8x128xf32>,
    %c8_i32 = arith.constant 8 : i32
    return
  }
  func.func @transform_0(%arg0: i32) -> (i32, i32) {
    %c0_i32 = arith.constant 0 : i32
    %c0_i32_0 = arith.constant 0 : i32
    return %arg0, %c0_i32 : i32, i32
  }
  func.func @transform_1(%arg0: i32) -> (i32, i32) {
    %c0_i32 = arith.constant 0 : i32
    %c0_i32_0 = arith.constant 0 : i32
    return %arg0, %c0_i32 : i32, i32
  }
  func.func @transform_2(%arg0: i32) -> (i32, i32) {
    %c0_i32 = arith.constant 0 : i32
    %c0_i32_0 = arith.constant 0 : i32
    return %arg0, %c0_i32 : i32, i32
  }
  func.func @transform_3(%arg0: i32) -> (i32, i32) {
    %c0_i32 = arith.constant 0 : i32
    %c0_i32_0 = arith.constant 0 : i32
    %c0_i32_1 = arith.constant 0 : i32
    return %c0_i32, %c0_i32_0 : i32, i32
  }
  func.func @transform_4(%arg0: i32) -> (i32, i32) {
    %c0_i32 = arith.constant 0 : i32
    %c0_i32_0 = arith.constant 0 : i32
    %c0_i32_1 = arith.constant 0 : i32
    return %c0_i32, %c0_i32_0 : i32, i32
  }
  func.func @transform_5(%arg0: i32) -> (i32, i32, i32) {
    %c0_i32 = arith.constant 0 : i32
    %c0_i32_0 = arith.constant 0 : i32
    %c0_i32_1 = arith.constant 0 : i32
    %c0_i32_2 = arith.constant 0 : i32
    return %c0_i32, %c0_i32_0, %c0_i32_1 : i32, i32, i32
  }
  func.func @transform_6(%arg0: i32) -> (i32, i32, i32) {
    %c0_i32 = arith.constant 0 : i32
    %c0_i32_0 = arith.constant 0 : i32
    %c0_i32_1 = arith.constant 0 : i32
    %c0_i32_2 = arith.constant 0 : i32
    return %c0_i32, %c0_i32_0, %c0_i32_1 : i32, i32, i32
  }
  func.func @transform_7(%arg0: i32) -> (i32, i32) {
    %c0_i32 = arith.constant 0 : i32
    %c0_i32_0 = arith.constant 0 : i32
    %c0_i32_1 = arith.constant 0 : i32
    return %c0_i32, %c0_i32_0 : i32, i32
  }
  func.func @transform_8(%arg0: i32) -> (i32, i32, i32) {
    %c0_i32 = arith.constant 0 : i32
    %c0_i32_0 = arith.constant 0 : i32
    %c0_i32_1 = arith.constant 0 : i32
    return %c0_i32, %arg0, %c0_i32_0 : i32, i32, i32
  }
  func.func @transform_9(%arg0: i32) -> (i32, i32, i32) {
    %c0_i32 = arith.constant 0 : i32
    %c0_i32_0 = arith.constant 0 : i32
    %c0_i32_1 = arith.constant 0 : i32
    return %c0_i32, %arg0, %c0_i32_0 : i32, i32, i32
  }
}

</mosaic_0001>

<llo_original>
// kernel: decoder_lstm_forward.1
$region0: #{decoder_lstm_forward.1}
  #allocation0 [shape = 'u32[]', space=smem, size = 0x4, offset = 0x4, fixed_abs, tag = 'smem constant byte address 0x4 - core index']
  #allocation1 [shape = 'u32[144,128]{1,0:T(1,128)}', space=vmem, size = 0x12000, scoped, tag = 'internal scratch']
  #allocation2 [shape = 'f32[8,256]{1,0:T(8,128)}', space=vmem, size = 0x2000, scoped, tag = 'scratch operand']
  %s0 = inlined_call_operand.vmem [shape: f32[8,128], index: 0, kind: input, shape index: {}]
  %s1 = inlined_call_operand.vmem [shape: f32[8,128], index: 1, kind: input, shape index: {}]
  %s2 = inlined_call_operand.vmem [shape: f32[8,128], index: 2, kind: input, shape index: {}]
  %s3 = inlined_call_operand.vmem [shape: bf16[256,512], index: 3, kind: input, shape index: {}]
  %s4 = inlined_call_operand.vmem [shape: f32[1,512], index: 4, kind: input, shape index: {}]
  %s5 = inlined_call_operand.vmem [shape: bf16[8,128,128], index: 5, kind: input, shape index: {}]
  %s6 = inlined_call_operand.vmem [shape: f32[8,1,128], index: 6, kind: input, shape index: {}]
  %s7 = inlined_call_operand.vmem [shape: bf16[128,128], index: 7, kind: input, shape index: {}]
  %s8 = inlined_call_operand.vmem [shape: f32[8,8,128], index: 8, kind: output, shape index: {0}]
  %s9 = inlined_call_operand.vmem [shape: f32[8,8,128], index: 9, kind: output, shape index: {1}]
  %10 = xla_tuple %s8, %s9
  %s11 = sld [smem:[#allocation0]]
  $region50: #{decoder_lstm_forward.1} parent=0
    _
  %s13 = ssub.s32 1, %s11
  %s14 = scalar_select 0, %s13, %s11
  // Predicated region
  $region2: #{decoder_lstm_forward.1} parent=0 // pred_check
    _
  $region3: #{decoder_lstm_forward.1} parent=0 // pred_check_branch
    %16 = sbr.rel (0) target = $region5
  $region4: #{decoder_lstm_forward.1} parent=0 // pred_region
    _
  $region5: #{decoder_lstm_forward.1} parent=0 // pred_fallthru
    _
  // Predicated region
  $region6: #{decoder_lstm_forward.1} parent=0 // pred_check
    _
  $region7: #{decoder_lstm_forward.1} parent=0 // pred_check_branch
    %18 = sbr.rel (0) target = $region9
  $region8: #{decoder_lstm_forward.1} parent=0 // pred_region
    _
  $region9: #{decoder_lstm_forward.1} parent=0 // pred_fallthru
    _
  // Predicated region
  $region10: #{decoder_lstm_forward.1} parent=0 // pred_check
    _
  $region11: #{decoder_lstm_forward.1} parent=0 // pred_check_branch
    %20 = sbr.rel (0) target = $region13
  $region12: #{decoder_lstm_forward.1} parent=0 // pred_region
    _
  $region13: #{decoder_lstm_forward.1} parent=0 // pred_fallthru
    _
  // Predicated region
  $region14: #{decoder_lstm_forward.1} parent=0 // pred_check
    _
  $region15: #{decoder_lstm_forward.1} parent=0 // pred_check_branch
    %22 = sbr.rel (0) target = $region17
  $region16: #{decoder_lstm_forward.1} parent=0 // pred_region
    _
  $region17: #{decoder_lstm_forward.1} parent=0 // pred_fallthru
    _
  // Predicated region
  $region18: #{decoder_lstm_forward.1} parent=0 // pred_check
    _
  $region19: #{decoder_lstm_forward.1} parent=0 // pred_check_branch
    %24 = sbr.rel (0) target = $region21
  $region20: #{decoder_lstm_forward.1} parent=0 // pred_region
    _
  $region21: #{decoder_lstm_forward.1} parent=0 // pred_fallthru
    _
  // Predicated region
  $region22: #{decoder_lstm_forward.1} parent=0 // pred_check
    _
  $region23: #{decoder_lstm_forward.1} parent=0 // pred_check_branch
    %26 = sbr.rel (0) target = $region25
  $region24: #{decoder_lstm_forward.1} parent=0 // pred_region
    _
  $region25: #{decoder_lstm_forward.1} parent=0 // pred_fallthru
    _
  // Predicated region
  $region26: #{decoder_lstm_forward.1} parent=0 // pred_check
    _
  $region27: #{decoder_lstm_forward.1} parent=0 // pred_check_branch
    %28 = sbr.rel (0) target = $region29
  $region28: #{decoder_lstm_forward.1} parent=0 // pred_region
    _
  $region29: #{decoder_lstm_forward.1} parent=0 // pred_fallthru
    _
  // Predicated region
  $region30: #{decoder_lstm_forward.1} parent=0 // pred_check
    _
  $region31: #{decoder_lstm_forward.1} parent=0 // pred_check_branch
    %30 = sbr.rel (0) target = $region33
  $region32: #{decoder_lstm_forward.1} parent=0 // pred_region
    _
  $region33: #{decoder_lstm_forward.1} parent=0 // pred_fallthru
    _
  %v32 = vld [vmem:[%s1] sm:$0xff]
  %33 = vst [vmem:[#allocation2] sm:$0xff] %v32
  %v34 = vld [vmem:[%s0] sm:$0xff]
  %35 = vst [vmem:[#allocation2 + $0x8] sm:$0xff] %v34
  %v36 = vld [vmem:[%s2] sm:$0xff]
  %v37 = vld [vmem:[#allocation2] sm:$0xff]
  %v38 = vld [vmem:[#allocation2 + $0x8] sm:$0xff]
  %v39 = vpack.c.bf16 %v37, %v37
  %v40 = vpack.c.bf16 %v38, %v38
  %v41 = vld [vmem:[%s3] sm:$0xff]
  %v42 = vld [vmem:[%s3 + $0x8] sm:$0xff]
  %v43 = vld [vmem:[%s3 + $0x10] sm:$0xff]
  %v44 = vld [vmem:[%s3 + $0x18] sm:$0xff]
  %v45 = vld [vmem:[%s3 + $0x20] sm:$0xff]
  %v46 = vld [vmem:[%s3 + $0x28] sm:$0xff]
  %v47 = vld [vmem:[%s3 + $0x30] sm:$0xff]
  %v48 = vld [vmem:[%s3 + $0x38] sm:$0xff]
  %v49 = vld [vmem:[%s3 + $0x40] sm:$0xff]
  %v50 = vld [vmem:[%s3 + $0x48] sm:$0xff]
  %v51 = vld [vmem:[%s3 + $0x50] sm:$0xff]
  %v52 = vld [vmem:[%s3 + $0x58] sm:$0xff]
  %v53 = vld [vmem:[%s3 + $0x60] sm:$0xff]
  %v54 = vld [vmem:[%s3 + $0x68] sm:$0xff]
  %v55 = vld [vmem:[%s3 + $0x70] sm:$0xff]
  %v56 = vld [vmem:[%s3 + $0x78] sm:$0xff]
  %v57 = vld [vmem:[%s3 + $0x80] sm:$0xff]
  %v58 = vld [vmem:[%s3 + $0x88] sm:$0xff]
  %v59 = vld [vmem:[%s3 + $0x90] sm:$0xff]
  %v60 = vld [vmem:[%s3 + $0x98] sm:$0xff]
  %v61 = vld [vmem:[%s3 + $0xa0] sm:$0xff]
  %v62 = vld [vmem:[%s3 + $0xa8] sm:$0xff]
  %v63 = vld [vmem:[%s3 + $0xb0] sm:$0xff]
  %v64 = vld [vmem:[%s3 + $0xb8] sm:$0xff]
  %v65 = vld [vmem:[%s3 + $0xc0] sm:$0xff]
  %v66 = vld [vmem:[%s3 + $0xc8] sm:$0xff]
  %v67 = vld [vmem:[%s3 + $0xd0] sm:$0xff]
  %v68 = vld [vmem:[%s3 + $0xd8] sm:$0xff]
  %v69 = vld [vmem:[%s3 + $0xe0] sm:$0xff]
  %v70 = vld [vmem:[%s3 + $0xe8] sm:$0xff]
  %v71 = vld [vmem:[%s3 + $0xf0] sm:$0xff]
  %v72 = vld [vmem:[%s3 + $0xf8] sm:$0xff]
  %v73 = vld [vmem:[%s3 + $0x100] sm:$0xff]
  %v74 = vld [vmem:[%s3 + $0x108] sm:$0xff]
  %v75 = vld [vmem:[%s3 + $0x110] sm:$0xff]
  %v76 = vld [vmem:[%s3 + $0x118] sm:$0xff]
  %v77 = vld [vmem:[%s3 + $0x120] sm:$0xff]
  %v78 = vld [vmem:[%s3 + $0x128] sm:$0xff]
  %v79 = vld [vmem:[%s3 + $0x130] sm:$0xff]
  %v80 = vld [vmem:[%s3 + $0x138] sm:$0xff]
  %v81 = vld [vmem:[%s3 + $0x140] sm:$0xff]
  %v82 = vld [vmem:[%s3 + $0x148] sm:$0xff]
  %v83 = vld [vmem:[%s3 + $0x150] sm:$0xff]
  %v84 = vld [vmem:[%s3 + $0x158] sm:$0xff]
  %v85 = vld [vmem:[%s3 + $0x160] sm:$0xff]
  %v86 = vld [vmem:[%s3 + $0x168] sm:$0xff]
  %v87 = vld [vmem:[%s3 + $0x170] sm:$0xff]
  %v88 = vld [vmem:[%s3 + $0x178] sm:$0xff]
  %v89 = vld [vmem:[%s3 + $0x180] sm:$0xff]
  %v90 = vld [vmem:[%s3 + $0x188] sm:$0xff]
  %v91 = vld [vmem:[%s3 + $0x190] sm:$0xff]
  %v92 = vld [vmem:[%s3 + $0x198] sm:$0xff]
  %v93 = vld [vmem:[%s3 + $0x1a0] sm:$0xff]
  %v94 = vld [vmem:[%s3 + $0x1a8] sm:$0xff]
  %v95 = vld [vmem:[%s3 + $0x1b0] sm:$0xff]
  %v96 = vld [vmem:[%s3 + $0x1b8] sm:$0xff]
  %v97 = vld [vmem:[%s3 + $0x1c0] sm:$0xff]
  %v98 = vld [vmem:[%s3 + $0x1c8] sm:$0xff]
  %v99 = vld [vmem:[%s3 + $0x1d0] sm:$0xff]
  %v100 = vld [vmem:[%s3 + $0x1d8] sm:$0xff]
  %v101 = vld [vmem:[%s3 + $0x1e0] sm:$0xff]
  %v102 = vld [vmem:[%s3 + $0x1e8] sm:$0xff]
  %v103 = vld [vmem:[%s3 + $0x1f0] sm:$0xff]
  %v104 = vld [vmem:[%s3 + $0x1f8] sm:$0xff]
  %v105 = vld [vmem:[%s4] sm:$0xf]
  %v107 = vlaneseq
  %v108 = vshrl.u32 %v107, 7
  %v109 = vsub.s32 0, %v108
  %v110 = vrot.slane %v105, %v109
  %v111 = vlaneseq
  %v112 = vshrl.u32 %v111, 7
  %v113 = vsub.s32 1, %v112
  %v114 = vrot.slane %v105, %v113
  %v115 = vlaneseq
  %v116 = vshrl.u32 %v115, 7
  %v117 = vsub.s32 2, %v116
  %v118 = vrot.slane %v105, %v117
  %v119 = vlaneseq
  %v120 = vshrl.u32 %v119, 7
  %v121 = vsub.s32 3, %v120
  %v122 = vrot.slane %v105, %v121
  %v191 = vunpack.c.l.b16 %v41
  %v192 = vunpack.c.h.b16 %v41
  %v193 = vunpack.c.l.b16 %v42
  %v194 = vunpack.c.h.b16 %v42
  %v195 = vunpack.c.l.b16 %v43
  %v196 = vunpack.c.h.b16 %v43
  %v197 = vunpack.c.l.b16 %v44
  %v198 = vunpack.c.h.b16 %v44
  %v199 = vunpack.c.l.b16 %v45
  %v200 = vunpack.c.h.b16 %v45
  %v201 = vunpack.c.l.b16 %v46
  %v202 = vunpack.c.h.b16 %v46
  %v203 = vunpack.c.l.b16 %v47
  %v204 = vunpack.c.h.b16 %v47
  %v205 = vunpack.c.l.b16 %v48
  %v206 = vunpack.c.h.b16 %v48
  %v207 = vunpack.c.l.b16 %v49
  %v208 = vunpack.c.h.b16 %v49
  %v209 = vunpack.c.l.b16 %v50
  %v210 = vunpack.c.h.b16 %v50
  %v211 = vunpack.c.l.b16 %v51
  %v212 = vunpack.c.h.b16 %v51
  %v213 = vunpack.c.l.b16 %v52
  %v214 = vunpack.c.h.b16 %v52
  %v215 = vunpack.c.l.b16 %v53
  %v216 = vunpack.c.h.b16 %v53
  %v217 = vunpack.c.l.b16 %v54
  %v218 = vunpack.c.h.b16 %v54
  %v219 = vunpack.c.l.b16 %v55
  %v220 = vunpack.c.h.b16 %v55
  %v221 = vunpack.c.l.b16 %v56
  %v222 = vunpack.c.h.b16 %v56
  %v223 = vunpack.c.l.b16 %v57
  %v224 = vunpack.c.h.b16 %v57
  %v225 = vunpack.c.l.b16 %v58
  %v226 = vunpack.c.h.b16 %v58
  %v227 = vunpack.c.l.b16 %v59
  %v228 = vunpack.c.h.b16 %v59
  %v229 = vunpack.c.l.b16 %v60
  %v230 = vunpack.c.h.b16 %v60
  %v231 = vunpack.c.l.b16 %v61
  %v232 = vunpack.c.h.b16 %v61
  %v233 = vunpack.c.l.b16 %v62
  %v234 = vunpack.c.h.b16 %v62
  %v235 = vunpack.c.l.b16 %v63
  %v236 = vunpack.c.h.b16 %v63
  %v237 = vunpack.c.l.b16 %v64
  %v238 = vunpack.c.h.b16 %v64
  %v239 = vunpack.c.l.b16 %v65
  %v240 = vunpack.c.h.b16 %v65
  %v241 = vunpack.c.l.b16 %v66
  %v242 = vunpack.c.h.b16 %v66
  %v243 = vunpack.c.l.b16 %v67
  %v244 = vunpack.c.h.b16 %v67
  %v245 = vunpack.c.l.b16 %v68
  %v246 = vunpack.c.h.b16 %v68
  %v247 = vunpack.c.l.b16 %v69
  %v248 = vunpack.c.h.b16 %v69
  %v249 = vunpack.c.l.b16 %v70
  %v250 = vunpack.c.h.b16 %v70
  %v251 = vunpack.c.l.b16 %v71
  %v252 = vunpack.c.h.b16 %v71
  %v253 = vunpack.c.l.b16 %v72
  %v254 = vunpack.c.h.b16 %v72
  %v255 = vunpack.c.l.b16 %v73
  %v256 = vunpack.c.h.b16 %v73
  %v257 = vunpack.c.l.b16 %v74
  %v258 = vunpack.c.h.b16 %v74
  %v259 = vunpack.c.l.b16 %v75
  %v260 = vunpack.c.h.b16 %v75
  %v261 = vunpack.c.l.b16 %v76
  %v262 = vunpack.c.h.b16 %v76
  %v263 = vunpack.c.l.b16 %v77
  %v264 = vunpack.c.h.b16 %v77
  %v265 = vunpack.c.l.b16 %v78
  %v266 = vunpack.c.h.b16 %v78
  %v267 = vunpack.c.l.b16 %v79
  %v268 = vunpack.c.h.b16 %v79
  %v269 = vunpack.c.l.b16 %v80
  %v270 = vunpack.c.h.b16 %v80
  %v271 = vunpack.c.l.b16 %v81
  %v272 = vunpack.c.h.b16 %v81
  %v273 = vunpack.c.l.b16 %v82
  %v274 = vunpack.c.h.b16 %v82
  %v275 = vunpack.c.l.b16 %v83
  %v276 = vunpack.c.h.b16 %v83
  %v277 = vunpack.c.l.b16 %v84
  %v278 = vunpack.c.h.b16 %v84
  %v279 = vunpack.c.l.b16 %v85
  %v280 = vunpack.c.h.b16 %v85
  %v281 = vunpack.c.l.b16 %v86
  %v282 = vunpack.c.h.b16 %v86
  %v283 = vunpack.c.l.b16 %v87
  %v284 = vunpack.c.h.b16 %v87
  %v285 = vunpack.c.l.b16 %v88
  %v286 = vunpack.c.h.b16 %v88
  %v287 = vunpack.c.l.b16 %v89
  %v288 = vunpack.c.h.b16 %v89
  %v289 = vunpack.c.l.b16 %v90
  %v290 = vunpack.c.h.b16 %v90
  %v291 = vunpack.c.l.b16 %v91
  %v292 = vunpack.c.h.b16 %v91
  %v293 = vunpack.c.l.b16 %v92
  %v294 = vunpack.c.h.b16 %v92
  %v295 = vunpack.c.l.b16 %v93
  %v296 = vunpack.c.h.b16 %v93
  %v297 = vunpack.c.l.b16 %v94
  %v298 = vunpack.c.h.b16 %v94
  %v299 = vunpack.c.l.b16 %v95
  %v300 = vunpack.c.h.b16 %v95
  %v301 = vunpack.c.l.b16 %v96
  %v302 = vunpack.c.h.b16 %v96
  %v303 = vunpack.c.l.b16 %v97
  %v304 = vunpack.c.h.b16 %v97
  %v305 = vunpack.c.l.b16 %v98
  %v306 = vunpack.c.h.b16 %v98
  %v307 = vunpack.c.l.b16 %v99
  %v308 = vunpack.c.h.b16 %v99
  %v309 = vunpack.c.l.b16 %v100
  %v310 = vunpack.c.h.b16 %v100
  %v311 = vunpack.c.l.b16 %v101
  %v312 = vunpack.c.h.b16 %v101
  %v313 = vunpack.c.l.b16 %v102
  %v314 = vunpack.c.h.b16 %v102
  %v315 = vunpack.c.l.b16 %v103
  %v316 = vunpack.c.h.b16 %v103
  %v317 = vunpack.c.l.b16 %v104
  %v318 = vunpack.c.h.b16 %v104
  %v319 = vpack.c.b16 %v195, %v191
  %v320 = vpack.c.b16 %v196, %v192
  %v321 = vpack.c.b16 %v197, %v193
  %v322 = vpack.c.b16 %v198, %v194
  %v323 = vpack.c.b16 %v203, %v199
  %v324 = vpack.c.b16 %v204, %v200
  %v325 = vpack.c.b16 %v205, %v201
  %v326 = vpack.c.b16 %v206, %v202
  %v327 = vpack.c.b16 %v211, %v207
  %v328 = vpack.c.b16 %v212, %v208
  %v329 = vpack.c.b16 %v213, %v209
  %v330 = vpack.c.b16 %v214, %v210
  %v331 = vpack.c.b16 %v219, %v215
  %v332 = vpack.c.b16 %v220, %v216
  %v333 = vpack.c.b16 %v221, %v217
  %v334 = vpack.c.b16 %v222, %v218
  %v335 = vpack.c.b16 %v227, %v223
  %v336 = vpack.c.b16 %v228, %v224
  %v337 = vpack.c.b16 %v229, %v225
  %v338 = vpack.c.b16 %v230, %v226
  %v339 = vpack.c.b16 %v235, %v231
  %v340 = vpack.c.b16 %v236, %v232
  %v341 = vpack.c.b16 %v237, %v233
  %v342 = vpack.c.b16 %v238, %v234
  %v343 = vpack.c.b16 %v243, %v239
  %v344 = vpack.c.b16 %v244, %v240
  %v345 = vpack.c.b16 %v245, %v241
  %v346 = vpack.c.b16 %v246, %v242
  %v347 = vpack.c.b16 %v251, %v247
  %v348 = vpack.c.b16 %v252, %v248
  %v349 = vpack.c.b16 %v253, %v249
  %v350 = vpack.c.b16 %v254, %v250
  %v351 = vpack.c.b16 %v259, %v255
  %v352 = vpack.c.b16 %v260, %v256
  %v353 = vpack.c.b16 %v261, %v257
  %v354 = vpack.c.b16 %v262, %v258
  %v355 = vpack.c.b16 %v267, %v263
  %v356 = vpack.c.b16 %v268, %v264
  %v357 = vpack.c.b16 %v269, %v265
  %v358 = vpack.c.b16 %v270, %v266
  %v359 = vpack.c.b16 %v275, %v271
  %v360 = vpack.c.b16 %v276, %v272
  %v361 = vpack.c.b16 %v277, %v273
  %v362 = vpack.c.b16 %v278, %v274
  %v363 = vpack.c.b16 %v283, %v279
  %v364 = vpack.c.b16 %v284, %v280
  %v365 = vpack.c.b16 %v285, %v281
  %v366 = vpack.c.b16 %v286, %v282
  %v367 = vpack.c.b16 %v291, %v287
  %v368 = vpack.c.b16 %v292, %v288
  %v369 = vpack.c.b16 %v293, %v289
  %v370 = vpack.c.b16 %v294, %v290
  %v371 = vpack.c.b16 %v299, %v295
  %v372 = vpack.c.b16 %v300, %v296
  %v373 = vpack.c.b16 %v301, %v297
  %v374 = vpack.c.b16 %v302, %v298
  %v375 = vpack.c.b16 %v307, %v303
  %v376 = vpack.c.b16 %v308, %v304
  %v377 = vpack.c.b16 %v309, %v305
  %v378 = vpack.c.b16 %v310, %v306
  %v379 = vpack.c.b16 %v315, %v311
  %v380 = vpack.c.b16 %v316, %v312
  %v381 = vpack.c.b16 %v317, %v313
  %v382 = vpack.c.b16 %v318, %v314
  %447 = vmatprep.subr.bf16.mxu0 %v320
  %448 = vmatpush1.bf16.msra.mxu0 %v319
  %449 = vmatprep.subr.bf16.mxu0 %v324
  %450 = vmatpush1.bf16.msra.mxu0 %v323
  %451 = vmatprep.subr.bf16.mxu0 %v328
  %452 = vmatpush1.bf16.msra.mxu0 %v327
  %453 = vmatprep.subr.bf16.mxu0 %v332
  %454 = vmatpush1.bf16.msra.mxu0 %v331
  %455 = vmatprep.subr.bf16.mxu0 %v336
  %456 = vmatpush1.bf16.msra.mxu0 %v335
  %457 = vmatprep.subr.bf16.mxu0 %v340
  %458 = vmatpush1.bf16.msra.mxu0 %v339
  %459 = vmatprep.subr.bf16.mxu0 %v344
  %460 = vmatpush1.bf16.msra.mxu0 %v343
  %461 = vmatprep.subr.bf16.mxu0 %v348
  %462 = vmatpush1.bf16.msra.mxu0 %v347
  %463 = vmatprep.subr.bf16.mxu0 %v352
  %464 = vmatpush1.bf16.msra.mxu0 %v351
  %465 = vmatprep.subr.bf16.mxu0 %v356
  %466 = vmatpush1.bf16.msra.mxu0 %v355
  %467 = vmatprep.subr.bf16.mxu0 %v360
  %468 = vmatpush1.bf16.msra.mxu0 %v359
  %469 = vmatprep.subr.bf16.mxu0 %v364
  %470 = vmatpush1.bf16.msra.mxu0 %v363
  %471 = vmatprep.subr.bf16.mxu0 %v368
  %472 = vmatpush1.bf16.msra.mxu0 %v367
  %473 = vmatprep.subr.bf16.mxu0 %v372
  %474 = vmatpush1.bf16.msra.mxu0 %v371
  %475 = vmatprep.subr.bf16.mxu0 %v376
  %476 = vmatpush1.bf16.msra.mxu0 %v375
  %477 = vmatprep.subr.bf16.mxu0 %v380
  %478 = vmatpush1.bf16.msra.mxu0 %v379
  %479 = vmatprep.mubr.bf16.mxu0 %v40
  %480 = vmatmul.mubr.bf16.gmra.mrb[0].mxu0 %v39
  %v481 = vpop.f32.mrb[0].mxu0
  %v482 = vadd.f32 %v110, %v481
  %v483 = vpop.f32.mrb[0].mxu0
  %v484 = vadd.f32 %v114, %v483
  %v485 = vpop.f32.mrb[0].mxu0
  %v486 = vpop.f32.mrb[0].mxu0
  %487 = vdwg.mxu0
  %488 = vmatprep.subr.bf16.mxu0 %v322
  %489 = vmatpush1.bf16.msra.mxu0 %v321
  %490 = vmatprep.subr.bf16.mxu0 %v326
  %491 = vmatpush1.bf16.msra.mxu0 %v325
  %492 = vmatprep.subr.bf16.mxu0 %v330
  %493 = vmatpush1.bf16.msra.mxu0 %v329
  %494 = vmatprep.subr.bf16.mxu0 %v334
  %495 = vmatpush1.bf16.msra.mxu0 %v333
  %496 = vmatprep.subr.bf16.mxu0 %v338
  %497 = vmatpush1.bf16.msra.mxu0 %v337
  %498 = vmatprep.subr.bf16.mxu0 %v342
  %499 = vmatpush1.bf16.msra.mxu0 %v341
  %500 = vmatprep.subr.bf16.mxu0 %v346
  %501 = vmatpush1.bf16.msra.mxu0 %v345
  %502 = vmatprep.subr.bf16.mxu0 %v350
  %503 = vmatpush1.bf16.msra.mxu0 %v349
  %504 = vmatprep.subr.bf16.mxu0 %v354
  %505 = vmatpush1.bf16.msra.mxu0 %v353
  %506 = vmatprep.subr.bf16.mxu0 %v358
  %507 = vmatpush1.bf16.msra.mxu0 %v357
  %508 = vmatprep.subr.bf16.mxu0 %v362
  %509 = vmatpush1.bf16.msra.mxu0 %v361
  %510 = vmatprep.subr.bf16.mxu0 %v366
  %511 = vmatpush1.bf16.msra.mxu0 %v365
  %512 = vmatprep.subr.bf16.mxu0 %v370
  %513 = vmatpush1.bf16.msra.mxu0 %v369
  %514 = vmatprep.subr.bf16.mxu0 %v374
  %515 = vmatpush1.bf16.msra.mxu0 %v373
  %516 = vmatprep.subr.bf16.mxu0 %v378
  %517 = vmatpush1.bf16.msra.mxu0 %v377
  %518 = vmatprep.subr.bf16.mxu0 %v382
  %519 = vmatpush1.bf16.msra.mxu0 %v381
  %520 = vmatprep.mubr.bf16.mxu0 %v40
  %521 = vmatmul.mubr.bf16.gmra.mrb[0].mxu0 %v39
  %v522 = vpop.f32.mrb[0].mxu0
  %v523 = vadd.f32 %v118, %v522
  %v524 = vpop.f32.mrb[0].mxu0
  %v525 = vadd.f32 %v122, %v524
  %v526 = vpop.f32.mrb[0].mxu0
  %v527 = vpop.f32.mrb[0].mxu0
  %528 = vdwg.mxu0
  %v529 = vxor.u32 %v482, 2147483648
  %v530 = vmul.f32 %v529, 1.442695
  %v531 = vpow.pop %v530
  %v532 = vadd.f32 %v531, 1.0
  %v533 = vrcp.pop %v532
  %v534 = vmul.f32 1.0, %v533
  %v535 = vxor.u32 %v484, 2147483648
  %v536 = vmul.f32 %v535, 1.442695
  %v537 = vpow.pop %v536
  %v538 = vadd.f32 %v537, 1.0
  %v539 = vrcp.pop %v538
  %v540 = vmul.f32 1.0, %v539
  %v541 = vxor.u32 %v523, 2147483648
  %v542 = vmul.f32 %v541, 1.442695
  %v543 = vpow.pop %v542
  %v544 = vadd.f32 %v543, 1.0
  %v545 = vrcp.pop %v544
  %v546 = vmul.f32 1.0, %v545
  %v547 = vtanh.pop %v525
  %v548 = vmul.f32 %v534, %v547
  %v549 = vmul.f32 %v540, %v36
  %v550 = vadd.f32 %v548, %v549
  %v551 = vtanh.pop %v550
  %v552 = vmul.f32 %v546, %v551
  %553 = vst [vmem:[#allocation2] sm:$0xff] %v552
  %v554 = vpack.c.bf16 %v552, %v552
  %v555 = vld [vmem:[%s5] sm:$0xf]
  %v556 = vld [vmem:[%s5 + $0x4] sm:$0xf]
  %v557 = vld [vmem:[%s5 + $0x8] sm:$0xf]
  %v558 = vld [vmem:[%s5 + $0xc] sm:$0xf]
  %v559 = vld [vmem:[%s5 + $0x10] sm:$0xf]
  %v560 = vld [vmem:[%s5 + $0x14] sm:$0xf]
  %v561 = vld [vmem:[%s5 + $0x18] sm:$0xf]
  %v562 = vld [vmem:[%s5 + $0x1c] sm:$0xf]
  %v563 = vld [vmem:[%s5 + $0x20] sm:$0xf]
  %v564 = vld [vmem:[%s5 + $0x24] sm:$0xf]
  %v565 = vld [vmem:[%s5 + $0x28] sm:$0xf]
  %v566 = vld [vmem:[%s5 + $0x2c] sm:$0xf]
  %v567 = vld [vmem:[%s5 + $0x30] sm:$0xf]
  %v568 = vld [vmem:[%s5 + $0x34] sm:$0xf]
  %v569 = vld [vmem:[%s5 + $0x38] sm:$0xf]
  %v570 = vld [vmem:[%s5 + $0x3c] sm:$0xf]
  %v571 = vld [vmem:[%s6] sm:$0x1]
  %v573 = vlaneseq
  %v574 = vshrl.u32 %v573, 7
  %v575 = vsub.s32 0, %v574
  %v576 = vrot.slane %v571, %v575
  %v594 = vunpack.c.l.b16 %v555
  %v595 = vunpack.c.l.b16 %v556
  %v596 = vunpack.c.l.b16 %v557
  %v597 = vunpack.c.l.b16 %v558
  %v598 = vunpack.c.l.b16 %v559
  %v599 = vunpack.c.l.b16 %v560
  %v600 = vunpack.c.l.b16 %v561
  %v601 = vunpack.c.l.b16 %v562
  %v602 = vunpack.c.l.b16 %v563
  %v603 = vunpack.c.l.b16 %v564
  %v604 = vunpack.c.l.b16 %v565
  %v605 = vunpack.c.l.b16 %v566
  %v606 = vunpack.c.l.b16 %v567
  %v607 = vunpack.c.l.b16 %v568
  %v608 = vunpack.c.l.b16 %v569
  %v609 = vunpack.c.l.b16 %v570
  %v610 = vpack.c.b16 %v595, %v594
  %v611 = vpack.c.b16 %v597, %v596
  %v612 = vpack.c.b16 %v599, %v598
  %v613 = vpack.c.b16 %v601, %v600
  %v614 = vpack.c.b16 %v603, %v602
  %v615 = vpack.c.b16 %v605, %v604
  %v616 = vpack.c.b16 %v607, %v606
  %v617 = vpack.c.b16 %v609, %v608
  %626 = vmatprep.subr.bf16.mxu0 0
  %627 = vmatpush1.bf16.msra.mxu0 %v610
  %628 = vmatprep.subr.bf16.mxu0 0
  %629 = vmatpush1.bf16.msra.mxu0 %v611
  %630 = vmatprep.subr.bf16.mxu0 0
  %631 = vmatpush1.bf16.msra.mxu0 %v612
  %632 = vmatprep.subr.bf16.mxu0 0
  %633 = vmatpush1.bf16.msra.mxu0 %v613
  %634 = vmatprep.subr.bf16.mxu0 0
  %635 = vmatpush1.bf16.msra.mxu0 %v614
  %636 = vmatprep.subr.bf16.mxu0 0
  %637 = vmatpush1.bf16.msra.mxu0 %v615
  %638 = vmatprep.subr.bf16.mxu0 0
  %639 = vmatpush1.bf16.msra.mxu0 %v616
  %640 = vmatprep.subr.bf16.mxu0 0
  %641 = vmatpush1.bf16.msra.mxu0 %v617
  %642 = vmatprep.subr.bf16.mxu0 0
  %643 = vmatpush1.bf16.msra.mxu0 0
  %644 = vmatprep.subr.bf16.mxu0 0
  %645 = vmatpush1.bf16.msra.mxu0 0
  %646 = vmatprep.subr.bf16.mxu0 0
  %647 = vmatpush1.bf16.msra.mxu0 0
  %648 = vmatprep.subr.bf16.mxu0 0
  %649 = vmatpush1.bf16.msra.mxu0 0
  %650 = vmatprep.subr.bf16.mxu0 0
  %651 = vmatpush1.bf16.msra.mxu0 0
  %652 = vmatprep.subr.bf16.mxu0 0
  %653 = vmatpush1.bf16.msra.mxu0 0
  %654 = vmatprep.subr.bf16.mxu0 0
  %655 = vmatpush1.bf16.msra.mxu0 0
  %656 = vmatprep.subr.bf16.mxu0 0
  %657 = vmatpush1.bf16.msra.mxu0 0
  %658 = vmatprep.mubr.bf16.mxu0 0
  %659 = vmatmul.mubr.bf16.gmra.mrb[0].mxu0 %v554
  %v660 = vpop.f32.mrb[0].mxu0
  %v661 = vadd.f32 %v576, %v660
  %v662 = vpop.f32.mrb[0].mxu0
  %v663 = vpop.f32.mrb[0].mxu0
  %v664 = vpop.f32.mrb[0].mxu0
  %665 = vdwg.mxu0
  %v666 = vlaneseq
  %v667 = vand.u32 %v666, 127
  %668 = vmax.xlane.f32.xlu0 %v661
  %v669 = vpop.xlane.xlu0 %668
  %vm670 = vcmp.eq.f32.partialorder %v661, %v669
  %v671 = vsel %vm670, %v667, 128
  %v672 = vand.u32 %v671, 65535
  %v673 = vshra.s32 %v671, 16
  %v674 = vcvt.s32.f32 %v672
  %v675 = vcvt.s32.f32 %v673
  %676 = vmin.xlane.f32.xlu0 %v675
  %v677 = vpop.xlane.xlu0 %676
  %vm678 = vcmp.eq.f32.partialorder %v675, %v677
  %v679 = vsel %vm678, %v674, inf
  %680 = vmin.xlane.f32.xlu0 %v679
  %v681 = vpop.xlane.xlu0 %680
  %v682 = vcvt.f32.s32 %v681
  %v683 = vcvt.f32.s32 %v677
  %v684 = vshll.u32 %v683, 16
  %v685 = vadd.s32 %v684, %v682
  %vm686 = vcmp.eq.s32.totalorder %v667, %v685
  %v687 = vsel %vm686, 1, 0
  %v688 = vcvt.s32.f32 %v687
  %v689 = vpack.c.bf16 %v688, %v688
  %v690 = vld [vmem:[%s7] sm:$0xf]
  %v691 = vld [vmem:[%s7 + $0x4] sm:$0xf]
  %v692 = vld [vmem:[%s7 + $0x8] sm:$0xf]
  %v693 = vld [vmem:[%s7 + $0xc] sm:$0xf]
  %v694 = vld [vmem:[%s7 + $0x10] sm:$0xf]
  %v695 = vld [vmem:[%s7 + $0x14] sm:$0xf]
  %v696 = vld [vmem:[%s7 + $0x18] sm:$0xf]
  %v697 = vld [vmem:[%s7 + $0x1c] sm:$0xf]
  %v698 = vld [vmem:[%s7 + $0x20] sm:$0xf]
  %v699 = vld [vmem:[%s7 + $0x24] sm:$0xf]
  %v700 = vld [vmem:[%s7 + $0x28] sm:$0xf]
  %v701 = vld [vmem:[%s7 + $0x2c] sm:$0xf]
  %v702 = vld [vmem:[%s7 + $0x30] sm:$0xf]
  %v703 = vld [vmem:[%s7 + $0x34] sm:$0xf]
  %v704 = vld [vmem:[%s7 + $0x38] sm:$0xf]
  %v705 = vld [vmem:[%s7 + $0x3c] sm:$0xf]
  %v722 = vunpack.c.l.b16 %v690
  %v723 = vunpack.c.l.b16 %v691
  %v724 = vunpack.c.l.b16 %v692
  %v725 = vunpack.c.l.b16 %v693
  %v726 = vunpack.c.l.b16 %v694
  %v727 = vunpack.c.l.b16 %v695
  %v728 = vunpack.c.l.b16 %v696
  %v729 = vunpack.c.l.b16 %v697
  %v730 = vunpack.c.l.b16 %v698
  %v731 = vunpack.c.l.b16 %v699
  %v732 = vunpack.c.l.b16 %v700
  %v733 = vunpack.c.l.b16 %v701
  %v734 = vunpack.c.l.b16 %v702
  %v735 = vunpack.c.l.b16 %v703
  %v736 = vunpack.c.l.b16 %v704
  %v737 = vunpack.c.l.b16 %v705
  %v738 = vpack.c.b16 %v723, %v722
  %v739 = vpack.c.b16 %v725, %v724
  %v740 = vpack.c.b16 %v727, %v726
  %v741 = vpack.c.b16 %v729, %v728
  %v742 = vpack.c.b16 %v731, %v730
  %v743 = vpack.c.b16 %v733, %v732
  %v744 = vpack.c.b16 %v735, %v734
  %v745 = vpack.c.b16 %v737, %v736
  %754 = vmatprep.subr.bf16.mxu0 0
  %755 = vmatpush1.bf16.msra.mxu0 %v738
  %756 = vmatprep.subr.bf16.mxu0 0
  %757 = vmatpush1.bf16.msra.mxu0 %v739
  %758 = vmatprep.subr.bf16.mxu0 0
  %759 = vmatpush1.bf16.msra.mxu0 %v740
  %760 = vmatprep.subr.bf16.mxu0 0
  %761 = vmatpush1.bf16.msra.mxu0 %v741
  %762 = vmatprep.subr.bf16.mxu0 0
  %763 = vmatpush1.bf16.msra.mxu0 %v742
  %764 = vmatprep.subr.bf16.mxu0 0
  %765 = vmatpush1.bf16.msra.mxu0 %v743
  %766 = vmatprep.subr.bf16.mxu0 0
  %767 = vmatpush1.bf16.msra.mxu0 %v744
  %768 = vmatprep.subr.bf16.mxu0 0
  %769 = vmatpush1.bf16.msra.mxu0 %v745
  %770 = vmatprep.subr.bf16.mxu0 0
  %771 = vmatpush1.bf16.msra.mxu0 0
  %772 = vmatprep.subr.bf16.mxu0 0
  %773 = vmatpush1.bf16.msra.mxu0 0
  %774 = vmatprep.subr.bf16.mxu0 0
  %775 = vmatpush1.bf16.msra.mxu0 0
  %776 = vmatprep.subr.bf16.mxu0 0
  %777 = vmatpush1.bf16.msra.mxu0 0
  %778 = vmatprep.subr.bf16.mxu0 0
  %779 = vmatpush1.bf16.msra.mxu0 0
  %780 = vmatprep.subr.bf16.mxu0 0
  %781 = vmatpush1.bf16.msra.mxu0 0
  %782 = vmatprep.subr.bf16.mxu0 0
  %783 = vmatpush1.bf16.msra.mxu0 0
  %784 = vmatprep.subr.bf16.mxu0 0
  %785 = vmatpush1.bf16.msra.mxu0 0
  %786 = vmatprep.mubr.bf16.mxu0 0
  %787 = vmatmul.mubr.bf16.gmra.mrb[0].mxu0 %v689
  %v788 = vpop.f32.mrb[0].mxu0
  %v789 = vadd.f32 0.0, %v788
  %v790 = vpop.f32.mrb[0].mxu0
  %v791 = vpop.f32.mrb[0].mxu0
  %v792 = vpop.f32.mrb[0].mxu0
  %793 = vdwg.mxu0
  %794 = vst [vmem:[#allocation2 + $0x8] sm:$0xff] %v789
  %795 = vst [vmem:[%s8] sm:$0xff] %v661
  %796 = vst [vmem:[%s9] sm:$0xff] %v550
  %v797 = vld [vmem:[#allocation2] sm:$0xff]
  %v798 = vld [vmem:[#allocation2 + $0x8] sm:$0xff]
  %v799 = vpack.c.bf16 %v797, %v797
  %v800 = vpack.c.bf16 %v798, %v798
  %v801 = vld [vmem:[%s3] sm:$0xff]
  %v802 = vld [vmem:[%s3 + $0x8] sm:$0xff]
  %v803 = vld [vmem:[%s3 + $0x10] sm:$0xff]
  %v804 = vld [vmem:[%s3 + $0x18] sm:$0xff]
  %v805 = vld [vmem:[%s3 + $0x20] sm:$0xff]
  %v806 = vld [vmem:[%s3 + $0x28] sm:$0xff]
  %v807 = vld [vmem:[%s3 + $0x30] sm:$0xff]
  %v808 = vld [vmem:[%s3 + $0x38] sm:$0xff]
  %v809 = vld [vmem:[%s3 + $0x40] sm:$0xff]
  %v810 = vld [vmem:[%s3 + $0x48] sm:$0xff]
  %v811 = vld [vmem:[%s3 + $0x50] sm:$0xff]
  %v812 = vld [vmem:[%s3 + $0x58] sm:$0xff]
  %v813 = vld [vmem:[%s3 + $0x60] sm:$0xff]
  %v814 = vld [vmem:[%s3 + $0x68] sm:$0xff]
  %v815 = vld [vmem:[%s3 + $0x70] sm:$0xff]
  %v816 = vld [vmem:[%s3 + $0x78] sm:$0xff]
  %v817 = vld [vmem:[%s3 + $0x80] sm:$0xff]
  %v818 = vld [vmem:[%s3 + $0x88] sm:$0xff]
  %v819 = vld [vmem:[%s3 + $0x90] sm:$0xff]
  %v820 = vld [vmem:[%s3 + $0x98] sm:$0xff]
  %v821 = vld [vmem:[%s3 + $0xa0] sm:$0xff]
  %v822 = vld [vmem:[%s3 + $0xa8] sm:$0xff]
  %v823 = vld [vmem:[%s3 + $0xb0] sm:$0xff]
  %v824 = vld [vmem:[%s3 + $0xb8] sm:$0xff]
  %v825 = vld [vmem:[%s3 + $0xc0] sm:$0xff]
  %v826 = vld [vmem:[%s3 + $0xc8] sm:$0xff]
  %v827 = vld [vmem:[%s3 + $0xd0] sm:$0xff]
  %v828 = vld [vmem:[%s3 + $0xd8] sm:$0xff]
  %v829 = vld [vmem:[%s3 + $0xe0] sm:$0xff]
  %v830 = vld [vmem:[%s3 + $0xe8] sm:$0xff]
  %v831 = vld [vmem:[%s3 + $0xf0] sm:$0xff]
  %v832 = vld [vmem:[%s3 + $0xf8] sm:$0xff]
  %v833 = vld [vmem:[%s3 + $0x100] sm:$0xff]
  %v834 = vld [vmem:[%s3 + $0x108] sm:$0xff]
  %v835 = vld [vmem:[%s3 + $0x110] sm:$0xff]
  %v836 = vld [vmem:[%s3 + $0x118] sm:$0xff]
  %v837 = vld [vmem:[%s3 + $0x120] sm:$0xff]
  %v838 = vld [vmem:[%s3 + $0x128] sm:$0xff]
  %v839 = vld [vmem:[%s3 + $0x130] sm:$0xff]
  %v840 = vld [vmem:[%s3 + $0x138] sm:$0xff]
  %v841 = vld [vmem:[%s3 + $0x140] sm:$0xff]
  %v842 = vld [vmem:[%s3 + $0x148] sm:$0xff]
  %v843 = vld [vmem:[%s3 + $0x150] sm:$0xff]
  %v844 = vld [vmem:[%s3 + $0x158] sm:$0xff]
  %v845 = vld [vmem:[%s3 + $0x160] sm:$0xff]
  %v846 = vld [vmem:[%s3 + $0x168] sm:$0xff]
  %v847 = vld [vmem:[%s3 + $0x170] sm:$0xff]
  %v848 = vld [vmem:[%s3 + $0x178] sm:$0xff]
  %v849 = vld [vmem:[%s3 + $0x180] sm:$0xff]
  %v850 = vld [vmem:[%s3 + $0x188] sm:$0xff]
  %v851 = vld [vmem:[%s3 + $0x190] sm:$0xff]
  %v852 = vld [vmem:[%s3 + $0x198] sm:$0xff]
  %v853 = vld [vmem:[%s3 + $0x1a0] sm:$0xff]
  %v854 = vld [vmem:[%s3 + $0x1a8] sm:$0xff]
  %v855 = vld [vmem:[%s3 + $0x1b0] sm:$0xff]
  %v856 = vld [vmem:[%s3 + $0x1b8] sm:$0xff]
  %v857 = vld [vmem:[%s3 + $0x1c0] sm:$0xff]
  %v858 = vld [vmem:[%s3 + $0x1c8] sm:$0xff]
  %v859 = vld [vmem:[%s3 + $0x1d0] sm:$0xff]
  %v860 = vld [vmem:[%s3 + $0x1d8] sm:$0xff]
  %v861 = vld [vmem:[%s3 + $0x1e0] sm:$0xff]
  %v862 = vld [vmem:[%s3 + $0x1e8] sm:$0xff]
  %v863 = vld [vmem:[%s3 + $0x1f0] sm:$0xff]
  %v864 = vld [vmem:[%s3 + $0x1f8] sm:$0xff]
  %v865 = vld [vmem:[%s4] sm:$0xf]
  %v867 = vlaneseq
  %v868 = vshrl.u32 %v867, 7
  %v869 = vsub.s32 0, %v868
  %v870 = vrot.slane %v865, %v869
  %v871 = vlaneseq
  %v872 = vshrl.u32 %v871, 7
  %v873 = vsub.s32 1, %v872
  %v874 = vrot.slane %v865, %v873
  %v875 = vlaneseq
  %v876 = vshrl.u32 %v875, 7
  %v877 = vsub.s32 2, %v876
  %v878 = vrot.slane %v865, %v877
  %v879 = vlaneseq
  %v880 = vshrl.u32 %v879, 7
  %v881 = vsub.s32 3, %v880
  %v882 = vrot.slane %v865, %v881
  %v951 = vunpack.c.l.b16 %v801
  %v952 = vunpack.c.h.b16 %v801
  %v953 = vunpack.c.l.b16 %v802
  %v954 = vunpack.c.h.b16 %v802
  %v955 = vunpack.c.l.b16 %v803
  %v956 = vunpack.c.h.b16 %v803
  %v957 = vunpack.c.l.b16 %v804
  %v958 = vunpack.c.h.b16 %v804
  %v959 = vunpack.c.l.b16 %v805
  %v960 = vunpack.c.h.b16 %v805
  %v961 = vunpack.c.l.b16 %v806
  %v962 = vunpack.c.h.b16 %v806
  %v963 = vunpack.c.l.b16 %v807
  %v964 = vunpack.c.h.b16 %v807
  %v965 = vunpack.c.l.b16 %v808
  %v966 = vunpack.c.h.b16 %v808
  %v967 = vunpack.c.l.b16 %v809
  %v968 = vunpack.c.h.b16 %v809
  %v969 = vunpack.c.l.b16 %v810
  %v970 = vunpack.c.h.b16 %v810
  %v971 = vunpack.c.l.b16 %v811
  %v972 = vunpack.c.h.b16 %v811
  %v973 = vunpack.c.l.b16 %v812
  %v974 = vunpack.c.h.b16 %v812
  %v975 = vunpack.c.l.b16 %v813
  %v976 = vunpack.c.h.b16 %v813
  %v977 = vunpack.c.l.b16 %v814
  %v978 = vunpack.c.h.b16 %v814
  %v979 = vunpack.c.l.b16 %v815
  %v980 = vunpack.c.h.b16 %v815
  %v981 = vunpack.c.l.b16 %v816
  %v982 = vunpack.c.h.b16 %v816
  %v983 = vunpack.c.l.b16 %v817
  %v984 = vunpack.c.h.b16 %v817
  %v985 = vunpack.c.l.b16 %v818
  %v986 = vunpack.c.h.b16 %v818
  %v987 = vunpack.c.l.b16 %v819
  %v988 = vunpack.c.h.b16 %v819
  %v989 = vunpack.c.l.b16 %v820
  %v990 = vunpack.c.h.b16 %v820
  %v991 = vunpack.c.l.b16 %v821
  %v992 = vunpack.c.h.b16 %v821
  %v993 = vunpack.c.l.b16 %v822
  %v994 = vunpack.c.h.b16 %v822
  %v995 = vunpack.c.l.b16 %v823
  %v996 = vunpack.c.h.b16 %v823
  %v997 = vunpack.c.l.b16 %v824
  %v998 = vunpack.c.h.b16 %v824
  %v999 = vunpack.c.l.b16 %v825
  %v1000 = vunpack.c.h.b16 %v825
  %v1001 = vunpack.c.l.b16 %v826
  %v1002 = vunpack.c.h.b16 %v826
  %v1003 = vunpack.c.l.b16 %v827
  %v1004 = vunpack.c.h.b16 %v827
  %v1005 = vunpack.c.l.b16 %v828
  %v1006 = vunpack.c.h.b16 %v828
  %v1007 = vunpack.c.l.b16 %v829
  %v1008 = vunpack.c.h.b16 %v829
  %v1009 = vunpack.c.l.b16 %v830
  %v1010 = vunpack.c.h.b16 %v830
  %v1011 = vunpack.c.l.b16 %v831
  %v1012 = vunpack.c.h.b16 %v831
  %v1013 = vunpack.c.l.b16 %v832
  %v1014 = vunpack.c.h.b16 %v832
  %v1015 = vunpack.c.l.b16 %v833
  %v1016 = vunpack.c.h.b16 %v833
  %v1017 = vunpack.c.l.b16 %v834
  %v1018 = vunpack.c.h.b16 %v834
  %v1019 = vunpack.c.l.b16 %v835
  %v1020 = vunpack.c.h.b16 %v835
  %v1021 = vunpack.c.l.b16 %v836
  %v1022 = vunpack.c.h.b16 %v836
  %v1023 = vunpack.c.l.b16 %v837
  %v1024 = vunpack.c.h.b16 %v837
  %v1025 = vunpack.c.l.b16 %v838
  %v1026 = vunpack.c.h.b16 %v838
  %v1027 = vunpack.c.l.b16 %v839
  %v1028 = vunpack.c.h.b16 %v839
  %v1029 = vunpack.c.l.b16 %v840
  %v1030 = vunpack.c.h.b16 %v840
  %v1031 = vunpack.c.l.b16 %v841
  %v1032 = vunpack.c.h.b16 %v841
  %v1033 = vunpack.c.l.b16 %v842
  %v1034 = vunpack.c.h.b16 %v842
  %v1035 = vunpack.c.l.b16 %v843
  %v1036 = vunpack.c.h.b16 %v843
  %v1037 = vunpack.c.l.b16 %v844
  %v1038 = vunpack.c.h.b16 %v844
  %v1039 = vunpack.c.l.b16 %v845
  %v1040 = vunpack.c.h.b16 %v845
  %v1041 = vunpack.c.l.b16 %v846
  %v1042 = vunpack.c.h.b16 %v846
  %v1043 = vunpack.c.l.b16 %v847
  %v1044 = vunpack.c.h.b16 %v847
  %v1045 = vunpack.c.l.b16 %v848
  %v1046 = vunpack.c.h.b16 %v848
  %v1047 = vunpack.c.l.b16 %v849
  %v1048 = vunpack.c.h.b16 %v849
  %v1049 = vunpack.c.l.b16 %v850
  %v1050 = vunpack.c.h.b16 %v850
  %v1051 = vunpack.c.l.b16 %v851
  %v1052 = vunpack.c.h.b16 %v851
  %v1053 = vunpack.c.l.b16 %v852
  %v1054 = vunpack.c.h.b16 %v852
  %v1055 = vunpack.c.l.b16 %v853
  %v1056 = vunpack.c.h.b16 %v853
  %v1057 = vunpack.c.l.b16 %v854
  %v1058 = vunpack.c.h.b16 %v854
  %v1059 = vunpack.c.l.b16 %v855
  %v1060 = vunpack.c.h.b16 %v855
  %v1061 = vunpack.c.l.b16 %v856
  %v1062 = vunpack.c.h.b16 %v856
  %v1063 = vunpack.c.l.b16 %v857
  %v1064 = vunpack.c.h.b16 %v857
  %v1065 = vunpack.c.l.b16 %v858
  %v1066 = vunpack.c.h.b16 %v858
  %v1067 = vunpack.c.l.b16 %v859
  %v1068 = vunpack.c.h.b16 %v859
  %v1069 = vunpack.c.l.b16 %v860
  %v1070 = vunpack.c.h.b16 %v860
  %v1071 = vunpack.c.l.b16 %v861
  %v1072 = vunpack.c.h.b16 %v861
  %v1073 = vunpack.c.l.b16 %v862
  %v1074 = vunpack.c.h.b16 %v862
  %v1075 = vunpack.c.l.b16 %v863
  %v1076 = vunpack.c.h.b16 %v863
  %v1077 = vunpack.c.l.b16 %v864
  %v1078 = vunpack.c.h.b16 %v864
  %v1079 = vpack.c.b16 %v955, %v951
  %v1080 = vpack.c.b16 %v956, %v952
  %v1081 = vpack.c.b16 %v957, %v953
  %v1082 = vpack.c.b16 %v958, %v954
  %v1083 = vpack.c.b16 %v963, %v959
  %v1084 = vpack.c.b16 %v964, %v960
  %v1085 = vpack.c.b16 %v965, %v961
  %v1086 = vpack.c.b16 %v966, %v962
  %v1087 = vpack.c.b16 %v971, %v967
  %v1088 = vpack.c.b16 %v972, %v968
  %v1089 = vpack.c.b16 %v973, %v969
  %v1090 = vpack.c.b16 %v974, %v970
  %v1091 = vpack.c.b16 %v979, %v975
  %v1092 = vpack.c.b16 %v980, %v976
  %v1093 = vpack.c.b16 %v981, %v977
  %v1094 = vpack.c.b16 %v982, %v978
  %v1095 = vpack.c.b16 %v987, %v983
  %v1096 = vpack.c.b16 %v988, %v984
  %v1097 = vpack.c.b16 %v989, %v985
  %v1098 = vpack.c.b16 %v990, %v986
  %v1099 = vpack.c.b16 %v995, %v991
  %v1100 = vpack.c.b16 %v996, %v992
  %v1101 = vpack.c.b16 %v997, %v993
  %v1102 = vpack.c.b16 %v998, %v994
  %v1103 = vpack.c.b16 %v1003, %v999
  %v1104 = vpack.c.b16 %v1004, %v1000
  %v1105 = vpack.c.b16 %v1005, %v1001
  %v1106 = vpack.c.b16 %v1006, %v1002
  %v1107 = vpack.c.b16 %v1011, %v1007
  %v1108 = vpack.c.b16 %v1012, %v1008
  %v1109 = vpack.c.b16 %v1013, %v1009
  %v1110 = vpack.c.b16 %v1014, %v1010
  %v1111 = vpack.c.b16 %v1019, %v1015
  %v1112 = vpack.c.b16 %v1020, %v1016
  %v1113 = vpack.c.b16 %v1021, %v1017
  %v1114 = vpack.c.b16 %v1022, %v1018
  %v1115 = vpack.c.b16 %v1027, %v1023
  %v1116 = vpack.c.b16 %v1028, %v1024
  %v1117 = vpack.c.b16 %v1029, %v1025
  %v1118 = vpack.c.b16 %v1030, %v1026
  %v1119 = vpack.c.b16 %v1035, %v1031
  %v1120 = vpack.c.b16 %v1036, %v1032
  %v1121 = vpack.c.b16 %v1037, %v1033
  %v1122 = vpack.c.b16 %v1038, %v1034
  %v1123 = vpack.c.b16 %v1043, %v1039
  %v1124 = vpack.c.b16 %v1044, %v1040
  %v1125 = vpack.c.b16 %v1045, %v1041
  %v1126 = vpack.c.b16 %v1046, %v1042
  %v1127 = vpack.c.b16 %v1051, %v1047
  %v1128 = vpack.c.b16 %v1052, %v1048
  %v1129 = vpack.c.b16 %v1053, %v1049
  %v1130 = vpack.c.b16 %v1054, %v1050
  %v1131 = vpack.c.b16 %v1059, %v1055
  %v1132 = vpack.c.b16 %v1060, %v1056
  %v1133 = vpack.c.b16 %v1061, %v1057
  %v1134 = vpack.c.b16 %v1062, %v1058
  %v1135 = vpack.c.b16 %v1067, %v1063
  %v1136 = vpack.c.b16 %v1068, %v1064
  %v1137 = vpack.c.b16 %v1069, %v1065
  %v1138 = vpack.c.b16 %v1070, %v1066
  %v1139 = vpack.c.b16 %v1075, %v1071
  %v1140 = vpack.c.b16 %v1076, %v1072
  %v1141 = vpack.c.b16 %v1077, %v1073
  %v1142 = vpack.c.b16 %v1078, %v1074
  %1207 = vmatprep.subr.bf16.mxu0 %v1080
  %1208 = vmatpush1.bf16.msra.mxu0 %v1079
  %1209 = vmatprep.subr.bf16.mxu0 %v1084
  %1210 = vmatpush1.bf16.msra.mxu0 %v1083
  %1211 = vmatprep.subr.bf16.mxu0 %v1088
  %1212 = vmatpush1.bf16.msra.mxu0 %v1087
  %1213 = vmatprep.subr.bf16.mxu0 %v1092
  %1214 = vmatpush1.bf16.msra.mxu0 %v1091
  %1215 = vmatprep.subr.bf16.mxu0 %v1096
  %1216 = vmatpush1.bf16.msra.mxu0 %v1095
  %1217 = vmatprep.subr.bf16.mxu0 %v1100
  %1218 = vmatpush1.bf16.msra.mxu0 %v1099
  %1219 = vmatprep.subr.bf16.mxu0 %v1104
  %1220 = vmatpush1.bf16.msra.mxu0 %v1103
  %1221 = vmatprep.subr.bf16.mxu0 %v1108
  %1222 = vmatpush1.bf16.msra.mxu0 %v1107
  %1223 = vmatprep.subr.bf16.mxu0 %v1112
  %1224 = vmatpush1.bf16.msra.mxu0 %v1111
  %1225 = vmatprep.subr.bf16.mxu0 %v1116
  %1226 = vmatpush1.bf16.msra.mxu0 %v1115
  %1227 = vmatprep.subr.bf16.mxu0 %v1120
  %1228 = vmatpush1.bf16.msra.mxu0 %v1119
  %1229 = vmatprep.subr.bf16.mxu0 %v1124
  %1230 = vmatpush1.bf16.msra.mxu0 %v1123
  %1231 = vmatprep.subr.bf16.mxu0 %v1128
  %1232 = vmatpush1.bf16.msra.mxu0 %v1127
  %1233 = vmatprep.subr.bf16.mxu0 %v1132
  %1234 = vmatpush1.bf16.msra.mxu0 %v1131
  %1235 = vmatprep.subr.bf16.mxu0 %v1136
  %1236 = vmatpush1.bf16.msra.mxu0 %v1135
  %1237 = vmatprep.subr.bf16.mxu0 %v1140
  %1238 = vmatpush1.bf16.msra.mxu0 %v1139
  %1239 = vmatprep.mubr.bf16.mxu0 %v800
  %1240 = vmatmul.mubr.bf16.gmra.mrb[0].mxu0 %v799
  %v1241 = vpop.f32.mrb[0].mxu0
  %v1242 = vadd.f32 %v870, %v1241
  %v1243 = vpop.f32.mrb[0].mxu0
  %v1244 = vadd.f32 %v874, %v1243
  %v1245 = vpop.f32.mrb[0].mxu0
  %v1246 = vpop.f32.mrb[0].mxu0
  %1247 = vdwg.mxu0
  %1248 = vmatprep.subr.bf16.mxu0 %v1082
  %1249 = vmatpush1.bf16.msra.mxu0 %v1081
  %1250 = vmatprep.subr.bf16.mxu0 %v1086
  %1251 = vmatpush1.bf16.msra.mxu0 %v1085
  %1252 = vmatprep.subr.bf16.mxu0 %v1090
  %1253 = vmatpush1.bf16.msra.mxu0 %v1089
  %1254 = vmatprep.subr.bf16.mxu0 %v1094
  %1255 = vmatpush1.bf16.msra.mxu0 %v1093
  %1256 = vmatprep.subr.bf16.mxu0 %v1098
  %1257 = vmatpush1.bf16.msra.mxu0 %v1097
  %1258 = vmatprep.subr.bf16.mxu0 %v1102
  %1259 = vmatpush1.bf16.msra.mxu0 %v1101
  %1260 = vmatprep.subr.bf16.mxu0 %v1106
  %1261 = vmatpush1.bf16.msra.mxu0 %v1105
  %1262 = vmatprep.subr.bf16.mxu0 %v1110
  %1263 = vmatpush1.bf16.msra.mxu0 %v1109
  %1264 = vmatprep.subr.bf16.mxu0 %v1114
  %1265 = vmatpush1.bf16.msra.mxu0 %v1113
  %1266 = vmatprep.subr.bf16.mxu0 %v1118
  %1267 = vmatpush1.bf16.msra.mxu0 %v1117
  %1268 = vmatprep.subr.bf16.mxu0 %v1122
  %1269 = vmatpush1.bf16.msra.mxu0 %v1121
  %1270 = vmatprep.subr.bf16.mxu0 %v1126
  %1271 = vmatpush1.bf16.msra.mxu0 %v1125
  %1272 = vmatprep.subr.bf16.mxu0 %v1130
  %1273 = vmatpush1.bf16.msra.mxu0 %v1129
  %1274 = vmatprep.subr.bf16.mxu0 %v1134
  %1275 = vmatpush1.bf16.msra.mxu0 %v1133
  %1276 = vmatprep.subr.bf16.mxu0 %v1138
  %1277 = vmatpush1.bf16.msra.mxu0 %v1137
  %1278 = vmatprep.subr.bf16.mxu0 %v1142
  %1279 = vmatpush1.bf16.msra.mxu0 %v1141
  %1280 = vmatprep.mubr.bf16.mxu0 %v800
  %1281 = vmatmul.mubr.bf16.gmra.mrb[0].mxu0 %v799
  %v1282 = vpop.f32.mrb[0].mxu0
  %v1283 = vadd.f32 %v878, %v1282
  %v1284 = vpop.f32.mrb[0].mxu0
  %v1285 = vadd.f32 %v882, %v1284
  %v1286 = vpop.f32.mrb[0].mxu0
  %v1287 = vpop.f32.mrb[0].mxu0
  %1288 = vdwg.mxu0
  %v1289 = vxor.u32 %v1242, 2147483648
  %v1290 = vmul.f32 %v1289, 1.442695
  %v1291 = vpow.pop %v1290
  %v1292 = vadd.f32 %v1291, 1.0
  %v1293 = vrcp.pop %v1292
  %v1294 = vmul.f32 1.0, %v1293
  %v1295 = vxor.u32 %v1244, 2147483648
  %v1296 = vmul.f32 %v1295, 1.442695
  %v1297 = vpow.pop %v1296
  %v1298 = vadd.f32 %v1297, 1.0
  %v1299 = vrcp.pop %v1298
  %v1300 = vmul.f32 1.0, %v1299
  %v1301 = vxor.u32 %v1283, 2147483648
  %v1302 = vmul.f32 %v1301, 1.442695
  %v1303 = vpow.pop %v1302
  %v1304 = vadd.f32 %v1303, 1.0
  %v1305 = vrcp.pop %v1304
  %v1306 = vmul.f32 1.0, %v1305
  %v1307 = vtanh.pop %v1285
  %v1308 = vmul.f32 %v1294, %v1307
  %v1309 = vmul.f32 %v1300, %v550
  %v1310 = vadd.f32 %v1308, %v1309
  %v1311 = vtanh.pop %v1310
  %v1312 = vmul.f32 %v1306, %v1311
  %1313 = vst [vmem:[#allocation2] sm:$0xff] %v1312
  %v1314 = vpack.c.bf16 %v1312, %v1312
  %v1315 = vld [vmem:[%s5] sm:$0xf]
  %v1316 = vld [vmem:[%s5 + $0x4] sm:$0xf]
  %v1317 = vld [vmem:[%s5 + $0x8] sm:$0xf]
  %v1318 = vld [vmem:[%s5 + $0xc] sm:$0xf]
  %v1319 = vld [vmem:[%s5 + $0x10] sm:$0xf]
  %v1320 = vld [vmem:[%s5 + $0x14] sm:$0xf]
  %v1321 = vld [vmem:[%s5 + $0x18] sm:$0xf]
  %v1322 = vld [vmem:[%s5 + $0x1c] sm:$0xf]
  %v1323 = vld [vmem:[%s5 + $0x20] sm:$0xf]
  %v1324 = vld [vmem:[%s5 + $0x24] sm:$0xf]
  %v1325 = vld [vmem:[%s5 + $0x28] sm:$0xf]
  %v1326 = vld [vmem:[%s5 + $0x2c] sm:$0xf]
  %v1327 = vld [vmem:[%s5 + $0x30] sm:$0xf]
  %v1328 = vld [vmem:[%s5 + $0x34] sm:$0xf]
  %v1329 = vld [vmem:[%s5 + $0x38] sm:$0xf]
  %v1330 = vld [vmem:[%s5 + $0x3c] sm:$0xf]
  %v1331 = vld [vmem:[%s6] sm:$0x1]
  %v1333 = vlaneseq
  %v1334 = vshrl.u32 %v1333, 7
  %v1335 = vsub.s32 0, %v1334
  %v1336 = vrot.slane %v1331, %v1335
  %v1354 = vunpack.c.l.b16 %v1315
  %v1355 = vunpack.c.l.b16 %v1316
  %v1356 = vunpack.c.l.b16 %v1317
  %v1357 = vunpack.c.l.b16 %v1318
  %v1358 = vunpack.c.l.b16 %v1319
  %v1359 = vunpack.c.l.b16 %v1320
  %v1360 = vunpack.c.l.b16 %v1321
  %v1361 = vunpack.c.l.b16 %v1322
  %v1362 = vunpack.c.l.b16 %v1323
  %v1363 = vunpack.c.l.b16 %v1324
  %v1364 = vunpack.c.l.b16 %v1325
  %v1365 = vunpack.c.l.b16 %v1326
  %v1366 = vunpack.c.l.b16 %v1327
  %v1367 = vunpack.c.l.b16 %v1328
  %v1368 = vunpack.c.l.b16 %v1329
  %v1369 = vunpack.c.l.b16 %v1330
  %v1370 = vpack.c.b16 %v1355, %v1354
  %v1371 = vpack.c.b16 %v1357, %v1356
  %v1372 = vpack.c.b16 %v1359, %v1358
  %v1373 = vpack.c.b16 %v1361, %v1360
  %v1374 = vpack.c.b16 %v1363, %v1362
  %v1375 = vpack.c.b16 %v1365, %v1364
  %v1376 = vpack.c.b16 %v1367, %v1366
  %v1377 = vpack.c.b16 %v1369, %v1368
  %1386 = vmatprep.subr.bf16.mxu0 0
  %1387 = vmatpush1.bf16.msra.mxu0 %v1370
  %1388 = vmatprep.subr.bf16.mxu0 0
  %1389 = vmatpush1.bf16.msra.mxu0 %v1371
  %1390 = vmatprep.subr.bf16.mxu0 0
  %1391 = vmatpush1.bf16.msra.mxu0 %v1372
  %1392 = vmatprep.subr.bf16.mxu0 0
  %1393 = vmatpush1.bf16.msra.mxu0 %v1373
  %1394 = vmatprep.subr.bf16.mxu0 0
  %1395 = vmatpush1.bf16.msra.mxu0 %v1374
  %1396 = vmatprep.subr.bf16.mxu0 0
  %1397 = vmatpush1.bf16.msra.mxu0 %v1375
  %1398 = vmatprep.subr.bf16.mxu0 0
  %1399 = vmatpush1.bf16.msra.mxu0 %v1376
  %1400 = vmatprep.subr.bf16.mxu0 0
  %1401 = vmatpush1.bf16.msra.mxu0 %v1377
  %1402 = vmatprep.subr.bf16.mxu0 0
  %1403 = vmatpush1.bf16.msra.mxu0 0
  %1404 = vmatprep.subr.bf16.mxu0 0
  %1405 = vmatpush1.bf16.msra.mxu0 0
  %1406 = vmatprep.subr.bf16.mxu0 0
  %1407 = vmatpush1.bf16.msra.mxu0 0
  %1408 = vmatprep.subr.bf16.mxu0 0
  %1409 = vmatpush1.bf16.msra.mxu0 0
  %1410 = vmatprep.subr.bf16.mxu0 0
  %1411 = vmatpush1.bf16.msra.mxu0 0
  %1412 = vmatprep.subr.bf16.mxu0 0
  %1413 = vmatpush1.bf16.msra.mxu0 0
  %1414 = vmatprep.subr.bf16.mxu0 0
  %1415 = vmatpush1.bf16.msra.mxu0 0
  %1416 = vmatprep.subr.bf16.mxu0 0
  %1417 = vmatpush1.bf16.msra.mxu0 0
  %1418 = vmatprep.mubr.bf16.mxu0 0
  %1419 = vmatmul.mubr.bf16.gmra.mrb[0].mxu0 %v1314
  %v1420 = vpop.f32.mrb[0].mxu0
  %v1421 = vadd.f32 %v1336, %v1420
  %v1422 = vpop.f32.mrb[0].mxu0
  %v1423 = vpop.f32.mrb[0].mxu0
  %v1424 = vpop.f32.mrb[0].mxu0
  %1425 = vdwg.mxu0
  %1426 = vmax.xlane.f32.xlu0 %v1421
  %v1427 = vpop.xlane.xlu0 %1426
  %vm1428 = vcmp.eq.f32.partialorder %v1421, %v1427
  %v1429 = vsel %vm1428, %v667, 128
  %v1430 = vand.u32 %v1429, 65535
  %v1431 = vshra.s32 %v1429, 16
  %v1432 = vcvt.s32.f32 %v1430
  %v1433 = vcvt.s32.f32 %v1431
  %1434 = vmin.xlane.f32.xlu0 %v1433
  %v1435 = vpop.xlane.xlu0 %1434
  %vm1436 = vcmp.eq.f32.partialorder %v1433, %v1435
  %v1437 = vsel %vm1436, %v1432, inf
  %1438 = vmin.xlane.f32.xlu0 %v1437
  %v1439 = vpop.xlane.xlu0 %1438
  %v1440 = vcvt.f32.s32 %v1439
  %v1441 = vcvt.f32.s32 %v1435
  %v1442 = vshll.u32 %v1441, 16
  %v1443 = vadd.s32 %v1442, %v1440
  %vm1444 = vcmp.eq.s32.totalorder %v667, %v1443
  %v1445 = vsel %vm1444, 1, 0
  %v1446 = vcvt.s32.f32 %v1445
  %v1447 = vpack.c.bf16 %v1446, %v1446
  %v1448 = vld [vmem:[%s7] sm:$0xf]
  %v1449 = vld [vmem:[%s7 + $0x4] sm:$0xf]
  %v1450 = vld [vmem:[%s7 + $0x8] sm:$0xf]
  %v1451 = vld [vmem:[%s7 + $0xc] sm:$0xf]
  %v1452 = vld [vmem:[%s7 + $0x10] sm:$0xf]
  %v1453 = vld [vmem:[%s7 + $0x14] sm:$0xf]
  %v1454 = vld [vmem:[%s7 + $0x18] sm:$0xf]
  %v1455 = vld [vmem:[%s7 + $0x1c] sm:$0xf]
  %v1456 = vld [vmem:[%s7 + $0x20] sm:$0xf]
  %v1457 = vld [vmem:[%s7 + $0x24] sm:$0xf]
  %v1458 = vld [vmem:[%s7 + $0x28] sm:$0xf]
  %v1459 = vld [vmem:[%s7 + $0x2c] sm:$0xf]
  %v1460 = vld [vmem:[%s7 + $0x30] sm:$0xf]
  %v1461 = vld [vmem:[%s7 + $0x34] sm:$0xf]
  %v1462 = vld [vmem:[%s7 + $0x38] sm:$0xf]
  %v1463 = vld [vmem:[%s7 + $0x3c] sm:$0xf]
  %v1480 = vunpack.c.l.b16 %v1448
  %v1481 = vunpack.c.l.b16 %v1449
  %v1482 = vunpack.c.l.b16 %v1450
  %v1483 = vunpack.c.l.b16 %v1451
  %v1484 = vunpack.c.l.b16 %v1452
  %v1485 = vunpack.c.l.b16 %v1453
  %v1486 = vunpack.c.l.b16 %v1454
  %v1487 = vunpack.c.l.b16 %v1455
  %v1488 = vunpack.c.l.b16 %v1456
  %v1489 = vunpack.c.l.b16 %v1457
  %v1490 = vunpack.c.l.b16 %v1458
  %v1491 = vunpack.c.l.b16 %v1459
  %v1492 = vunpack.c.l.b16 %v1460
  %v1493 = vunpack.c.l.b16 %v1461
  %v1494 = vunpack.c.l.b16 %v1462
  %v1495 = vunpack.c.l.b16 %v1463
  %v1496 = vpack.c.b16 %v1481, %v1480
  %v1497 = vpack.c.b16 %v1483, %v1482
  %v1498 = vpack.c.b16 %v1485, %v1484
  %v1499 = vpack.c.b16 %v1487, %v1486
  %v1500 = vpack.c.b16 %v1489, %v1488
  %v1501 = vpack.c.b16 %v1491, %v1490
  %v1502 = vpack.c.b16 %v1493, %v1492
  %v1503 = vpack.c.b16 %v1495, %v1494
  %1512 = vmatprep.subr.bf16.mxu0 0
  %1513 = vmatpush1.bf16.msra.mxu0 %v1496
  %1514 = vmatprep.subr.bf16.mxu0 0
  %1515 = vmatpush1.bf16.msra.mxu0 %v1497
  %1516 = vmatprep.subr.bf16.mxu0 0
  %1517 = vmatpush1.bf16.msra.mxu0 %v1498
  %1518 = vmatprep.subr.bf16.mxu0 0
  %1519 = vmatpush1.bf16.msra.mxu0 %v1499
  %1520 = vmatprep.subr.bf16.mxu0 0
  %1521 = vmatpush1.bf16.msra.mxu0 %v1500
  %1522 = vmatprep.subr.bf16.mxu0 0
  %1523 = vmatpush1.bf16.msra.mxu0 %v1501
  %1524 = vmatprep.subr.bf16.mxu0 0
  %1525 = vmatpush1.bf16.msra.mxu0 %v1502
  %1526 = vmatprep.subr.bf16.mxu0 0
  %1527 = vmatpush1.bf16.msra.mxu0 %v1503
  %1528 = vmatprep.subr.bf16.mxu0 0
  %1529 = vmatpush1.bf16.msra.mxu0 0
  %1530 = vmatprep.subr.bf16.mxu0 0
  %1531 = vmatpush1.bf16.msra.mxu0 0
  %1532 = vmatprep.subr.bf16.mxu0 0
  %1533 = vmatpush1.bf16.msra.mxu0 0
  %1534 = vmatprep.subr.bf16.mxu0 0
  %1535 = vmatpush1.bf16.msra.mxu0 0
  %1536 = vmatprep.subr.bf16.mxu0 0
  %1537 = vmatpush1.bf16.msra.mxu0 0
  %1538 = vmatprep.subr.bf16.mxu0 0
  %1539 = vmatpush1.bf16.msra.mxu0 0
  %1540 = vmatprep.subr.bf16.mxu0 0
  %1541 = vmatpush1.bf16.msra.mxu0 0
  %1542 = vmatprep.subr.bf16.mxu0 0
  %1543 = vmatpush1.bf16.msra.mxu0 0
  %1544 = vmatprep.mubr.bf16.mxu0 0
  %1545 = vmatmul.mubr.bf16.gmra.mrb[0].mxu0 %v1447
  %v1546 = vpop.f32.mrb[0].mxu0
  %v1547 = vadd.f32 0.0, %v1546
  %v1548 = vpop.f32.mrb[0].mxu0
  %v1549 = vpop.f32.mrb[0].mxu0
  %v1550 = vpop.f32.mrb[0].mxu0
  %1551 = vdwg.mxu0
  %1552 = vst [vmem:[#allocation2 + $0x8] sm:$0xff] %v1547
  %s1553 = scalar_lea.vmem %s8, 8
  %1554 = vst [vmem:[%s1553] sm:$0xff] %v1421
  %s1555 = scalar_lea.vmem %s9, 8
  %1556 = vst [vmem:[%s1555] sm:$0xff] %v1310
  %v1557 = vld [vmem:[#allocation2] sm:$0xff]
  %v1558 = vld [vmem:[#allocation2 + $0x8] sm:$0xff]
  %v1559 = vpack.c.bf16 %v1557, %v1557
  %v1560 = vpack.c.bf16 %v1558, %v1558
  %v1561 = vld [vmem:[%s3] sm:$0xff]
  %v1562 = vld [vmem:[%s3 + $0x8] sm:$0xff]
  %v1563 = vld [vmem:[%s3 + $0x10] sm:$0xff]
  %v1564 = vld [vmem:[%s3 + $0x18] sm:$0xff]
  %v1565 = vld [vmem:[%s3 + $0x20] sm:$0xff]
  %v1566 = vld [vmem:[%s3 + $0x28] sm:$0xff]
  %v1567 = vld [vmem:[%s3 + $0x30] sm:$0xff]
  %v1568 = vld [vmem:[%s3 + $0x38] sm:$0xff]
  %v1569 = vld [vmem:[%s3 + $0x40] sm:$0xff]
  %v1570 = vld [vmem:[%s3 + $0x48] sm:$0xff]
  %v1571 = vld [vmem:[%s3 + $0x50] sm:$0xff]
  %v1572 = vld [vmem:[%s3 + $0x58] sm:$0xff]
  %v1573 = vld [vmem:[%s3 + $0x60] sm:$0xff]
  %v1574 = vld [vmem:[%s3 + $0x68] sm:$0xff]
  %v1575 = vld [vmem:[%s3 + $0x70] sm:$0xff]
  %v1576 = vld [vmem:[%s3 + $0x78] sm:$0xff]
  %v1577 = vld [vmem:[%s3 + $0x80] sm:$0xff]
  %v1578 = vld [vmem:[%s3 + $0x88] sm:$0xff]
  %v1579 = vld [vmem:[%s3 + $0x90] sm:$0xff]
  %v1580 = vld [vmem:[%s3 + $0x98] sm:$0xff]
  %v1581 = vld [vmem:[%s3 + $0xa0] sm:$0xff]
  %v1582 = vld [vmem:[%s3 + $0xa8] sm:$0xff]
  %v1583 = vld [vmem:[%s3 + $0xb0] sm:$0xff]
  %v1584 = vld [vmem:[%s3 + $0xb8] sm:$0xff]
  %v1585 = vld [vmem:[%s3 + $0xc0] sm:$0xff]
  %v1586 = vld [vmem:[%s3 + $0xc8] sm:$0xff]
  %v1587 = vld [vmem:[%s3 + $0xd0] sm:$0xff]
  %v1588 = vld [vmem:[%s3 + $0xd8] sm:$0xff]
  %v1589 = vld [vmem:[%s3 + $0xe0] sm:$0xff]
  %v1590 = vld [vmem:[%s3 + $0xe8] sm:$0xff]
  %v1591 = vld [vmem:[%s3 + $0xf0] sm:$0xff]
  %v1592 = vld [vmem:[%s3 + $0xf8] sm:$0xff]
  %v1593 = vld [vmem:[%s3 + $0x100] sm:$0xff]
  %v1594 = vld [vmem:[%s3 + $0x108] sm:$0xff]
  %v1595 = vld [vmem:[%s3 + $0x110] sm:$0xff]
  %v1596 = vld [vmem:[%s3 + $0x118] sm:$0xff]
  %v1597 = vld [vmem:[%s3 + $0x120] sm:$0xff]
  %v1598 = vld [vmem:[%s3 + $0x128] sm:$0xff]
  %v1599 = vld [vmem:[%s3 + $0x130] sm:$0xff]
  %v1600 = vld [vmem:[%s3 + $0x138] sm:$0xff]
  %v1601 = vld [vmem:[%s3 + $0x140] sm:$0xff]
  %v1602 = vld [vmem:[%s3 + $0x148] sm:$0xff]
  %v1603 = vld [vmem:[%s3 + $0x150] sm:$0xff]
  %v1604 = vld [vmem:[%s3 + $0x158] sm:$0xff]
  %v1605 = vld [vmem:[%s3 + $0x160] sm:$0xff]
  %v1606 = vld [vmem:[%s3 + $0x168] sm:$0xff]
  %v1607 = vld [vmem:[%s3 + $0x170] sm:$0xff]
  %v1608 = vld [vmem:[%s3 + $0x178] sm:$0xff]
  %v1609 = vld [vmem:[%s3 + $0x180] sm:$0xff]
  %v1610 = vld [vmem:[%s3 + $0x188] sm:$0xff]
  %v1611 = vld [vmem:[%s3 + $0x190] sm:$0xff]
  %v1612 = vld [vmem:[%s3 + $0x198] sm:$0xff]
  %v1613 = vld [vmem:[%s3 + $0x1a0] sm:$0xff]
  %v1614 = vld [vmem:[%s3 + $0x1a8] sm:$0xff]
  %v1615 = vld [vmem:[%s3 + $0x1b0] sm:$0xff]
  %v1616 = vld [vmem:[%s3 + $0x1b8] sm:$0xff]
  %v1617 = vld [vmem:[%s3 + $0x1c0] sm:$0xff]
  %v1618 = vld [vmem:[%s3 + $0x1c8] sm:$0xff]
  %v1619 = vld [vmem:[%s3 + $0x1d0] sm:$0xff]
  %v1620 = vld [vmem:[%s3 + $0x1d8] sm:$0xff]
  %v1621 = vld [vmem:[%s3 + $0x1e0] sm:$0xff]
  %v1622 = vld [vmem:[%s3 + $0x1e8] sm:$0xff]
  %v1623 = vld [vmem:[%s3 + $0x1f0] sm:$0xff]
  %v1624 = vld [vmem:[%s3 + $0x1f8] sm:$0xff]
  %v1625 = vld [vmem:[%s4] sm:$0xf]
  %v1627 = vlaneseq
  %v1628 = vshrl.u32 %v1627, 7
  %v1629 = vsub.s32 0, %v1628
  %v1630 = vrot.slane %v1625, %v1629
  %v1631 = vlaneseq
  %v1632 = vshrl.u32 %v1631, 7
  %v1633 = vsub.s32 1, %v1632
  %v1634 = vrot.slane %v1625, %v1633
  %v1635 = vlaneseq
  %v1636 = vshrl.u32 %v1635, 7
  %v1637 = vsub.s32 2, %v1636
  %v1638 = vrot.slane %v1625, %v1637
  %v1639 = vlaneseq
  %v1640 = vshrl.u32 %v1639, 7
  %v1641 = vsub.s32 3, %v1640
  %v1642 = vrot.slane %v1625, %v1641
  %v1711 = vunpack.c.l.b16 %v1561
  %v1712 = vunpack.c.h.b16 %v1561
  %v1713 = vunpack.c.l.b16 %v1562
  %v1714 = vunpack.c.h.b16 %v1562
  %v1715 = vunpack.c.l.b16 %v1563
  %v1716 = vunpack.c.h.b16 %v1563
  %v1717 = vunpack.c.l.b16 %v1564
  %v1718 = vunpack.c.h.b16 %v1564
  %v1719 = vunpack.c.l.b16 %v1565
  %v1720 = vunpack.c.h.b16 %v1565
  %v1721 = vunpack.c.l.b16 %v1566
  %v1722 = vunpack.c.h.b16 %v1566
  %v1723 = vunpack.c.l.b16 %v1567
  %v1724 = vunpack.c.h.b16 %v1567
  %v1725 = vunpack.c.l.b16 %v1568
  %v1726 = vunpack.c.h.b16 %v1568
  %v1727 = vunpack.c.l.b16 %v1569
  %v1728 = vunpack.c.h.b16 %v1569
  %v1729 = vunpack.c.l.b16 %v1570
  %v1730 = vunpack.c.h.b16 %v1570
  %v1731 = vunpack.c.l.b16 %v1571
  %v1732 = vunpack.c.h.b16 %v1571
  %v1733 = vunpack.c.l.b16 %v1572
  %v1734 = vunpack.c.h.b16 %v1572
  %v1735 = vunpack.c.l.b16 %v1573
  %v1736 = vunpack.c.h.b16 %v1573
  %v1737 = vunpack.c.l.b16 %v1574
  %v1738 = vunpack.c.h.b16 %v1574
  %v1739 = vunpack.c.l.b16 %v1575
  %v1740 = vunpack.c.h.b16 %v1575
  %v1741 = vunpack.c.l.b16 %v1576
  %v1742 = vunpack.c.h.b16 %v1576
  %v1743 = vunpack.c.l.b16 %v1577
  %v1744 = vunpack.c.h.b16 %v1577
  %v1745 = vunpack.c.l.b16 %v1578
  %v1746 = vunpack.c.h.b16 %v1578
  %v1747 = vunpack.c.l.b16 %v1579
  %v1748 = vunpack.c.h.b16 %v1579
  %v1749 = vunpack.c.l.b16 %v1580
  %v1750 = vunpack.c.h.b16 %v1580
  %v1751 = vunpack.c.l.b16 %v1581
  %v1752 = vunpack.c.h.b16 %v1581
  %v1753 = vunpack.c.l.b16 %v1582
  %v1754 = vunpack.c.h.b16 %v1582
  %v1755 = vunpack.c.l.b16 %v1583
  %v1756 = vunpack.c.h.b16 %v1583
  %v1757 = vunpack.c.l.b16 %v1584
  %v1758 = vunpack.c.h.b16 %v1584
  %v1759 = vunpack.c.l.b16 %v1585
  %v1760 = vunpack.c.h.b16 %v1585
  %v1761 = vunpack.c.l.b16 %v1586
  %v1762 = vunpack.c.h.b16 %v1586
  %v1763 = vunpack.c.l.b16 %v1587
  %v1764 = vunpack.c.h.b16 %v1587
  %v1765 = vunpack.c.l.b16 %v1588
  %v1766 = vunpack.c.h.b16 %v1588
  %v1767 = vunpack.c.l.b16 %v1589
  %v1768 = vunpack.c.h.b16 %v1589
  %v1769 = vunpack.c.l.b16 %v1590
  %v1770 = vunpack.c.h.b16 %v1590
  %v1771 = vunpack.c.l.b16 %v1591
  %v1772 = vunpack.c.h.b16 %v1591
  %v1773 = vunpack.c.l.b16 %v1592
  %v1774 = vunpack.c.h.b16 %v1592
  %v1775 = vunpack.c.l.b16 %v1593
  %v1776 = vunpack.c.h.b16 %v1593
  %v1777 = vunpack.c.l.b16 %v1594
  %v1778 = vunpack.c.h.b16 %v1594
  %v1779 = vunpack.c.l.b16 %v1595
  %v1780 = vunpack.c.h.b16 %v1595
  %v1781 = vunpack.c.l.b16 %v1596
  %v1782 = vunpack.c.h.b16 %v1596
  %v1783 = vunpack.c.l.b16 %v1597
  %v1784 = vunpack.c.h.b16 %v1597
  %v1785 = vunpack.c.l.b16 %v1598
  %v1786 = vunpack.c.h.b16 %v1598
  %v1787 = vunpack.c.l.b16 %v1599
  %v1788 = vunpack.c.h.b16 %v1599
  %v1789 = vunpack.c.l.b16 %v1600
  %v1790 = vunpack.c.h.b16 %v1600
  %v1791 = vunpack.c.l.b16 %v1601
  %v1792 = vunpack.c.h.b16 %v1601
  %v1793 = vunpack.c.l.b16 %v1602
  %v1794 = vunpack.c.h.b16 %v1602
  %v1795 = vunpack.c.l.b16 %v1603
  %v1796 = vunpack.c.h.b16 %v1603
  %v1797 = vunpack.c.l.b16 %v1604
  %v1798 = vunpack.c.h.b16 %v1604
  %v1799 = vunpack.c.l.b16 %v1605
  %v1800 = vunpack.c.h.b16 %v1605
  %v1801 = vunpack.c.l.b16 %v1606
  %v1802 = vunpack.c.h.b16 %v1606
  %v1803 = vunpack.c.l.b16 %v1607
  %v1804 = vunpack.c.h.b16 %v1607
  %v1805 = vunpack.c.l.b16 %v1608
  %v1806 = vunpack.c.h.b16 %v1608
  %v1807 = vunpack.c.l.b16 %v1609
  %v1808 = vunpack.c.h.b16 %v1609
  %v1809 = vunpack.c.l.b16 %v1610
  %v1810 = vunpack.c.h.b16 %v1610
  %v1811 = vunpack.c.l.b16 %v1611
  %v1812 = vunpack.c.h.b16 %v1611
  %v1813 = vunpack.c.l.b16 %v1612
  %v1814 = vunpack.c.h.b16 %v1612
  %v1815 = vunpack.c.l.b16 %v1613
  %v1816 = vunpack.c.h.b16 %v1613
  %v1817 = vunpack.c.l.b16 %v1614
  %v1818 = vunpack.c.h.b16 %v1614
  %v1819 = vunpack.c.l.b16 %v1615
  %v1820 = vunpack.c.h.b16 %v1615
  %v1821 = vunpack.c.l.b16 %v1616
  %v1822 = vunpack.c.h.b16 %v1616
  %v1823 = vunpack.c.l.b16 %v1617
  %v1824 = vunpack.c.h.b16 %v1617
  %v1825 = vunpack.c.l.b16 %v1618
  %v1826 = vunpack.c.h.b16 %v1618
  %v1827 = vunpack.c.l.b16 %v1619
  %v1828 = vunpack.c.h.b16 %v1619
  %v1829 = vunpack.c.l.b16 %v1620
  %v1830 = vunpack.c.h.b16 %v1620
  %v1831 = vunpack.c.l.b16 %v1621
  %v1832 = vunpack.c.h.b16 %v1621
  %v1833 = vunpack.c.l.b16 %v1622
  %v1834 = vunpack.c.h.b16 %v1622
  %v1835 = vunpack.c.l.b16 %v1623
  %v1836 = vunpack.c.h.b16 %v1623
  %v1837 = vunpack.c.l.b16 %v1624
  %v1838 = vunpack.c.h.b16 %v1624
  %v1839 = vpack.c.b16 %v1715, %v1711
  %v1840 = vpack.c.b16 %v1716, %v1712
  %v1841 = vpack.c.b16 %v1717, %v1713
  %v1842 = vpack.c.b16 %v1718, %v1714
  %v1843 = vpack.c.b16 %v1723, %v1719
  %v1844 = vpack.c.b16 %v1724, %v1720
  %v1845 = vpack.c.b16 %v1725, %v1721
  %v1846 = vpack.c.b16 %v1726, %v1722
  %v1847 = vpack.c.b16 %v1731, %v1727
  %v1848 = vpack.c.b16 %v1732, %v1728
  %v1849 = vpack.c.b16 %v1733, %v1729
  %v1850 = vpack.c.b16 %v1734, %v1730
  %v1851 = vpack.c.b16 %v1739, %v1735
  %v1852 = vpack.c.b16 %v1740, %v1736
  %v1853 = vpack.c.b16 %v1741, %v1737
  %v1854 = vpack.c.b16 %v1742, %v1738
  %v1855 = vpack.c.b16 %v1747, %v1743
  %v1856 = vpack.c.b16 %v1748, %v1744
  %v1857 = vpack.c.b16 %v1749, %v1745
  %v1858 = vpack.c.b16 %v1750, %v1746
  %v1859 = vpack.c.b16 %v1755, %v1751
  %v1860 = vpack.c.b16 %v1756, %v1752
  %v1861 = vpack.c.b16 %v1757, %v1753
  %v1862 = vpack.c.b16 %v1758, %v1754
  %v1863 = vpack.c.b16 %v1763, %v1759
  %v1864 = vpack.c.b16 %v1764, %v1760
  %v1865 = vpack.c.b16 %v1765, %v1761
  %v1866 = vpack.c.b16 %v1766, %v1762
  %v1867 = vpack.c.b16 %v1771, %v1767
  %v1868 = vpack.c.b16 %v1772, %v1768
  %v1869 = vpack.c.b16 %v1773, %v1769
  %v1870 = vpack.c.b16 %v1774, %v1770
  %v1871 = vpack.c.b16 %v1779, %v1775
  %v1872 = vpack.c.b16 %v1780, %v1776
  %v1873 = vpack.c.b16 %v1781, %v1777
  %v1874 = vpack.c.b16 %v1782, %v1778
  %v1875 = vpack.c.b16 %v1787, %v1783
  %v1876 = vpack.c.b16 %v1788, %v1784
  %v1877 = vpack.c.b16 %v1789, %v1785
  %v1878 = vpack.c.b16 %v1790, %v1786
  %v1879 = vpack.c.b16 %v1795, %v1791
  %v1880 = vpack.c.b16 %v1796, %v1792
  %v1881 = vpack.c.b16 %v1797, %v1793
  %v1882 = vpack.c.b16 %v1798, %v1794
  %v1883 = vpack.c.b16 %v1803, %v1799
  %v1884 = vpack.c.b16 %v1804, %v1800
  %v1885 = vpack.c.b16 %v1805, %v1801
  %v1886 = vpack.c.b16 %v1806, %v1802
  %v1887 = vpack.c.b16 %v1811, %v1807
  %v1888 = vpack.c.b16 %v1812, %v1808
  %v1889 = vpack.c.b16 %v1813, %v1809
  %v1890 = vpack.c.b16 %v1814, %v1810
  %v1891 = vpack.c.b16 %v1819, %v1815
  %v1892 = vpack.c.b16 %v1820, %v1816
  %v1893 = vpack.c.b16 %v1821, %v1817
  %v1894 = vpack.c.b16 %v1822, %v1818
  %v1895 = vpack.c.b16 %v1827, %v1823
  %v1896 = vpack.c.b16 %v1828, %v1824
  %v1897 = vpack.c.b16 %v1829, %v1825
  %v1898 = vpack.c.b16 %v1830, %v1826
  %v1899 = vpack.c.b16 %v1835, %v1831
  %v1900 = vpack.c.b16 %v1836, %v1832
  %v1901 = vpack.c.b16 %v1837, %v1833
  %v1902 = vpack.c.b16 %v1838, %v1834
  %1967 = vmatprep.subr.bf16.mxu0 %v1840
  %1968 = vmatpush1.bf16.msra.mxu0 %v1839
  %1969 = vmatprep.subr.bf16.mxu0 %v1844
  %1970 = vmatpush1.bf16.msra.mxu0 %v1843
  %1971 = vmatprep.subr.bf16.mxu0 %v1848
  %1972 = vmatpush1.bf16.msra.mxu0 %v1847
  %1973 = vmatprep.subr.bf16.mxu0 %v1852
  %1974 = vmatpush1.bf16.msra.mxu0 %v1851
  %1975 = vmatprep.subr.bf16.mxu0 %v1856
  %1976 = vmatpush1.bf16.msra.mxu0 %v1855
  %1977 = vmatprep.subr.bf16.mxu0 %v1860
  %1978 = vmatpush1.bf16.msra.mxu0 %v1859
  %1979 = vmatprep.subr.bf16.mxu0 %v1864
  %1980 = vmatpush1.bf16.msra.mxu0 %v1863
  %1981 = vmatprep.subr.bf16.mxu0 %v1868
  %1982 = vmatpush1.bf16.msra.mxu0 %v1867
  %1983 = vmatprep.subr.bf16.mxu0 %v1872
  %1984 = vmatpush1.bf16.msra.mxu0 %v1871
  %1985 = vmatprep.subr.bf16.mxu0 %v1876
  %1986 = vmatpush1.bf16.msra.mxu0 %v1875
  %1987 = vmatprep.subr.bf16.mxu0 %v1880
  %1988 = vmatpush1.bf16.msra.mxu0 %v1879
  %1989 = vmatprep.subr.bf16.mxu0 %v1884
  %1990 = vmatpush1.bf16.msra.mxu0 %v1883
  %1991 = vmatprep.subr.bf16.mxu0 %v1888
  %1992 = vmatpush1.bf16.msra.mxu0 %v1887
  %1993 = vmatprep.subr.bf16.mxu0 %v1892
  %1994 = vmatpush1.bf16.msra.mxu0 %v1891
  %1995 = vmatprep.subr.bf16.mxu0 %v1896
  %1996 = vmatpush1.bf16.msra.mxu0 %v1895
  %1997 = vmatprep.subr.bf16.mxu0 %v1900
  %1998 = vmatpush1.bf16.msra.mxu0 %v1899
  %1999 = vmatprep.mubr.bf16.mxu0 %v1560
  %2000 = vmatmul.mubr.bf16.gmra.mrb[0].mxu0 %v1559
  %v2001 = vpop.f32.mrb[0].mxu0
  %v2002 = vadd.f32 %v1630, %v2001
  %v2003 = vpop.f32.mrb[0].mxu0
  %v2004 = vadd.f32 %v1634, %v2003
  %v2005 = vpop.f32.mrb[0].mxu0
  %v2006 = vpop.f32.mrb[0].mxu0
  %2007 = vdwg.mxu0
  %2008 = vmatprep.subr.bf16.mxu0 %v1842
  %2009 = vmatpush1.bf16.msra.mxu0 %v1841
  %2010 = vmatprep.subr.bf16.mxu0 %v1846
  %2011 = vmatpush1.bf16.msra.mxu0 %v1845
  %2012 = vmatprep.subr.bf16.mxu0 %v1850
  %2013 = vmatpush1.bf16.msra.mxu0 %v1849
  %2014 = vmatprep.subr.bf16.mxu0 %v1854
  %2015 = vmatpush1.bf16.msra.mxu0 %v1853
  %2016 = vmatprep.subr.bf16.mxu0 %v1858
  %2017 = vmatpush1.bf16.msra.mxu0 %v1857
  %2018 = vmatprep.subr.bf16.mxu0 %v1862
  %2019 = vmatpush1.bf16.msra.mxu0 %v1861
  %2020 = vmatprep.subr.bf16.mxu0 %v1866
  %2021 = vmatpush1.bf16.msra.mxu0 %v1865
  %2022 = vmatprep.subr.bf16.mxu0 %v1870
  %2023 = vmatpush1.bf16.msra.mxu0 %v1869
  %2024 = vmatprep.subr.bf16.mxu0 %v1874
  %2025 = vmatpush1.bf16.msra.mxu0 %v1873
  %2026 = vmatprep.subr.bf16.mxu0 %v1878
  %2027 = vmatpush1.bf16.msra.mxu0 %v1877
  %2028 = vmatprep.subr.bf16.mxu0 %v1882
  %2029 = vmatpush1.bf16.msra.mxu0 %v1881
  %2030 = vmatprep.subr.bf16.mxu0 %v1886
  %2031 = vmatpush1.bf16.msra.mxu0 %v1885
  %2032 = vmatprep.subr.bf16.mxu0 %v1890
  %2033 = vmatpush1.bf16.msra.mxu0 %v1889
  %2034 = vmatprep.subr.bf16.mxu0 %v1894
  %2035 = vmatpush1.bf16.msra.mxu0 %v1893
  %2036 = vmatprep.subr.bf16.mxu0 %v1898
  %2037 = vmatpush1.bf16.msra.mxu0 %v1897
  %2038 = vmatprep.subr.bf16.mxu0 %v1902
  %2039 = vmatpush1.bf16.msra.mxu0 %v1901
  %2040 = vmatprep.mubr.bf16.mxu0 %v1560
  %2041 = vmatmul.mubr.bf16.gmra.mrb[0].mxu0 %v1559
  %v2042 = vpop.f32.mrb[0].mxu0
  %v2043 = vadd.f32 %v1638, %v2042
  %v2044 = vpop.f32.mrb[0].mxu0
  %v2045 = vadd.f32 %v1642, %v2044
  %v2046 = vpop.f32.mrb[0].mxu0
  %v2047 = vpop.f32.mrb[0].mxu0
  %2048 = vdwg.mxu0
  %v2049 = vxor.u32 %v2002, 2147483648
  %v2050 = vmul.f32 %v2049, 1.442695
  %v2051 = vpow.pop %v2050
  %v2052 = vadd.f32 %v2051, 1.0
  %v2053 = vrcp.pop %v2052
  %v2054 = vmul.f32 1.0, %v2053
  %v2055 = vxor.u32 %v2004, 2147483648
  %v2056 = vmul.f32 %v2055, 1.442695
  %v2057 = vpow.pop %v2056
  %v2058 = vadd.f32 %v2057, 1.0
  %v2059 = vrcp.pop %v2058
  %v2060 = vmul.f32 1.0, %v2059
  %v2061 = vxor.u32 %v2043, 2147483648
  %v2062 = vmul.f32 %v2061, 1.442695
  %v2063 = vpow.pop %v2062
  %v2064 = vadd.f32 %v2063, 1.0
  %v2065 = vrcp.pop %v2064
  %v2066 = vmul.f32 1.0, %v2065
  %v2067 = vtanh.pop %v2045
  %v2068 = vmul.f32 %v2054, %v2067
  %v2069 = vmul.f32 %v2060, %v1310
  %v2070 = vadd.f32 %v2068, %v2069
  %v2071 = vtanh.pop %v2070
  %v2072 = vmul.f32 %v2066, %v2071
  %2073 = vst [vmem:[#allocation2] sm:$0xff] %v2072
  %v2074 = vpack.c.bf16 %v2072, %v2072
  %s2075 = scalar_lea.vmem %s5, 64
  %v2076 = vld [vmem:[%s2075] sm:$0xf]
  %v2077 = vld [vmem:[%s2075 + $0x4] sm:$0xf]
  %v2078 = vld [vmem:[%s2075 + $0x8] sm:$0xf]
  %v2079 = vld [vmem:[%s2075 + $0xc] sm:$0xf]
  %v2080 = vld [vmem:[%s2075 + $0x10] sm:$0xf]
  %v2081 = vld [vmem:[%s2075 + $0x14] sm:$0xf]
  %v2082 = vld [vmem:[%s2075 + $0x18] sm:$0xf]
  %v2083 = vld [vmem:[%s2075 + $0x1c] sm:$0xf]
  %v2084 = vld [vmem:[%s2075 + $0x20] sm:$0xf]
  %v2085 = vld [vmem:[%s2075 + $0x24] sm:$0xf]
  %v2086 = vld [vmem:[%s2075 + $0x28] sm:$0xf]
  %v2087 = vld [vmem:[%s2075 + $0x2c] sm:$0xf]
  %v2088 = vld [vmem:[%s2075 + $0x30] sm:$0xf]
  %v2089 = vld [vmem:[%s2075 + $0x34] sm:$0xf]
  %v2090 = vld [vmem:[%s2075 + $0x38] sm:$0xf]
  %v2091 = vld [vmem:[%s2075 + $0x3c] sm:$0xf]
  %s2092 = scalar_lea.vmem %s6, 1
  %v2093 = vld [vmem:[%s2092] sm:$0x1]
  %v2095 = vlaneseq
  %v2096 = vshrl.u32 %v2095, 7
  %v2097 = vsub.s32 0, %v2096
  %v2098 = vrot.slane %v2093, %v2097
  %v2116 = vunpack.c.l.b16 %v2076
  %v2117 = vunpack.c.l.b16 %v2077
  %v2118 = vunpack.c.l.b16 %v2078
  %v2119 = vunpack.c.l.b16 %v2079
  %v2120 = vunpack.c.l.b16 %v2080
  %v2121 = vunpack.c.l.b16 %v2081
  %v2122 = vunpack.c.l.b16 %v2082
  %v2123 = vunpack.c.l.b16 %v2083
  %v2124 = vunpack.c.l.b16 %v2084
  %v2125 = vunpack.c.l.b16 %v2085
  %v2126 = vunpack.c.l.b16 %v2086
  %v2127 = vunpack.c.l.b16 %v2087
  %v2128 = vunpack.c.l.b16 %v2088
  %v2129 = vunpack.c.l.b16 %v2089
  %v2130 = vunpack.c.l.b16 %v2090
  %v2131 = vunpack.c.l.b16 %v2091
  %v2132 = vpack.c.b16 %v2117, %v2116
  %v2133 = vpack.c.b16 %v2119, %v2118
  %v2134 = vpack.c.b16 %v2121, %v2120
  %v2135 = vpack.c.b16 %v2123, %v2122
  %v2136 = vpack.c.b16 %v2125, %v2124
  %v2137 = vpack.c.b16 %v2127, %v2126
  %v2138 = vpack.c.b16 %v2129, %v2128
  %v2139 = vpack.c.b16 %v2131, %v2130
  %2148 = vmatprep.subr.bf16.mxu0 0
  %2149 = vmatpush1.bf16.msra.mxu0 %v2132
  %2150 = vmatprep.subr.bf16.mxu0 0
  %2151 = vmatpush1.bf16.msra.mxu0 %v2133
  %2152 = vmatprep.subr.bf16.mxu0 0
  %2153 = vmatpush1.bf16.msra.mxu0 %v2134
  %2154 = vmatprep.subr.bf16.mxu0 0
  %2155 = vmatpush1.bf16.msra.mxu0 %v2135
  %2156 = vmatprep.subr.bf16.mxu0 0
  %2157 = vmatpush1.bf16.msra.mxu0 %v2136
  %2158 = vmatprep.subr.bf16.mxu0 0
  %2159 = vmatpush1.bf16.msra.mxu0 %v2137
  %2160 = vmatprep.subr.bf16.mxu0 0
  %2161 = vmatpush1.bf16.msra.mxu0 %v2138
  %2162 = vmatprep.subr.bf16.mxu0 0
  %2163 = vmatpush1.bf16.msra.mxu0 %v2139
  %2164 = vmatprep.subr.bf16.mxu0 0
  %2165 = vmatpush1.bf16.msra.mxu0 0
  %2166 = vmatprep.subr.bf16.mxu0 0
  %2167 = vmatpush1.bf16.msra.mxu0 0
  %2168 = vmatprep.subr.bf16.mxu0 0
  %2169 = vmatpush1.bf16.msra.mxu0 0
  %2170 = vmatprep.subr.bf16.mxu0 0
  %2171 = vmatpush1.bf16.msra.mxu0 0
  %2172 = vmatprep.subr.bf16.mxu0 0
  %2173 = vmatpush1.bf16.msra.mxu0 0
  %2174 = vmatprep.subr.bf16.mxu0 0
  %2175 = vmatpush1.bf16.msra.mxu0 0
  %2176 = vmatprep.subr.bf16.mxu0 0
  %2177 = vmatpush1.bf16.msra.mxu0 0
  %2178 = vmatprep.subr.bf16.mxu0 0
  %2179 = vmatpush1.bf16.msra.mxu0 0
  %2180 = vmatprep.mubr.bf16.mxu0 0
  %2181 = vmatmul.mubr.bf16.gmra.mrb[0].mxu0 %v2074
  %v2182 = vpop.f32.mrb[0].mxu0
  %v2183 = vadd.f32 %v2098, %v2182
  %v2184 = vpop.f32.mrb[0].mxu0
  %v2185 = vpop.f32.mrb[0].mxu0
  %v2186 = vpop.f32.mrb[0].mxu0
  %2187 = vdwg.mxu0
  %2188 = vmax.xlane.f32.xlu0 %v2183
  %v2189 = vpop.xlane.xlu0 %2188
  %vm2190 = vcmp.eq.f32.partialorder %v2183, %v2189
  %v2191 = vsel %vm2190, %v667, 128
  %v2192 = vand.u32 %v2191, 65535
  %v2193 = vshra.s32 %v2191, 16
  %v2194 = vcvt.s32.f32 %v2192
  %v2195 = vcvt.s32.f32 %v2193
  %2196 = vmin.xlane.f32.xlu0 %v2195
  %v2197 = vpop.xlane.xlu0 %2196
  %vm2198 = vcmp.eq.f32.partialorder %v2195, %v2197
  %v2199 = vsel %vm2198, %v2194, inf
  %2200 = vmin.xlane.f32.xlu0 %v2199
  %v2201 = vpop.xlane.xlu0 %2200
  %v2202 = vcvt.f32.s32 %v2201
  %v2203 = vcvt.f32.s32 %v2197
  %v2204 = vshll.u32 %v2203, 16
  %v2205 = vadd.s32 %v2204, %v2202
  %vm2206 = vcmp.eq.s32.totalorder %v667, %v2205
  %v2207 = vsel %vm2206, 1, 0
  %v2208 = vcvt.s32.f32 %v2207
  %v2209 = vpack.c.bf16 %v2208, %v2208
  %v2210 = vld [vmem:[%s7] sm:$0xf]
  %v2211 = vld [vmem:[%s7 + $0x4] sm:$0xf]
  %v2212 = vld [vmem:[%s7 + $0x8] sm:$0xf]
  %v2213 = vld [vmem:[%s7 + $0xc] sm:$0xf]
  %v2214 = vld [vmem:[%s7 + $0x10] sm:$0xf]
  %v2215 = vld [vmem:[%s7 + $0x14] sm:$0xf]
  %v2216 = vld [vmem:[%s7 + $0x18] sm:$0xf]
  %v2217 = vld [vmem:[%s7 + $0x1c] sm:$0xf]
  %v2218 = vld [vmem:[%s7 + $0x20] sm:$0xf]
  %v2219 = vld [vmem:[%s7 + $0x24] sm:$0xf]
  %v2220 = vld [vmem:[%s7 + $0x28] sm:$0xf]
  %v2221 = vld [vmem:[%s7 + $0x2c] sm:$0xf]
  %v2222 = vld [vmem:[%s7 + $0x30] sm:$0xf]
  %v2223 = vld [vmem:[%s7 + $0x34] sm:$0xf]
  %v2224 = vld [vmem:[%s7 + $0x38] sm:$0xf]
  %v2225 = vld [vmem:[%s7 + $0x3c] sm:$0xf]
  %v2242 = vunpack.c.l.b16 %v2210
  %v2243 = vunpack.c.l.b16 %v2211
  %v2244 = vunpack.c.l.b16 %v2212
  %v2245 = vunpack.c.l.b16 %v2213
  %v2246 = vunpack.c.l.b16 %v2214
  %v2247 = vunpack.c.l.b16 %v2215
  %v2248 = vunpack.c.l.b16 %v2216
  %v2249 = vunpack.c.l.b16 %v2217
  %v2250 = vunpack.c.l.b16 %v2218
  %v2251 = vunpack.c.l.b16 %v2219
  %v2252 = vunpack.c.l.b16 %v2220
  %v2253 = vunpack.c.l.b16 %v2221
  %v2254 = vunpack.c.l.b16 %v2222
  %v2255 = vunpack.c.l.b16 %v2223
  %v2256 = vunpack.c.l.b16 %v2224
  %v2257 = vunpack.c.l.b16 %v2225
  %v2258 = vpack.c.b16 %v2243, %v2242
  %v2259 = vpack.c.b16 %v2245, %v2244
  %v2260 = vpack.c.b16 %v2247, %v2246
  %v2261 = vpack.c.b16 %v2249, %v2248
  %v2262 = vpack.c.b16 %v2251, %v2250
  %v2263 = vpack.c.b16 %v2253, %v2252
  %v2264 = vpack.c.b16 %v2255, %v2254
  %v2265 = vpack.c.b16 %v2257, %v2256
  %2274 = vmatprep.subr.bf16.mxu0 0
  %2275 = vmatpush1.bf16.msra.mxu0 %v2258
  %2276 = vmatprep.subr.bf16.mxu0 0
  %2277 = vmatpush1.bf16.msra.mxu0 %v2259
  %2278 = vmatprep.subr.bf16.mxu0 0
  %2279 = vmatpush1.bf16.msra.mxu0 %v2260
  %2280 = vmatprep.subr.bf16.mxu0 0
  %2281 = vmatpush1.bf16.msra.mxu0 %v2261
  %2282 = vmatprep.subr.bf16.mxu0 0
  %2283 = vmatpush1.bf16.msra.mxu0 %v2262
  %2284 = vmatprep.subr.bf16.mxu0 0
  %2285 = vmatpush1.bf16.msra.mxu0 %v2263
  %2286 = vmatprep.subr.bf16.mxu0 0
  %2287 = vmatpush1.bf16.msra.mxu0 %v2264
  %2288 = vmatprep.subr.bf16.mxu0 0
  %2289 = vmatpush1.bf16.msra.mxu0 %v2265
  %2290 = vmatprep.subr.bf16.mxu0 0
  %2291 = vmatpush1.bf16.msra.mxu0 0
  %2292 = vmatprep.subr.bf16.mxu0 0
  %2293 = vmatpush1.bf16.msra.mxu0 0
  %2294 = vmatprep.subr.bf16.mxu0 0
  %2295 = vmatpush1.bf16.msra.mxu0 0
  %2296 = vmatprep.subr.bf16.mxu0 0
  %2297 = vmatpush1.bf16.msra.mxu0 0
  %2298 = vmatprep.subr.bf16.mxu0 0
  %2299 = vmatpush1.bf16.msra.mxu0 0
  %2300 = vmatprep.subr.bf16.mxu0 0
  %2301 = vmatpush1.bf16.msra.mxu0 0
  %2302 = vmatprep.subr.bf16.mxu0 0
  %2303 = vmatpush1.bf16.msra.mxu0 0
  %2304 = vmatprep.subr.bf16.mxu0 0
  %2305 = vmatpush1.bf16.msra.mxu0 0
  %2306 = vmatprep.mubr.bf16.mxu0 0
  %2307 = vmatmul.mubr.bf16.gmra.mrb[0].mxu0 %v2209
  %v2308 = vpop.f32.mrb[0].mxu0
  %v2309 = vadd.f32 0.0, %v2308
  %v2310 = vpop.f32.mrb[0].mxu0
  %v2311 = vpop.f32.mrb[0].mxu0
  %v2312 = vpop.f32.mrb[0].mxu0
  %2313 = vdwg.mxu0
  %2314 = vst [vmem:[#allocation2 + $0x8] sm:$0xff] %v2309
  %s2315 = scalar_lea.vmem %s8, 16
  %2316 = vst [vmem:[%s2315] sm:$0xff] %v2183
  %s2317 = scalar_lea.vmem %s9, 16
  %2318 = vst [vmem:[%s2317] sm:$0xff] %v2070
  %v2319 = vld [vmem:[#allocation2] sm:$0xff]
  %v2320 = vld [vmem:[#allocation2 + $0x8] sm:$0xff]
  %v2321 = vpack.c.bf16 %v2319, %v2319
  %v2322 = vpack.c.bf16 %v2320, %v2320
  %v2323 = vld [vmem:[%s3] sm:$0xff]
  %v2324 = vld [vmem:[%s3 + $0x8] sm:$0xff]
  %v2325 = vld [vmem:[%s3 + $0x10] sm:$0xff]
  %v2326 = vld [vmem:[%s3 + $0x18] sm:$0xff]
  %v2327 = vld [vmem:[%s3 + $0x20] sm:$0xff]
  %v2328 = vld [vmem:[%s3 + $0x28] sm:$0xff]
  %v2329 = vld [vmem:[%s3 + $0x30] sm:$0xff]
  %v2330 = vld [vmem:[%s3 + $0x38] sm:$0xff]
  %v2331 = vld [vmem:[%s3 + $0x40] sm:$0xff]
  %v2332 = vld [vmem:[%s3 + $0x48] sm:$0xff]
  %v2333 = vld [vmem:[%s3 + $0x50] sm:$0xff]
  %v2334 = vld [vmem:[%s3 + $0x58] sm:$0xff]
  %v2335 = vld [vmem:[%s3 + $0x60] sm:$0xff]
  %v2336 = vld [vmem:[%s3 + $0x68] sm:$0xff]
  %v2337 = vld [vmem:[%s3 + $0x70] sm:$0xff]
  %v2338 = vld [vmem:[%s3 + $0x78] sm:$0xff]
  %v2339 = vld [vmem:[%s3 + $0x80] sm:$0xff]
  %v2340 = vld [vmem:[%s3 + $0x88] sm:$0xff]
  %v2341 = vld [vmem:[%s3 + $0x90] sm:$0xff]
  %v2342 = vld [vmem:[%s3 + $0x98] sm:$0xff]
  %v2343 = vld [vmem:[%s3 + $0xa0] sm:$0xff]
  %v2344 = vld [vmem:[%s3 + $0xa8] sm:$0xff]
  %v2345 = vld [vmem:[%s3 + $0xb0] sm:$0xff]
  %v2346 = vld [vmem:[%s3 + $0xb8] sm:$0xff]
  %v2347 = vld [vmem:[%s3 + $0xc0] sm:$0xff]
  %v2348 = vld [vmem:[%s3 + $0xc8] sm:$0xff]
  %v2349 = vld [vmem:[%s3 + $0xd0] sm:$0xff]
  %v2350 = vld [vmem:[%s3 + $0xd8] sm:$0xff]
  %v2351 = vld [vmem:[%s3 + $0xe0] sm:$0xff]
  %v2352 = vld [vmem:[%s3 + $0xe8] sm:$0xff]
  %v2353 = vld [vmem:[%s3 + $0xf0] sm:$0xff]
  %v2354 = vld [vmem:[%s3 + $0xf8] sm:$0xff]
  %v2355 = vld [vmem:[%s3 + $0x100] sm:$0xff]
  %v2356 = vld [vmem:[%s3 + $0x108] sm:$0xff]
  %v2357 = vld [vmem:[%s3 + $0x110] sm:$0xff]
  %v2358 = vld [vmem:[%s3 + $0x118] sm:$0xff]
  %v2359 = vld [vmem:[%s3 + $0x120] sm:$0xff]
  %v2360 = vld [vmem:[%s3 + $0x128] sm:$0xff]
  %v2361 = vld [vmem:[%s3 + $0x130] sm:$0xff]
  %v2362 = vld [vmem:[%s3 + $0x138] sm:$0xff]
  %v2363 = vld [vmem:[%s3 + $0x140] sm:$0xff]
  %v2364 = vld [vmem:[%s3 + $0x148] sm:$0xff]
  %v2365 = vld [vmem:[%s3 + $0x150] sm:$0xff]
  %v2366 = vld [vmem:[%s3 + $0x158] sm:$0xff]
  %v2367 = vld [vmem:[%s3 + $0x160] sm:$0xff]
  %v2368 = vld [vmem:[%s3 + $0x168] sm:$0xff]
  %v2369 = vld [vmem:[%s3 + $0x170] sm:$0xff]
  %v2370 = vld [vmem:[%s3 + $0x178] sm:$0xff]
  %v2371 = vld [vmem:[%s3 + $0x180] sm:$0xff]
  %v2372 = vld [vmem:[%s3 + $0x188] sm:$0xff]
  %v2373 = vld [vmem:[%s3 + $0x190] sm:$0xff]
  %v2374 = vld [vmem:[%s3 + $0x198] sm:$0xff]
  %v2375 = vld [vmem:[%s3 + $0x1a0] sm:$0xff]
  %v2376 = vld [vmem:[%s3 + $0x1a8] sm:$0xff]
  %v2377 = vld [vmem:[%s3 + $0x1b0] sm:$0xff]
  %v2378 = vld [vmem:[%s3 + $0x1b8] sm:$0xff]
  %v2379 = vld [vmem:[%s3 + $0x1c0] sm:$0xff]
  %v2380 = vld [vmem:[%s3 + $0x1c8] sm:$0xff]
  %v2381 = vld [vmem:[%s3 + $0x1d0] sm:$0xff]
  %v2382 = vld [vmem:[%s3 + $0x1d8] sm:$0xff]
  %v2383 = vld [vmem:[%s3 + $0x1e0] sm:$0xff]
  %v2384 = vld [vmem:[%s3 + $0x1e8] sm:$0xff]
  %v2385 = vld [vmem:[%s3 + $0x1f0] sm:$0xff]
  %v2386 = vld [vmem:[%s3 + $0x1f8] sm:$0xff]
  %v2387 = vld [vmem:[%s4] sm:$0xf]
  %v2389 = vlaneseq
  %v2390 = vshrl.u32 %v2389, 7
  %v2391 = vsub.s32 0, %v2390
  %v2392 = vrot.slane %v2387, %v2391
  %v2393 = vlaneseq
  %v2394 = vshrl.u32 %v2393, 7
  %v2395 = vsub.s32 1, %v2394
  %v2396 = vrot.slane %v2387, %v2395
  %v2397 = vlaneseq
  %v2398 = vshrl.u32 %v2397, 7
  %v2399 = vsub.s32 2, %v2398
  %v2400 = vrot.slane %v2387, %v2399
  %v2401 = vlaneseq
  %v2402 = vshrl.u32 %v2401, 7
  %v2403 = vsub.s32 3, %v2402
  %v2404 = vrot.slane %v2387, %v2403
  %v2473 = vunpack.c.l.b16 %v2323
  %v2474 = vunpack.c.h.b16 %v2323
  %v2475 = vunpack.c.l.b16 %v2324
  %v2476 = vunpack.c.h.b16 %v2324
  %v2477 = vunpack.c.l.b16 %v2325
  %v2478 = vunpack.c.h.b16 %v2325
  %v2479 = vunpack.c.l.b16 %v2326
  %v2480 = vunpack.c.h.b16 %v2326
  %v2481 = vunpack.c.l.b16 %v2327
  %v2482 = vunpack.c.h.b16 %v2327
  %v2483 = vunpack.c.l.b16 %v2328
  %v2484 = vunpack.c.h.b16 %v2328
  %v2485 = vunpack.c.l.b16 %v2329
  %v2486 = vunpack.c.h.b16 %v2329
  %v2487 = vunpack.c.l.b16 %v2330
  %v2488 = vunpack.c.h.b16 %v2330
  %v2489 = vunpack.c.l.b16 %v2331
  %v2490 = vunpack.c.h.b16 %v2331
  %v2491 = vunpack.c.l.b16 %v2332
  %v2492 = vunpack.c.h.b16 %v2332
  %v2493 = vunpack.c.l.b16 %v2333
  %v2494 = vunpack.c.h.b16 %v2333
  %v2495 = vunpack.c.l.b16 %v2334
  %v2496 = vunpack.c.h.b16 %v2334
  %v2497 = vunpack.c.l.b16 %v2335
  %v2498 = vunpack.c.h.b16 %v2335
  %v2499 = vunpack.c.l.b16 %v2336
  %v2500 = vunpack.c.h.b16 %v2336
  %v2501 = vunpack.c.l.b16 %v2337
  %v2502 = vunpack.c.h.b16 %v2337
  %v2503 = vunpack.c.l.b16 %v2338
  %v2504 = vunpack.c.h.b16 %v2338
  %v2505 = vunpack.c.l.b16 %v2339
  %v2506 = vunpack.c.h.b16 %v2339
  %v2507 = vunpack.c.l.b16 %v2340
  %v2508 = vunpack.c.h.b16 %v2340
  %v2509 = vunpack.c.l.b16 %v2341
  %v2510 = vunpack.c.h.b16 %v2341
  %v2511 = vunpack.c.l.b16 %v2342
  %v2512 = vunpack.c.h.b16 %v2342
  %v2513 = vunpack.c.l.b16 %v2343
  %v2514 = vunpack.c.h.b16 %v2343
  %v2515 = vunpack.c.l.b16 %v2344
  %v2516 = vunpack.c.h.b16 %v2344
  %v2517 = vunpack.c.l.b16 %v2345
  %v2518 = vunpack.c.h.b16 %v2345
  %v2519 = vunpack.c.l.b16 %v2346
  %v2520 = vunpack.c.h.b16 %v2346
  %v2521 = vunpack.c.l.b16 %v2347
  %v2522 = vunpack.c.h.b16 %v2347
  %v2523 = vunpack.c.l.b16 %v2348
  %v2524 = vunpack.c.h.b16 %v2348
  %v2525 = vunpack.c.l.b16 %v2349
  %v2526 = vunpack.c.h.b16 %v2349
  %v2527 = vunpack.c.l.b16 %v2350
  %v2528 = vunpack.c.h.b16 %v2350
  %v2529 = vunpack.c.l.b16 %v2351
  %v2530 = vunpack.c.h.b16 %v2351
  %v2531 = vunpack.c.l.b16 %v2352
  %v2532 = vunpack.c.h.b16 %v2352
  %v2533 = vunpack.c.l.b16 %v2353
  %v2534 = vunpack.c.h.b16 %v2353
  %v2535 = vunpack.c.l.b16 %v2354
  %v2536 = vunpack.c.h.b16 %v2354
  %v2537 = vunpack.c.l.b16 %v2355
  %v2538 = vunpack.c.h.b16 %v2355
  %v2539 = vunpack.c.l.b16 %v2356
  %v2540 = vunpack.c.h.b16 %v2356
  %v2541 = vunpack.c.l.b16 %v2357
  %v2542 = vunpack.c.h.b16 %v2357
  %v2543 = vunpack.c.l.b16 %v2358
  %v2544 = vunpack.c.h.b16 %v2358
  %v2545 = vunpack.c.l.b16 %v2359
  %v2546 = vunpack.c.h.b16 %v2359
  %v2547 = vunpack.c.l.b16 %v2360
  %v2548 = vunpack.c.h.b16 %v2360
  %v2549 = vunpack.c.l.b16 %v2361
  %v2550 = vunpack.c.h.b16 %v2361
  %v2551 = vunpack.c.l.b16 %v2362
  %v2552 = vunpack.c.h.b16 %v2362
  %v2553 = vunpack.c.l.b16 %v2363
  %v2554 = vunpack.c.h.b16 %v2363
  %v2555 = vunpack.c.l.b16 %v2364
  %v2556 = vunpack.c.h.b16 %v2364
  %v2557 = vunpack.c.l.b16 %v2365
  %v2558 = vunpack.c.h.b16 %v2365
  %v2559 = vunpack.c.l.b16 %v2366
  %v2560 = vunpack.c.h.b16 %v2366
  %v2561 = vunpack.c.l.b16 %v2367
  %v2562 = vunpack.c.h.b16 %v2367
  %v2563 = vunpack.c.l.b16 %v2368
  %v2564 = vunpack.c.h.b16 %v2368
  %v2565 = vunpack.c.l.b16 %v2369
  %v2566 = vunpack.c.h.b16 %v2369
  %v2567 = vunpack.c.l.b16 %v2370
  %v2568 = vunpack.c.h.b16 %v2370
  %v2569 = vunpack.c.l.b16 %v2371
  %v2570 = vunpack.c.h.b16 %v2371
  %v2571 = vunpack.c.l.b16 %v2372
  %v2572 = vunpack.c.h.b16 %v2372
  %v2573 = vunpack.c.l.b16 %v2373
  %v2574 = vunpack.c.h.b16 %v2373
  %v2575 = vunpack.c.l.b16 %v2374
  %v2576 = vunpack.c.h.b16 %v2374
  %v2577 = vunpack.c.l.b16 %v2375
  %v2578 = vunpack.c.h.b16 %v2375
  %v2579 = vunpack.c.l.b16 %v2376
  %v2580 = vunpack.c.h.b16 %v2376
  %v2581 = vunpack.c.l.b16 %v2377
  %v2582 = vunpack.c.h.b16 %v2377
  %v2583 = vunpack.c.l.b16 %v2378
  %v2584 = vunpack.c.h.b16 %v2378
  %v2585 = vunpack.c.l.b16 %v2379
  %v2586 = vunpack.c.h.b16 %v2379
  %v2587 = vunpack.c.l.b16 %v2380
  %v2588 = vunpack.c.h.b16 %v2380
  %v2589 = vunpack.c.l.b16 %v2381
  %v2590 = vunpack.c.h.b16 %v2381
  %v2591 = vunpack.c.l.b16 %v2382
  %v2592 = vunpack.c.h.b16 %v2382
  %v2593 = vunpack.c.l.b16 %v2383
  %v2594 = vunpack.c.h.b16 %v2383
  %v2595 = vunpack.c.l.b16 %v2384
  %v2596 = vunpack.c.h.b16 %v2384
  %v2597 = vunpack.c.l.b16 %v2385
  %v2598 = vunpack.c.h.b16 %v2385
  %v2599 = vunpack.c.l.b16 %v2386
  %v2600 = vunpack.c.h.b16 %v2386
  %v2601 = vpack.c.b16 %v2477, %v2473
  %v2602 = vpack.c.b16 %v2478, %v2474
  %v2603 = vpack.c.b16 %v2479, %v2475
  %v2604 = vpack.c.b16 %v2480, %v2476
  %v2605 = vpack.c.b16 %v2485, %v2481
  %v2606 = vpack.c.b16 %v2486, %v2482
  %v2607 = vpack.c.b16 %v2487, %v2483
  %v2608 = vpack.c.b16 %v2488, %v2484
  %v2609 = vpack.c.b16 %v2493, %v2489
  %v2610 = vpack.c.b16 %v2494, %v2490
  %v2611 = vpack.c.b16 %v2495, %v2491
  %v2612 = vpack.c.b16 %v2496, %v2492
  %v2613 = vpack.c.b16 %v2501, %v2497
  %v2614 = vpack.c.b16 %v2502, %v2498
  %v2615 = vpack.c.b16 %v2503, %v2499
  %v2616 = vpack.c.b16 %v2504, %v2500
  %v2617 = vpack.c.b16 %v2509, %v2505
  %v2618 = vpack.c.b16 %v2510, %v2506
  %v2619 = vpack.c.b16 %v2511, %v2507
  %v2620 = vpack.c.b16 %v2512, %v2508
  %v2621 = vpack.c.b16 %v2517, %v2513
  %v2622 = vpack.c.b16 %v2518, %v2514
  %v2623 = vpack.c.b16 %v2519, %v2515
  %v2624 = vpack.c.b16 %v2520, %v2516
  %v2625 = vpack.c.b16 %v2525, %v2521
  %v2626 = vpack.c.b16 %v2526, %v2522
  %v2627 = vpack.c.b16 %v2527, %v2523
  %v2628 = vpack.c.b16 %v2528, %v2524
  %v2629 = vpack.c.b16 %v2533, %v2529
  %v2630 = vpack.c.b16 %v2534, %v2530
  %v2631 = vpack.c.b16 %v2535, %v2531
  %v2632 = vpack.c.b16 %v2536, %v2532
  %v2633 = vpack.c.b16 %v2541, %v2537
  %v2634 = vpack.c.b16 %v2542, %v2538
  %v2635 = vpack.c.b16 %v2543, %v2539
  %v2636 = vpack.c.b16 %v2544, %v2540
  %v2637 = vpack.c.b16 %v2549, %v2545
  %v2638 = vpack.c.b16 %v2550, %v2546
  %v2639 = vpack.c.b16 %v2551, %v2547
  %v2640 = vpack.c.b16 %v2552, %v2548
  %v2641 = vpack.c.b16 %v2557, %v2553
  %v2642 = vpack.c.b16 %v2558, %v2554
  %v2643 = vpack.c.b16 %v2559, %v2555
  %v2644 = vpack.c.b16 %v2560, %v2556
  %v2645 = vpack.c.b16 %v2565, %v2561
  %v2646 = vpack.c.b16 %v2566, %v2562
  %v2647 = vpack.c.b16 %v2567, %v2563
  %v2648 = vpack.c.b16 %v2568, %v2564
  %v2649 = vpack.c.b16 %v2573, %v2569
  %v2650 = vpack.c.b16 %v2574, %v2570
  %v2651 = vpack.c.b16 %v2575, %v2571
  %v2652 = vpack.c.b16 %v2576, %v2572
  %v2653 = vpack.c.b16 %v2581, %v2577
  %v2654 = vpack.c.b16 %v2582, %v2578
  %v2655 = vpack.c.b16 %v2583, %v2579
  %v2656 = vpack.c.b16 %v2584, %v2580
  %v2657 = vpack.c.b16 %v2589, %v2585
  %v2658 = vpack.c.b16 %v2590, %v2586
  %v2659 = vpack.c.b16 %v2591, %v2587
  %v2660 = vpack.c.b16 %v2592, %v2588
  %v2661 = vpack.c.b16 %v2597, %v2593
  %v2662 = vpack.c.b16 %v2598, %v2594
  %v2663 = vpack.c.b16 %v2599, %v2595
  %v2664 = vpack.c.b16 %v2600, %v2596
  %2729 = vmatprep.subr.bf16.mxu0 %v2602
  %2730 = vmatpush1.bf16.msra.mxu0 %v2601
  %2731 = vmatprep.subr.bf16.mxu0 %v2606
  %2732 = vmatpush1.bf16.msra.mxu0 %v2605
  %2733 = vmatprep.subr.bf16.mxu0 %v2610
  %2734 = vmatpush1.bf16.msra.mxu0 %v2609
  %2735 = vmatprep.subr.bf16.mxu0 %v2614
  %2736 = vmatpush1.bf16.msra.mxu0 %v2613
  %2737 = vmatprep.subr.bf16.mxu0 %v2618
  %2738 = vmatpush1.bf16.msra.mxu0 %v2617
  %2739 = vmatprep.subr.bf16.mxu0 %v2622
  %2740 = vmatpush1.bf16.msra.mxu0 %v2621
  %2741 = vmatprep.subr.bf16.mxu0 %v2626
  %2742 = vmatpush1.bf16.msra.mxu0 %v2625
  %2743 = vmatprep.subr.bf16.mxu0 %v2630
  %2744 = vmatpush1.bf16.msra.mxu0 %v2629
  %2745 = vmatprep.subr.bf16.mxu0 %v2634
  %2746 = vmatpush1.bf16.msra.mxu0 %v2633
  %2747 = vmatprep.subr.bf16.mxu0 %v2638
  %2748 = vmatpush1.bf16.msra.mxu0 %v2637
  %2749 = vmatprep.subr.bf16.mxu0 %v2642
  %2750 = vmatpush1.bf16.msra.mxu0 %v2641
  %2751 = vmatprep.subr.bf16.mxu0 %v2646
  %2752 = vmatpush1.bf16.msra.mxu0 %v2645
  %2753 = vmatprep.subr.bf16.mxu0 %v2650
  %2754 = vmatpush1.bf16.msra.mxu0 %v2649
  %2755 = vmatprep.subr.bf16.mxu0 %v2654
  %2756 = vmatpush1.bf16.msra.mxu0 %v2653
  %2757 = vmatprep.subr.bf16.mxu0 %v2658
  %2758 = vmatpush1.bf16.msra.mxu0 %v2657
  %2759 = vmatprep.subr.bf16.mxu0 %v2662
  %2760 = vmatpush1.bf16.msra.mxu0 %v2661
  %2761 = vmatprep.mubr.bf16.mxu0 %v2322
  %2762 = vmatmul.mubr.bf16.gmra.mrb[0].mxu0 %v2321
  %v2763 = vpop.f32.mrb[0].mxu0
  %v2764 = vadd.f32 %v2392, %v2763
  %v2765 = vpop.f32.mrb[0].mxu0
  %v2766 = vadd.f32 %v2396, %v2765
  %v2767 = vpop.f32.mrb[0].mxu0
  %v2768 = vpop.f32.mrb[0].mxu0
  %2769 = vdwg.mxu0
  %2770 = vmatprep.subr.bf16.mxu0 %v2604
  %2771 = vmatpush1.bf16.msra.mxu0 %v2603
  %2772 = vmatprep.subr.bf16.mxu0 %v2608
  %2773 = vmatpush1.bf16.msra.mxu0 %v2607
  %2774 = vmatprep.subr.bf16.mxu0 %v2612
  %2775 = vmatpush1.bf16.msra.mxu0 %v2611
  %2776 = vmatprep.subr.bf16.mxu0 %v2616
  %2777 = vmatpush1.bf16.msra.mxu0 %v2615
  %2778 = vmatprep.subr.bf16.mxu0 %v2620
  %2779 = vmatpush1.bf16.msra.mxu0 %v2619
  %2780 = vmatprep.subr.bf16.mxu0 %v2624
  %2781 = vmatpush1.bf16.msra.mxu0 %v2623
  %2782 = vmatprep.subr.bf16.mxu0 %v2628
  %2783 = vmatpush1.bf16.msra.mxu0 %v2627
  %2784 = vmatprep.subr.bf16.mxu0 %v2632
  %2785 = vmatpush1.bf16.msra.mxu0 %v2631
  %2786 = vmatprep.subr.bf16.mxu0 %v2636
  %2787 = vmatpush1.bf16.msra.mxu0 %v2635
  %2788 = vmatprep.subr.bf16.mxu0 %v2640
  %2789 = vmatpush1.bf16.msra.mxu0 %v2639
  %2790 = vmatprep.subr.bf16.mxu0 %v2644
  %2791 = vmatpush1.bf16.msra.mxu0 %v2643
  %2792 = vmatprep.subr.bf16.mxu0 %v2648
  %2793 = vmatpush1.bf16.msra.mxu0 %v2647
  %2794 = vmatprep.subr.bf16.mxu0 %v2652
  %2795 = vmatpush1.bf16.msra.mxu0 %v2651
  %2796 = vmatprep.subr.bf16.mxu0 %v2656
  %2797 = vmatpush1.bf16.msra.mxu0 %v2655
  %2798 = vmatprep.subr.bf16.mxu0 %v2660
  %2799 = vmatpush1.bf16.msra.mxu0 %v2659
  %2800 = vmatprep.subr.bf16.mxu0 %v2664
  %2801 = vmatpush1.bf16.msra.mxu0 %v2663
  %2802 = vmatprep.mubr.bf16.mxu0 %v2322
  %2803 = vmatmul.mubr.bf16.gmra.mrb[0].mxu0 %v2321
  %v2804 = vpop.f32.mrb[0].mxu0
  %v2805 = vadd.f32 %v2400, %v2804
  %v2806 = vpop.f32.mrb[0].mxu0
  %v2807 = vadd.f32 %v2404, %v2806
  %v2808 = vpop.f32.mrb[0].mxu0
  %v2809 = vpop.f32.mrb[0].mxu0
  %2810 = vdwg.mxu0
  %v2811 = vxor.u32 %v2764, 2147483648
  %v2812 = vmul.f32 %v2811, 1.442695
  %v2813 = vpow.pop %v2812
  %v2814 = vadd.f32 %v2813, 1.0
  %v2815 = vrcp.pop %v2814
  %v2816 = vmul.f32 1.0, %v2815
  %v2817 = vxor.u32 %v2766, 2147483648
  %v2818 = vmul.f32 %v2817, 1.442695
  %v2819 = vpow.pop %v2818
  %v2820 = vadd.f32 %v2819, 1.0
  %v2821 = vrcp.pop %v2820
  %v2822 = vmul.f32 1.0, %v2821
  %v2823 = vxor.u32 %v2805, 2147483648
  %v2824 = vmul.f32 %v2823, 1.442695
  %v2825 = vpow.pop %v2824
  %v2826 = vadd.f32 %v2825, 1.0
  %v2827 = vrcp.pop %v2826
  %v2828 = vmul.f32 1.0, %v2827
  %v2829 = vtanh.pop %v2807
  %v2830 = vmul.f32 %v2816, %v2829
  %v2831 = vmul.f32 %v2822, %v2070
  %v2832 = vadd.f32 %v2830, %v2831
  %v2833 = vtanh.pop %v2832
  %v2834 = vmul.f32 %v2828, %v2833
  %2835 = vst [vmem:[#allocation2] sm:$0xff] %v2834
  %v2836 = vpack.c.bf16 %v2834, %v2834
  %s2837 = scalar_lea.vmem %s5, 128
  %v2838 = vld [vmem:[%s2837] sm:$0xf]
  %v2839 = vld [vmem:[%s2837 + $0x4] sm:$0xf]
  %v2840 = vld [vmem:[%s2837 + $0x8] sm:$0xf]
  %v2841 = vld [vmem:[%s2837 + $0xc] sm:$0xf]
  %v2842 = vld [vmem:[%s2837 + $0x10] sm:$0xf]
  %v2843 = vld [vmem:[%s2837 + $0x14] sm:$0xf]
  %v2844 = vld [vmem:[%s2837 + $0x18] sm:$0xf]
  %v2845 = vld [vmem:[%s2837 + $0x1c] sm:$0xf]
  %v2846 = vld [vmem:[%s2837 + $0x20] sm:$0xf]
  %v2847 = vld [vmem:[%s2837 + $0x24] sm:$0xf]
  %v2848 = vld [vmem:[%s2837 + $0x28] sm:$0xf]
  %v2849 = vld [vmem:[%s2837 + $0x2c] sm:$0xf]
  %v2850 = vld [vmem:[%s2837 + $0x30] sm:$0xf]
  %v2851 = vld [vmem:[%s2837 + $0x34] sm:$0xf]
  %v2852 = vld [vmem:[%s2837 + $0x38] sm:$0xf]
  %v2853 = vld [vmem:[%s2837 + $0x3c] sm:$0xf]
  %s2854 = scalar_lea.vmem %s6, 2
  %v2855 = vld [vmem:[%s2854] sm:$0x1]
  %v2857 = vlaneseq
  %v2858 = vshrl.u32 %v2857, 7
  %v2859 = vsub.s32 0, %v2858
  %v2860 = vrot.slane %v2855, %v2859
  %v2878 = vunpack.c.l.b16 %v2838
  %v2879 = vunpack.c.l.b16 %v2839
  %v2880 = vunpack.c.l.b16 %v2840
  %v2881 = vunpack.c.l.b16 %v2841
  %v2882 = vunpack.c.l.b16 %v2842
  %v2883 = vunpack.c.l.b16 %v2843
  %v2884 = vunpack.c.l.b16 %v2844
  %v2885 = vunpack.c.l.b16 %v2845
  %v2886 = vunpack.c.l.b16 %v2846
  %v2887 = vunpack.c.l.b16 %v2847
  %v2888 = vunpack.c.l.b16 %v2848
  %v2889 = vunpack.c.l.b16 %v2849
  %v2890 = vunpack.c.l.b16 %v2850
  %v2891 = vunpack.c.l.b16 %v2851
  %v2892 = vunpack.c.l.b16 %v2852
  %v2893 = vunpack.c.l.b16 %v2853
  %v2894 = vpack.c.b16 %v2879, %v2878
  %v2895 = vpack.c.b16 %v2881, %v2880
  %v2896 = vpack.c.b16 %v2883, %v2882
  %v2897 = vpack.c.b16 %v2885, %v2884
  %v2898 = vpack.c.b16 %v2887, %v2886
  %v2899 = vpack.c.b16 %v2889, %v2888
  %v2900 = vpack.c.b16 %v2891, %v2890
  %v2901 = vpack.c.b16 %v2893, %v2892
  %2910 = vmatprep.subr.bf16.mxu0 0
  %2911 = vmatpush1.bf16.msra.mxu0 %v2894
  %2912 = vmatprep.subr.bf16.mxu0 0
  %2913 = vmatpush1.bf16.msra.mxu0 %v2895
  %2914 = vmatprep.subr.bf16.mxu0 0
  %2915 = vmatpush1.bf16.msra.mxu0 %v2896
  %2916 = vmatprep.subr.bf16.mxu0 0
  %2917 = vmatpush1.bf16.msra.mxu0 %v2897
  %2918 = vmatprep.subr.bf16.mxu0 0
  %2919 = vmatpush1.bf16.msra.mxu0 %v2898
  %2920 = vmatprep.subr.bf16.mxu0 0
  %2921 = vmatpush1.bf16.msra.mxu0 %v2899
  %2922 = vmatprep.subr.bf16.mxu0 0
  %2923 = vmatpush1.bf16.msra.mxu0 %v2900
  %2924 = vmatprep.subr.bf16.mxu0 0
  %2925 = vmatpush1.bf16.msra.mxu0 %v2901
  %2926 = vmatprep.subr.bf16.mxu0 0
  %2927 = vmatpush1.bf16.msra.mxu0 0
  %2928 = vmatprep.subr.bf16.mxu0 0
  %2929 = vmatpush1.bf16.msra.mxu0 0
  %2930 = vmatprep.subr.bf16.mxu0 0
  %2931 = vmatpush1.bf16.msra.mxu0 0
  %2932 = vmatprep.subr.bf16.mxu0 0
  %2933 = vmatpush1.bf16.msra.mxu0 0
  %2934 = vmatprep.subr.bf16.mxu0 0
  %2935 = vmatpush1.bf16.msra.mxu0 0
  %2936 = vmatprep.subr.bf16.mxu0 0
  %2937 = vmatpush1.bf16.msra.mxu0 0
  %2938 = vmatprep.subr.bf16.mxu0 0
  %2939 = vmatpush1.bf16.msra.mxu0 0
  %2940 = vmatprep.subr.bf16.mxu0 0
  %2941 = vmatpush1.bf16.msra.mxu0 0
  %2942 = vmatprep.mubr.bf16.mxu0 0
  %2943 = vmatmul.mubr.bf16.gmra.mrb[0].mxu0 %v2836
  %v2944 = vpop.f32.mrb[0].mxu0
  %v2945 = vadd.f32 %v2860, %v2944
  %v2946 = vpop.f32.mrb[0].mxu0
  %v2947 = vpop.f32.mrb[0].mxu0
  %v2948 = vpop.f32.mrb[0].mxu0
  %2949 = vdwg.mxu0
  %2950 = vmax.xlane.f32.xlu0 %v2945
  %v2951 = vpop.xlane.xlu0 %2950
  %vm2952 = vcmp.eq.f32.partialorder %v2945, %v2951
  %v2953 = vsel %vm2952, %v667, 128
  %v2954 = vand.u32 %v2953, 65535
  %v2955 = vshra.s32 %v2953, 16
  %v2956 = vcvt.s32.f32 %v2954
  %v2957 = vcvt.s32.f32 %v2955
  %2958 = vmin.xlane.f32.xlu0 %v2957
  %v2959 = vpop.xlane.xlu0 %2958
  %vm2960 = vcmp.eq.f32.partialorder %v2957, %v2959
  %v2961 = vsel %vm2960, %v2956, inf
  %2962 = vmin.xlane.f32.xlu0 %v2961
  %v2963 = vpop.xlane.xlu0 %2962
  %v2964 = vcvt.f32.s32 %v2963
  %v2965 = vcvt.f32.s32 %v2959
  %v2966 = vshll.u32 %v2965, 16
  %v2967 = vadd.s32 %v2966, %v2964
  %vm2968 = vcmp.eq.s32.totalorder %v667, %v2967
  %v2969 = vsel %vm2968, 1, 0
  %v2970 = vcvt.s32.f32 %v2969
  %v2971 = vpack.c.bf16 %v2970, %v2970
  %v2972 = vld [vmem:[%s7] sm:$0xf]
  %v2973 = vld [vmem:[%s7 + $0x4] sm:$0xf]
  %v2974 = vld [vmem:[%s7 + $0x8] sm:$0xf]
  %v2975 = vld [vmem:[%s7 + $0xc] sm:$0xf]
  %v2976 = vld [vmem:[%s7 + $0x10] sm:$0xf]
  %v2977 = vld [vmem:[%s7 + $0x14] sm:$0xf]
  %v2978 = vld [vmem:[%s7 + $0x18] sm:$0xf]
  %v2979 = vld [vmem:[%s7 + $0x1c] sm:$0xf]
  %v2980 = vld [vmem:[%s7 + $0x20] sm:$0xf]
  %v2981 = vld [vmem:[%s7 + $0x24] sm:$0xf]
  %v2982 = vld [vmem:[%s7 + $0x28] sm:$0xf]
  %v2983 = vld [vmem:[%s7 + $0x2c] sm:$0xf]
  %v2984 = vld [vmem:[%s7 + $0x30] sm:$0xf]
  %v2985 = vld [vmem:[%s7 + $0x34] sm:$0xf]
  %v2986 = vld [vmem:[%s7 + $0x38] sm:$0xf]
  %v2987 = vld [vmem:[%s7 + $0x3c] sm:$0xf]
  %v3004 = vunpack.c.l.b16 %v2972
  %v3005 = vunpack.c.l.b16 %v2973
  %v3006 = vunpack.c.l.b16 %v2974
  %v3007 = vunpack.c.l.b16 %v2975
  %v3008 = vunpack.c.l.b16 %v2976
  %v3009 = vunpack.c.l.b16 %v2977
  %v3010 = vunpack.c.l.b16 %v2978
  %v3011 = vunpack.c.l.b16 %v2979
  %v3012 = vunpack.c.l.b16 %v2980
  %v3013 = vunpack.c.l.b16 %v2981
  %v3014 = vunpack.c.l.b16 %v2982
  %v3015 = vunpack.c.l.b16 %v2983
  %v3016 = vunpack.c.l.b16 %v2984
  %v3017 = vunpack.c.l.b16 %v2985
  %v3018 = vunpack.c.l.b16 %v2986
  %v3019 = vunpack.c.l.b16 %v2987
  %v3020 = vpack.c.b16 %v3005, %v3004
  %v3021 = vpack.c.b16 %v3007, %v3006
  %v3022 = vpack.c.b16 %v3009, %v3008
  %v3023 = vpack.c.b16 %v3011, %v3010
  %v3024 = vpack.c.b16 %v3013, %v3012
  %v3025 = vpack.c.b16 %v3015, %v3014
  %v3026 = vpack.c.b16 %v3017, %v3016
  %v3027 = vpack.c.b16 %v3019, %v3018
  %3036 = vmatprep.subr.bf16.mxu0 0
  %3037 = vmatpush1.bf16.msra.mxu0 %v3020
  %3038 = vmatprep.subr.bf16.mxu0 0
  %3039 = vmatpush1.bf16.msra.mxu0 %v3021
  %3040 = vmatprep.subr.bf16.mxu0 0
  %3041 = vmatpush1.bf16.msra.mxu0 %v3022
  %3042 = vmatprep.subr.bf16.mxu0 0
  %3043 = vmatpush1.bf16.msra.mxu0 %v3023
  %3044 = vmatprep.subr.bf16.mxu0 0
  %3045 = vmatpush1.bf16.msra.mxu0 %v3024
  %3046 = vmatprep.subr.bf16.mxu0 0
  %3047 = vmatpush1.bf16.msra.mxu0 %v3025
  %3048 = vmatprep.subr.bf16.mxu0 0
  %3049 = vmatpush1.bf16.msra.mxu0 %v3026
  %3050 = vmatprep.subr.bf16.mxu0 0
  %3051 = vmatpush1.bf16.msra.mxu0 %v3027
  %3052 = vmatprep.subr.bf16.mxu0 0
  %3053 = vmatpush1.bf16.msra.mxu0 0
  %3054 = vmatprep.subr.bf16.mxu0 0
  %3055 = vmatpush1.bf16.msra.mxu0 0
  %3056 = vmatprep.subr.bf16.mxu0 0
  %3057 = vmatpush1.bf16.msra.mxu0 0
  %3058 = vmatprep.subr.bf16.mxu0 0
  %3059 = vmatpush1.bf16.msra.mxu0 0
  %3060 = vmatprep.subr.bf16.mxu0 0
  %3061 = vmatpush1.bf16.msra.mxu0 0
  %3062 = vmatprep.subr.bf16.mxu0 0
  %3063 = vmatpush1.bf16.msra.mxu0 0
  %3064 = vmatprep.subr.bf16.mxu0 0
  %3065 = vmatpush1.bf16.msra.mxu0 0
  %3066 = vmatprep.subr.bf16.mxu0 0
  %3067 = vmatpush1.bf16.msra.mxu0 0
  %3068 = vmatprep.mubr.bf16.mxu0 0
  %3069 = vmatmul.mubr.bf16.gmra.mrb[0].mxu0 %v2971
  %v3070 = vpop.f32.mrb[0].mxu0
  %v3071 = vadd.f32 0.0, %v3070
  %v3072 = vpop.f32.mrb[0].mxu0
  %v3073 = vpop.f32.mrb[0].mxu0
  %v3074 = vpop.f32.mrb[0].mxu0
  %3075 = vdwg.mxu0
  %3076 = vst [vmem:[#allocation2 + $0x8] sm:$0xff] %v3071
  %s3077 = scalar_lea.vmem %s8, 24
  %3078 = vst [vmem:[%s3077] sm:$0xff] %v2945
  %s3079 = scalar_lea.vmem %s9, 24
  %3080 = vst [vmem:[%s3079] sm:$0xff] %v2832
  %v3081 = vld [vmem:[#allocation2] sm:$0xff]
  %v3082 = vld [vmem:[#allocation2 + $0x8] sm:$0xff]
  %v3083 = vpack.c.bf16 %v3081, %v3081
  %v3084 = vpack.c.bf16 %v3082, %v3082
  %v3085 = vld [vmem:[%s3] sm:$0xff]
  %v3086 = vld [vmem:[%s3 + $0x8] sm:$0xff]
  %v3087 = vld [vmem:[%s3 + $0x10] sm:$0xff]
  %v3088 = vld [vmem:[%s3 + $0x18] sm:$0xff]
  %v3089 = vld [vmem:[%s3 + $0x20] sm:$0xff]
  %v3090 = vld [vmem:[%s3 + $0x28] sm:$0xff]
  %v3091 = vld [vmem:[%s3 + $0x30] sm:$0xff]
  %v3092 = vld [vmem:[%s3 + $0x38] sm:$0xff]
  %v3093 = vld [vmem:[%s3 + $0x40] sm:$0xff]
  %v3094 = vld [vmem:[%s3 + $0x48] sm:$0xff]
  %v3095 = vld [vmem:[%s3 + $0x50] sm:$0xff]
  %v3096 = vld [vmem:[%s3 + $0x58] sm:$0xff]
  %v3097 = vld [vmem:[%s3 + $0x60] sm:$0xff]
  %v3098 = vld [vmem:[%s3 + $0x68] sm:$0xff]
  %v3099 = vld [vmem:[%s3 + $0x70] sm:$0xff]
  %v3100 = vld [vmem:[%s3 + $0x78] sm:$0xff]
  %v3101 = vld [vmem:[%s3 + $0x80] sm:$0xff]
  %v3102 = vld [vmem:[%s3 + $0x88] sm:$0xff]
  %v3103 = vld [vmem:[%s3 + $0x90] sm:$0xff]
  %v3104 = vld [vmem:[%s3 + $0x98] sm:$0xff]
  %v3105 = vld [vmem:[%s3 + $0xa0] sm:$0xff]
  %v3106 = vld [vmem:[%s3 + $0xa8] sm:$0xff]
  %v3107 = vld [vmem:[%s3 + $0xb0] sm:$0xff]
  %v3108 = vld [vmem:[%s3 + $0xb8] sm:$0xff]
  %v3109 = vld [vmem:[%s3 + $0xc0] sm:$0xff]
  %v3110 = vld [vmem:[%s3 + $0xc8] sm:$0xff]
  %v3111 = vld [vmem:[%s3 + $0xd0] sm:$0xff]
  %v3112 = vld [vmem:[%s3 + $0xd8] sm:$0xff]
  %v3113 = vld [vmem:[%s3 + $0xe0] sm:$0xff]
  %v3114 = vld [vmem:[%s3 + $0xe8] sm:$0xff]
  %v3115 = vld [vmem:[%s3 + $0xf0] sm:$0xff]
  %v3116 = vld [vmem:[%s3 + $0xf8] sm:$0xff]
  %v3117 = vld [vmem:[%s3 + $0x100] sm:$0xff]
  %v3118 = vld [vmem:[%s3 + $0x108] sm:$0xff]
  %v3119 = vld [vmem:[%s3 + $0x110] sm:$0xff]
  %v3120 = vld [vmem:[%s3 + $0x118] sm:$0xff]
  %v3121 = vld [vmem:[%s3 + $0x120] sm:$0xff]
  %v3122 = vld [vmem:[%s3 + $0x128] sm:$0xff]
  %v3123 = vld [vmem:[%s3 + $0x130] sm:$0xff]
  %v3124 = vld [vmem:[%s3 + $0x138] sm:$0xff]
  %v3125 = vld [vmem:[%s3 + $0x140] sm:$0xff]
  %v3126 = vld [vmem:[%s3 + $0x148] sm:$0xff]
  %v3127 = vld [vmem:[%s3 + $0x150] sm:$0xff]
  %v3128 = vld [vmem:[%s3 + $0x158] sm:$0xff]
  %v3129 = vld [vmem:[%s3 + $0x160] sm:$0xff]
  %v3130 = vld [vmem:[%s3 + $0x168] sm:$0xff]
  %v3131 = vld [vmem:[%s3 + $0x170] sm:$0xff]
  %v3132 = vld [vmem:[%s3 + $0x178] sm:$0xff]
  %v3133 = vld [vmem:[%s3 + $0x180] sm:$0xff]
  %v3134 = vld [vmem:[%s3 + $0x188] sm:$0xff]
  %v3135 = vld [vmem:[%s3 + $0x190] sm:$0xff]
  %v3136 = vld [vmem:[%s3 + $0x198] sm:$0xff]
  %v3137 = vld [vmem:[%s3 + $0x1a0] sm:$0xff]
  %v3138 = vld [vmem:[%s3 + $0x1a8] sm:$0xff]
  %v3139 = vld [vmem:[%s3 + $0x1b0] sm:$0xff]
  %v3140 = vld [vmem:[%s3 + $0x1b8] sm:$0xff]
  %v3141 = vld [vmem:[%s3 + $0x1c0] sm:$0xff]
  %v3142 = vld [vmem:[%s3 + $0x1c8] sm:$0xff]
  %v3143 = vld [vmem:[%s3 + $0x1d0] sm:$0xff]
  %v3144 = vld [vmem:[%s3 + $0x1d8] sm:$0xff]
  %v3145 = vld [vmem:[%s3 + $0x1e0] sm:$0xff]
  %v3146 = vld [vmem:[%s3 + $0x1e8] sm:$0xff]
  %v3147 = vld [vmem:[%s3 + $0x1f0] sm:$0xff]
  %v3148 = vld [vmem:[%s3 + $0x1f8] sm:$0xff]
  %v3149 = vld [vmem:[%s4] sm:$0xf]
  %v3151 = vlaneseq
  %v3152 = vshrl.u32 %v3151, 7
  %v3153 = vsub.s32 0, %v3152
  %v3154 = vrot.slane %v3149, %v3153
  %v3155 = vlaneseq
  %v3156 = vshrl.u32 %v3155, 7
  %v3157 = vsub.s32 1, %v3156
  %v3158 = vrot.slane %v3149, %v3157
  %v3159 = vlaneseq
  %v3160 = vshrl.u32 %v3159, 7
  %v3161 = vsub.s32 2, %v3160
  %v3162 = vrot.slane %v3149, %v3161
  %v3163 = vlaneseq
  %v3164 = vshrl.u32 %v3163, 7
  %v3165 = vsub.s32 3, %v3164
  %v3166 = vrot.slane %v3149, %v3165
  %v3235 = vunpack.c.l.b16 %v3085
  %v3236 = vunpack.c.h.b16 %v3085
  %v3237 = vunpack.c.l.b16 %v3086
  %v3238 = vunpack.c.h.b16 %v3086
  %v3239 = vunpack.c.l.b16 %v3087
  %v3240 = vunpack.c.h.b16 %v3087
  %v3241 = vunpack.c.l.b16 %v3088
  %v3242 = vunpack.c.h.b16 %v3088
  %v3243 = vunpack.c.l.b16 %v3089
  %v3244 = vunpack.c.h.b16 %v3089
  %v3245 = vunpack.c.l.b16 %v3090
  %v3246 = vunpack.c.h.b16 %v3090
  %v3247 = vunpack.c.l.b16 %v3091
  %v3248 = vunpack.c.h.b16 %v3091
  %v3249 = vunpack.c.l.b16 %v3092
  %v3250 = vunpack.c.h.b16 %v3092
  %v3251 = vunpack.c.l.b16 %v3093
  %v3252 = vunpack.c.h.b16 %v3093
  %v3253 = vunpack.c.l.b16 %v3094
  %v3254 = vunpack.c.h.b16 %v3094
  %v3255 = vunpack.c.l.b16 %v3095
  %v3256 = vunpack.c.h.b16 %v3095
  %v3257 = vunpack.c.l.b16 %v3096
  %v3258 = vunpack.c.h.b16 %v3096
  %v3259 = vunpack.c.l.b16 %v3097
  %v3260 = vunpack.c.h.b16 %v3097
  %v3261 = vunpack.c.l.b16 %v3098
  %v3262 = vunpack.c.h.b16 %v3098
  %v3263 = vunpack.c.l.b16 %v3099
  %v3264 = vunpack.c.h.b16 %v3099
  %v3265 = vunpack.c.l.b16 %v3100
  %v3266 = vunpack.c.h.b16 %v3100
  %v3267 = vunpack.c.l.b16 %v3101
  %v3268 = vunpack.c.h.b16 %v3101
  %v3269 = vunpack.c.l.b16 %v3102
  %v3270 = vunpack.c.h.b16 %v3102
  %v3271 = vunpack.c.l.b16 %v3103
  %v3272 = vunpack.c.h.b16 %v3103
  %v3273 = vunpack.c.l.b16 %v3104
  %v3274 = vunpack.c.h.b16 %v3104
  %v3275 = vunpack.c.l.b16 %v3105
  %v3276 = vunpack.c.h.b16 %v3105
  %v3277 = vunpack.c.l.b16 %v3106
  %v3278 = vunpack.c.h.b16 %v3106
  %v3279 = vunpack.c.l.b16 %v3107
  %v3280 = vunpack.c.h.b16 %v3107
  %v3281 = vunpack.c.l.b16 %v3108
  %v3282 = vunpack.c.h.b16 %v3108
  %v3283 = vunpack.c.l.b16 %v3109
  %v3284 = vunpack.c.h.b16 %v3109
  %v3285 = vunpack.c.l.b16 %v3110
  %v3286 = vunpack.c.h.b16 %v3110
  %v3287 = vunpack.c.l.b16 %v3111
  %v3288 = vunpack.c.h.b16 %v3111
  %v3289 = vunpack.c.l.b16 %v3112
  %v3290 = vunpack.c.h.b16 %v3112
  %v3291 = vunpack.c.l.b16 %v3113
  %v3292 = vunpack.c.h.b16 %v3113
  %v3293 = vunpack.c.l.b16 %v3114
  %v3294 = vunpack.c.h.b16 %v3114
  %v3295 = vunpack.c.l.b16 %v3115
  %v3296 = vunpack.c.h.b16 %v3115
  %v3297 = vunpack.c.l.b16 %v3116
  %v3298 = vunpack.c.h.b16 %v3116
  %v3299 = vunpack.c.l.b16 %v3117
  %v3300 = vunpack.c.h.b16 %v3117
  %v3301 = vunpack.c.l.b16 %v3118
  %v3302 = vunpack.c.h.b16 %v3118
  %v3303 = vunpack.c.l.b16 %v3119
  %v3304 = vunpack.c.h.b16 %v3119
  %v3305 = vunpack.c.l.b16 %v3120
  %v3306 = vunpack.c.h.b16 %v3120
  %v3307 = vunpack.c.l.b16 %v3121
  %v3308 = vunpack.c.h.b16 %v3121
  %v3309 = vunpack.c.l.b16 %v3122
  %v3310 = vunpack.c.h.b16 %v3122
  %v3311 = vunpack.c.l.b16 %v3123
  %v3312 = vunpack.c.h.b16 %v3123
  %v3313 = vunpack.c.l.b16 %v3124
  %v3314 = vunpack.c.h.b16 %v3124
  %v3315 = vunpack.c.l.b16 %v3125
  %v3316 = vunpack.c.h.b16 %v3125
  %v3317 = vunpack.c.l.b16 %v3126
  %v3318 = vunpack.c.h.b16 %v3126
  %v3319 = vunpack.c.l.b16 %v3127
  %v3320 = vunpack.c.h.b16 %v3127
  %v3321 = vunpack.c.l.b16 %v3128
  %v3322 = vunpack.c.h.b16 %v3128
  %v3323 = vunpack.c.l.b16 %v3129
  %v3324 = vunpack.c.h.b16 %v3129
  %v3325 = vunpack.c.l.b16 %v3130
  %v3326 = vunpack.c.h.b16 %v3130
  %v3327 = vunpack.c.l.b16 %v3131
  %v3328 = vunpack.c.h.b16 %v3131
  %v3329 = vunpack.c.l.b16 %v3132
  %v3330 = vunpack.c.h.b16 %v3132
  %v3331 = vunpack.c.l.b16 %v3133
  %v3332 = vunpack.c.h.b16 %v3133
  %v3333 = vunpack.c.l.b16 %v3134
  %v3334 = vunpack.c.h.b16 %v3134
  %v3335 = vunpack.c.l.b16 %v3135
  %v3336 = vunpack.c.h.b16 %v3135
  %v3337 = vunpack.c.l.b16 %v3136
  %v3338 = vunpack.c.h.b16 %v3136
  %v3339 = vunpack.c.l.b16 %v3137
  %v3340 = vunpack.c.h.b16 %v3137
  %v3341 = vunpack.c.l.b16 %v3138
  %v3342 = vunpack.c.h.b16 %v3138
  %v3343 = vunpack.c.l.b16 %v3139
  %v3344 = vunpack.c.h.b16 %v3139
  %v3345 = vunpack.c.l.b16 %v3140
  %v3346 = vunpack.c.h.b16 %v3140
  %v3347 = vunpack.c.l.b16 %v3141
  %v3348 = vunpack.c.h.b16 %v3141
  %v3349 = vunpack.c.l.b16 %v3142
  %v3350 = vunpack.c.h.b16 %v3142
  %v3351 = vunpack.c.l.b16 %v3143
  %v3352 = vunpack.c.h.b16 %v3143
  %v3353 = vunpack.c.l.b16 %v3144
  %v3354 = vunpack.c.h.b16 %v3144
  %v3355 = vunpack.c.l.b16 %v3145
  %v3356 = vunpack.c.h.b16 %v3145
  %v3357 = vunpack.c.l.b16 %v3146
  %v3358 = vunpack.c.h.b16 %v3146
  %v3359 = vunpack.c.l.b16 %v3147
  %v3360 = vunpack.c.h.b16 %v3147
  %v3361 = vunpack.c.l.b16 %v3148
  %v3362 = vunpack.c.h.b16 %v3148
  %v3363 = vpack.c.b16 %v3239, %v3235
  %v3364 = vpack.c.b16 %v3240, %v3236
  %v3365 = vpack.c.b16 %v3241, %v3237
  %v3366 = vpack.c.b16 %v3242, %v3238
  %v3367 = vpack.c.b16 %v3247, %v3243
  %v3368 = vpack.c.b16 %v3248, %v3244
  %v3369 = vpack.c.b16 %v3249, %v3245
  %v3370 = vpack.c.b16 %v3250, %v3246
  %v3371 = vpack.c.b16 %v3255, %v3251
  %v3372 = vpack.c.b16 %v3256, %v3252
  %v3373 = vpack.c.b16 %v3257, %v3253
  %v3374 = vpack.c.b16 %v3258, %v3254
  %v3375 = vpack.c.b16 %v3263, %v3259
  %v3376 = vpack.c.b16 %v3264, %v3260
  %v3377 = vpack.c.b16 %v3265, %v3261
  %v3378 = vpack.c.b16 %v3266, %v3262
  %v3379 = vpack.c.b16 %v3271, %v3267
  %v3380 = vpack.c.b16 %v3272, %v3268
  %v3381 = vpack.c.b16 %v3273, %v3269
  %v3382 = vpack.c.b16 %v3274, %v3270
  %v3383 = vpack.c.b16 %v3279, %v3275
  %v3384 = vpack.c.b16 %v3280, %v3276
  %v3385 = vpack.c.b16 %v3281, %v3277
  %v3386 = vpack.c.b16 %v3282, %v3278
  %v3387 = vpack.c.b16 %v3287, %v3283
  %v3388 = vpack.c.b16 %v3288, %v3284
  %v3389 = vpack.c.b16 %v3289, %v3285
  %v3390 = vpack.c.b16 %v3290, %v3286
  %v3391 = vpack.c.b16 %v3295, %v3291
  %v3392 = vpack.c.b16 %v3296, %v3292
  %v3393 = vpack.c.b16 %v3297, %v3293
  %v3394 = vpack.c.b16 %v3298, %v3294
  %v3395 = vpack.c.b16 %v3303, %v3299
  %v3396 = vpack.c.b16 %v3304, %v3300
  %v3397 = vpack.c.b16 %v3305, %v3301
  %v3398 = vpack.c.b16 %v3306, %v3302
  %v3399 = vpack.c.b16 %v3311, %v3307
  %v3400 = vpack.c.b16 %v3312, %v3308
  %v3401 = vpack.c.b16 %v3313, %v3309
  %v3402 = vpack.c.b16 %v3314, %v3310
  %v3403 = vpack.c.b16 %v3319, %v3315
  %v3404 = vpack.c.b16 %v3320, %v3316
  %v3405 = vpack.c.b16 %v3321, %v3317
  %v3406 = vpack.c.b16 %v3322, %v3318
  %v3407 = vpack.c.b16 %v3327, %v3323
  %v3408 = vpack.c.b16 %v3328, %v3324
  %v3409 = vpack.c.b16 %v3329, %v3325
  %v3410 = vpack.c.b16 %v3330, %v3326
  %v3411 = vpack.c.b16 %v3335, %v3331
  %v3412 = vpack.c.b16 %v3336, %v3332
  %v3413 = vpack.c.b16 %v3337, %v3333
  %v3414 = vpack.c.b16 %v3338, %v3334
  %v3415 = vpack.c.b16 %v3343, %v3339
  %v3416 = vpack.c.b16 %v3344, %v3340
  %v3417 = vpack.c.b16 %v3345, %v3341
  %v3418 = vpack.c.b16 %v3346, %v3342
  %v3419 = vpack.c.b16 %v3351, %v3347
  %v3420 = vpack.c.b16 %v3352, %v3348
  %v3421 = vpack.c.b16 %v3353, %v3349
  %v3422 = vpack.c.b16 %v3354, %v3350
  %v3423 = vpack.c.b16 %v3359, %v3355
  %v3424 = vpack.c.b16 %v3360, %v3356
  %v3425 = vpack.c.b16 %v3361, %v3357
  %v3426 = vpack.c.b16 %v3362, %v3358
  %3491 = vmatprep.subr.bf16.mxu0 %v3364
  %3492 = vmatpush1.bf16.msra.mxu0 %v3363
  %3493 = vmatprep.subr.bf16.mxu0 %v3368
  %3494 = vmatpush1.bf16.msra.mxu0 %v3367
  %3495 = vmatprep.subr.bf16.mxu0 %v3372
  %3496 = vmatpush1.bf16.msra.mxu0 %v3371
  %3497 = vmatprep.subr.bf16.mxu0 %v3376
  %3498 = vmatpush1.bf16.msra.mxu0 %v3375
  %3499 = vmatprep.subr.bf16.mxu0 %v3380
  %3500 = vmatpush1.bf16.msra.mxu0 %v3379
  %3501 = vmatprep.subr.bf16.mxu0 %v3384
  %3502 = vmatpush1.bf16.msra.mxu0 %v3383
  %3503 = vmatprep.subr.bf16.mxu0 %v3388
  %3504 = vmatpush1.bf16.msra.mxu0 %v3387
  %3505 = vmatprep.subr.bf16.mxu0 %v3392
  %3506 = vmatpush1.bf16.msra.mxu0 %v3391
  %3507 = vmatprep.subr.bf16.mxu0 %v3396
  %3508 = vmatpush1.bf16.msra.mxu0 %v3395
  %3509 = vmatprep.subr.bf16.mxu0 %v3400
  %3510 = vmatpush1.bf16.msra.mxu0 %v3399
  %3511 = vmatprep.subr.bf16.mxu0 %v3404
  %3512 = vmatpush1.bf16.msra.mxu0 %v3403
  %3513 = vmatprep.subr.bf16.mxu0 %v3408
  %3514 = vmatpush1.bf16.msra.mxu0 %v3407
  %3515 = vmatprep.subr.bf16.mxu0 %v3412
  %3516 = vmatpush1.bf16.msra.mxu0 %v3411
  %3517 = vmatprep.subr.bf16.mxu0 %v3416
  %3518 = vmatpush1.bf16.msra.mxu0 %v3415
  %3519 = vmatprep.subr.bf16.mxu0 %v3420
  %3520 = vmatpush1.bf16.msra.mxu0 %v3419
  %3521 = vmatprep.subr.bf16.mxu0 %v3424
  %3522 = vmatpush1.bf16.msra.mxu0 %v3423
  %3523 = vmatprep.mubr.bf16.mxu0 %v3084
  %3524 = vmatmul.mubr.bf16.gmra.mrb[0].mxu0 %v3083
  %v3525 = vpop.f32.mrb[0].mxu0
  %v3526 = vadd.f32 %v3154, %v3525
  %v3527 = vpop.f32.mrb[0].mxu0
  %v3528 = vadd.f32 %v3158, %v3527
  %v3529 = vpop.f32.mrb[0].mxu0
  %v3530 = vpop.f32.mrb[0].mxu0
  %3531 = vdwg.mxu0
  %3532 = vmatprep.subr.bf16.mxu0 %v3366
  %3533 = vmatpush1.bf16.msra.mxu0 %v3365
  %3534 = vmatprep.subr.bf16.mxu0 %v3370
  %3535 = vmatpush1.bf16.msra.mxu0 %v3369
  %3536 = vmatprep.subr.bf16.mxu0 %v3374
  %3537 = vmatpush1.bf16.msra.mxu0 %v3373
  %3538 = vmatprep.subr.bf16.mxu0 %v3378
  %3539 = vmatpush1.bf16.msra.mxu0 %v3377
  %3540 = vmatprep.subr.bf16.mxu0 %v3382
  %3541 = vmatpush1.bf16.msra.mxu0 %v3381
  %3542 = vmatprep.subr.bf16.mxu0 %v3386
  %3543 = vmatpush1.bf16.msra.mxu0 %v3385
  %3544 = vmatprep.subr.bf16.mxu0 %v3390
  %3545 = vmatpush1.bf16.msra.mxu0 %v3389
  %3546 = vmatprep.subr.bf16.mxu0 %v3394
  %3547 = vmatpush1.bf16.msra.mxu0 %v3393
  %3548 = vmatprep.subr.bf16.mxu0 %v3398
  %3549 = vmatpush1.bf16.msra.mxu0 %v3397
  %3550 = vmatprep.subr.bf16.mxu0 %v3402
  %3551 = vmatpush1.bf16.msra.mxu0 %v3401
  %3552 = vmatprep.subr.bf16.mxu0 %v3406
  %3553 = vmatpush1.bf16.msra.mxu0 %v3405
  %3554 = vmatprep.subr.bf16.mxu0 %v3410
  %3555 = vmatpush1.bf16.msra.mxu0 %v3409
  %3556 = vmatprep.subr.bf16.mxu0 %v3414
  %3557 = vmatpush1.bf16.msra.mxu0 %v3413
  %3558 = vmatprep.subr.bf16.mxu0 %v3418
  %3559 = vmatpush1.bf16.msra.mxu0 %v3417
  %3560 = vmatprep.subr.bf16.mxu0 %v3422
  %3561 = vmatpush1.bf16.msra.mxu0 %v3421
  %3562 = vmatprep.subr.bf16.mxu0 %v3426
  %3563 = vmatpush1.bf16.msra.mxu0 %v3425
  %3564 = vmatprep.mubr.bf16.mxu0 %v3084
  %3565 = vmatmul.mubr.bf16.gmra.mrb[0].mxu0 %v3083
  %v3566 = vpop.f32.mrb[0].mxu0
  %v3567 = vadd.f32 %v3162, %v3566
  %v3568 = vpop.f32.mrb[0].mxu0
  %v3569 = vadd.f32 %v3166, %v3568
  %v3570 = vpop.f32.mrb[0].mxu0
  %v3571 = vpop.f32.mrb[0].mxu0
  %3572 = vdwg.mxu0
  %v3573 = vxor.u32 %v3526, 2147483648
  %v3574 = vmul.f32 %v3573, 1.442695
  %v3575 = vpow.pop %v3574
  %v3576 = vadd.f32 %v3575, 1.0
  %v3577 = vrcp.pop %v3576
  %v3578 = vmul.f32 1.0, %v3577
  %v3579 = vxor.u32 %v3528, 2147483648
  %v3580 = vmul.f32 %v3579, 1.442695
  %v3581 = vpow.pop %v3580
  %v3582 = vadd.f32 %v3581, 1.0
  %v3583 = vrcp.pop %v3582
  %v3584 = vmul.f32 1.0, %v3583
  %v3585 = vxor.u32 %v3567, 2147483648
  %v3586 = vmul.f32 %v3585, 1.442695
  %v3587 = vpow.pop %v3586
  %v3588 = vadd.f32 %v3587, 1.0
  %v3589 = vrcp.pop %v3588
  %v3590 = vmul.f32 1.0, %v3589
  %v3591 = vtanh.pop %v3569
  %v3592 = vmul.f32 %v3578, %v3591
  %v3593 = vmul.f32 %v3584, %v2832
  %v3594 = vadd.f32 %v3592, %v3593
  %v3595 = vtanh.pop %v3594
  %v3596 = vmul.f32 %v3590, %v3595
  %3597 = vst [vmem:[#allocation2] sm:$0xff] %v3596
  %v3598 = vpack.c.bf16 %v3596, %v3596
  %s3599 = scalar_lea.vmem %s5, 192
  %v3600 = vld [vmem:[%s3599] sm:$0xf]
  %v3601 = vld [vmem:[%s3599 + $0x4] sm:$0xf]
  %v3602 = vld [vmem:[%s3599 + $0x8] sm:$0xf]
  %v3603 = vld [vmem:[%s3599 + $0xc] sm:$0xf]
  %v3604 = vld [vmem:[%s3599 + $0x10] sm:$0xf]
  %v3605 = vld [vmem:[%s3599 + $0x14] sm:$0xf]
  %v3606 = vld [vmem:[%s3599 + $0x18] sm:$0xf]
  %v3607 = vld [vmem:[%s3599 + $0x1c] sm:$0xf]
  %v3608 = vld [vmem:[%s3599 + $0x20] sm:$0xf]
  %v3609 = vld [vmem:[%s3599 + $0x24] sm:$0xf]
  %v3610 = vld [vmem:[%s3599 + $0x28] sm:$0xf]
  %v3611 = vld [vmem:[%s3599 + $0x2c] sm:$0xf]
  %v3612 = vld [vmem:[%s3599 + $0x30] sm:$0xf]
  %v3613 = vld [vmem:[%s3599 + $0x34] sm:$0xf]
  %v3614 = vld [vmem:[%s3599 + $0x38] sm:$0xf]
  %v3615 = vld [vmem:[%s3599 + $0x3c] sm:$0xf]
  %s3616 = scalar_lea.vmem %s6, 3
  %v3617 = vld [vmem:[%s3616] sm:$0x1]
  %v3619 = vlaneseq
  %v3620 = vshrl.u32 %v3619, 7
  %v3621 = vsub.s32 0, %v3620
  %v3622 = vrot.slane %v3617, %v3621
  %v3640 = vunpack.c.l.b16 %v3600
  %v3641 = vunpack.c.l.b16 %v3601
  %v3642 = vunpack.c.l.b16 %v3602
  %v3643 = vunpack.c.l.b16 %v3603
  %v3644 = vunpack.c.l.b16 %v3604
  %v3645 = vunpack.c.l.b16 %v3605
  %v3646 = vunpack.c.l.b16 %v3606
  %v3647 = vunpack.c.l.b16 %v3607
  %v3648 = vunpack.c.l.b16 %v3608
  %v3649 = vunpack.c.l.b16 %v3609
  %v3650 = vunpack.c.l.b16 %v3610
  %v3651 = vunpack.c.l.b16 %v3611
  %v3652 = vunpack.c.l.b16 %v3612
  %v3653 = vunpack.c.l.b16 %v3613
  %v3654 = vunpack.c.l.b16 %v3614
  %v3655 = vunpack.c.l.b16 %v3615
  %v3656 = vpack.c.b16 %v3641, %v3640
  %v3657 = vpack.c.b16 %v3643, %v3642
  %v3658 = vpack.c.b16 %v3645, %v3644
  %v3659 = vpack.c.b16 %v3647, %v3646
  %v3660 = vpack.c.b16 %v3649, %v3648
  %v3661 = vpack.c.b16 %v3651, %v3650
  %v3662 = vpack.c.b16 %v3653, %v3652
  %v3663 = vpack.c.b16 %v3655, %v3654
  %3672 = vmatprep.subr.bf16.mxu0 0
  %3673 = vmatpush1.bf16.msra.mxu0 %v3656
  %3674 = vmatprep.subr.bf16.mxu0 0
  %3675 = vmatpush1.bf16.msra.mxu0 %v3657
  %3676 = vmatprep.subr.bf16.mxu0 0
  %3677 = vmatpush1.bf16.msra.mxu0 %v3658
  %3678 = vmatprep.subr.bf16.mxu0 0
  %3679 = vmatpush1.bf16.msra.mxu0 %v3659
  %3680 = vmatprep.subr.bf16.mxu0 0
  %3681 = vmatpush1.bf16.msra.mxu0 %v3660
  %3682 = vmatprep.subr.bf16.mxu0 0
  %3683 = vmatpush1.bf16.msra.mxu0 %v3661
  %3684 = vmatprep.subr.bf16.mxu0 0
  %3685 = vmatpush1.bf16.msra.mxu0 %v3662
  %3686 = vmatprep.subr.bf16.mxu0 0
  %3687 = vmatpush1.bf16.msra.mxu0 %v3663
  %3688 = vmatprep.subr.bf16.mxu0 0
  %3689 = vmatpush1.bf16.msra.mxu0 0
  %3690 = vmatprep.subr.bf16.mxu0 0
  %3691 = vmatpush1.bf16.msra.mxu0 0
  %3692 = vmatprep.subr.bf16.mxu0 0
  %3693 = vmatpush1.bf16.msra.mxu0 0
  %3694 = vmatprep.subr.bf16.mxu0 0
  %3695 = vmatpush1.bf16.msra.mxu0 0
  %3696 = vmatprep.subr.bf16.mxu0 0
  %3697 = vmatpush1.bf16.msra.mxu0 0
  %3698 = vmatprep.subr.bf16.mxu0 0
  %3699 = vmatpush1.bf16.msra.mxu0 0
  %3700 = vmatprep.subr.bf16.mxu0 0
  %3701 = vmatpush1.bf16.msra.mxu0 0
  %3702 = vmatprep.subr.bf16.mxu0 0
  %3703 = vmatpush1.bf16.msra.mxu0 0
  %3704 = vmatprep.mubr.bf16.mxu0 0
  %3705 = vmatmul.mubr.bf16.gmra.mrb[0].mxu0 %v3598
  %v3706 = vpop.f32.mrb[0].mxu0
  %v3707 = vadd.f32 %v3622, %v3706
  %v3708 = vpop.f32.mrb[0].mxu0
  %v3709 = vpop.f32.mrb[0].mxu0
  %v3710 = vpop.f32.mrb[0].mxu0
  %3711 = vdwg.mxu0
  %3712 = vmax.xlane.f32.xlu0 %v3707
  %v3713 = vpop.xlane.xlu0 %3712
  %vm3714 = vcmp.eq.f32.partialorder %v3707, %v3713
  %v3715 = vsel %vm3714, %v667, 128
  %v3716 = vand.u32 %v3715, 65535
  %v3717 = vshra.s32 %v3715, 16
  %v3718 = vcvt.s32.f32 %v3716
  %v3719 = vcvt.s32.f32 %v3717
  %3720 = vmin.xlane.f32.xlu0 %v3719
  %v3721 = vpop.xlane.xlu0 %3720
  %vm3722 = vcmp.eq.f32.partialorder %v3719, %v3721
  %v3723 = vsel %vm3722, %v3718, inf
  %3724 = vmin.xlane.f32.xlu0 %v3723
  %v3725 = vpop.xlane.xlu0 %3724
  %v3726 = vcvt.f32.s32 %v3725
  %v3727 = vcvt.f32.s32 %v3721
  %v3728 = vshll.u32 %v3727, 16
  %v3729 = vadd.s32 %v3728, %v3726
  %vm3730 = vcmp.eq.s32.totalorder %v667, %v3729
  %v3731 = vsel %vm3730, 1, 0
  %v3732 = vcvt.s32.f32 %v3731
  %v3733 = vpack.c.bf16 %v3732, %v3732
  %v3734 = vld [vmem:[%s7] sm:$0xf]
  %v3735 = vld [vmem:[%s7 + $0x4] sm:$0xf]
  %v3736 = vld [vmem:[%s7 + $0x8] sm:$0xf]
  %v3737 = vld [vmem:[%s7 + $0xc] sm:$0xf]
  %v3738 = vld [vmem:[%s7 + $0x10] sm:$0xf]
  %v3739 = vld [vmem:[%s7 + $0x14] sm:$0xf]
  %v3740 = vld [vmem:[%s7 + $0x18] sm:$0xf]
  %v3741 = vld [vmem:[%s7 + $0x1c] sm:$0xf]
  %v3742 = vld [vmem:[%s7 + $0x20] sm:$0xf]
  %v3743 = vld [vmem:[%s7 + $0x24] sm:$0xf]
  %v3744 = vld [vmem:[%s7 + $0x28] sm:$0xf]
  %v3745 = vld [vmem:[%s7 + $0x2c] sm:$0xf]
  %v3746 = vld [vmem:[%s7 + $0x30] sm:$0xf]
  %v3747 = vld [vmem:[%s7 + $0x34] sm:$0xf]
  %v3748 = vld [vmem:[%s7 + $0x38] sm:$0xf]
  %v3749 = vld [vmem:[%s7 + $0x3c] sm:$0xf]
  %v3766 = vunpack.c.l.b16 %v3734
  %v3767 = vunpack.c.l.b16 %v3735
  %v3768 = vunpack.c.l.b16 %v3736
  %v3769 = vunpack.c.l.b16 %v3737
  %v3770 = vunpack.c.l.b16 %v3738
  %v3771 = vunpack.c.l.b16 %v3739
  %v3772 = vunpack.c.l.b16 %v3740
  %v3773 = vunpack.c.l.b16 %v3741
  %v3774 = vunpack.c.l.b16 %v3742
  %v3775 = vunpack.c.l.b16 %v3743
  %v3776 = vunpack.c.l.b16 %v3744
  %v3777 = vunpack.c.l.b16 %v3745
  %v3778 = vunpack.c.l.b16 %v3746
  %v3779 = vunpack.c.l.b16 %v3747
  %v3780 = vunpack.c.l.b16 %v3748
  %v3781 = vunpack.c.l.b16 %v3749
  %v3782 = vpack.c.b16 %v3767, %v3766
  %v3783 = vpack.c.b16 %v3769, %v3768
  %v3784 = vpack.c.b16 %v3771, %v3770
  %v3785 = vpack.c.b16 %v3773, %v3772
  %v3786 = vpack.c.b16 %v3775, %v3774
  %v3787 = vpack.c.b16 %v3777, %v3776
  %v3788 = vpack.c.b16 %v3779, %v3778
  %v3789 = vpack.c.b16 %v3781, %v3780
  %3798 = vmatprep.subr.bf16.mxu0 0
  %3799 = vmatpush1.bf16.msra.mxu0 %v3782
  %3800 = vmatprep.subr.bf16.mxu0 0
  %3801 = vmatpush1.bf16.msra.mxu0 %v3783
  %3802 = vmatprep.subr.bf16.mxu0 0
  %3803 = vmatpush1.bf16.msra.mxu0 %v3784
  %3804 = vmatprep.subr.bf16.mxu0 0
  %3805 = vmatpush1.bf16.msra.mxu0 %v3785
  %3806 = vmatprep.subr.bf16.mxu0 0
  %3807 = vmatpush1.bf16.msra.mxu0 %v3786
  %3808 = vmatprep.subr.bf16.mxu0 0
  %3809 = vmatpush1.bf16.msra.mxu0 %v3787
  %3810 = vmatprep.subr.bf16.mxu0 0
  %3811 = vmatpush1.bf16.msra.mxu0 %v3788
  %3812 = vmatprep.subr.bf16.mxu0 0
  %3813 = vmatpush1.bf16.msra.mxu0 %v3789
  %3814 = vmatprep.subr.bf16.mxu0 0
  %3815 = vmatpush1.bf16.msra.mxu0 0
  %3816 = vmatprep.subr.bf16.mxu0 0
  %3817 = vmatpush1.bf16.msra.mxu0 0
  %3818 = vmatprep.subr.bf16.mxu0 0
  %3819 = vmatpush1.bf16.msra.mxu0 0
  %3820 = vmatprep.subr.bf16.mxu0 0
  %3821 = vmatpush1.bf16.msra.mxu0 0
  %3822 = vmatprep.subr.bf16.mxu0 0
  %3823 = vmatpush1.bf16.msra.mxu0 0
  %3824 = vmatprep.subr.bf16.mxu0 0
  %3825 = vmatpush1.bf16.msra.mxu0 0
  %3826 = vmatprep.subr.bf16.mxu0 0
  %3827 = vmatpush1.bf16.msra.mxu0 0
  %3828 = vmatprep.subr.bf16.mxu0 0
  %3829 = vmatpush1.bf16.msra.mxu0 0
  %3830 = vmatprep.mubr.bf16.mxu0 0
  %3831 = vmatmul.mubr.bf16.gmra.mrb[0].mxu0 %v3733
  %v3832 = vpop.f32.mrb[0].mxu0
  %v3833 = vadd.f32 0.0, %v3832
  %v3834 = vpop.f32.mrb[0].mxu0
  %v3835 = vpop.f32.mrb[0].mxu0
  %v3836 = vpop.f32.mrb[0].mxu0
  %3837 = vdwg.mxu0
  %3838 = vst [vmem:[#allocation2 + $0x8] sm:$0xff] %v3833
  %s3839 = scalar_lea.vmem %s8, 32
  %3840 = vst [vmem:[%s3839] sm:$0xff] %v3707
  %s3841 = scalar_lea.vmem %s9, 32
  %3842 = vst [vmem:[%s3841] sm:$0xff] %v3594
  %v3843 = vld [vmem:[#allocation2] sm:$0xff]
  %v3844 = vld [vmem:[#allocation2 + $0x8] sm:$0xff]
  %v3845 = vpack.c.bf16 %v3843, %v3843
  %v3846 = vpack.c.bf16 %v3844, %v3844
  %v3847 = vld [vmem:[%s3] sm:$0xff]
  %v3848 = vld [vmem:[%s3 + $0x8] sm:$0xff]
  %v3849 = vld [vmem:[%s3 + $0x10] sm:$0xff]
  %v3850 = vld [vmem:[%s3 + $0x18] sm:$0xff]
  %v3851 = vld [vmem:[%s3 + $0x20] sm:$0xff]
  %v3852 = vld [vmem:[%s3 + $0x28] sm:$0xff]
  %v3853 = vld [vmem:[%s3 + $0x30] sm:$0xff]
  %v3854 = vld [vmem:[%s3 + $0x38] sm:$0xff]
  %v3855 = vld [vmem:[%s3 + $0x40] sm:$0xff]
  %v3856 = vld [vmem:[%s3 + $0x48] sm:$0xff]
  %v3857 = vld [vmem:[%s3 + $0x50] sm:$0xff]
  %v3858 = vld [vmem:[%s3 + $0x58] sm:$0xff]
  %v3859 = vld [vmem:[%s3 + $0x60] sm:$0xff]
  %v3860 = vld [vmem:[%s3 + $0x68] sm:$0xff]
  %v3861 = vld [vmem:[%s3 + $0x70] sm:$0xff]
  %v3862 = vld [vmem:[%s3 + $0x78] sm:$0xff]
  %v3863 = vld [vmem:[%s3 + $0x80] sm:$0xff]
  %v3864 = vld [vmem:[%s3 + $0x88] sm:$0xff]
  %v3865 = vld [vmem:[%s3 + $0x90] sm:$0xff]
  %v3866 = vld [vmem:[%s3 + $0x98] sm:$0xff]
  %v3867 = vld [vmem:[%s3 + $0xa0] sm:$0xff]
  %v3868 = vld [vmem:[%s3 + $0xa8] sm:$0xff]
  %v3869 = vld [vmem:[%s3 + $0xb0] sm:$0xff]
  %v3870 = vld [vmem:[%s3 + $0xb8] sm:$0xff]
  %v3871 = vld [vmem:[%s3 + $0xc0] sm:$0xff]
  %v3872 = vld [vmem:[%s3 + $0xc8] sm:$0xff]
  %v3873 = vld [vmem:[%s3 + $0xd0] sm:$0xff]
  %v3874 = vld [vmem:[%s3 + $0xd8] sm:$0xff]
  %v3875 = vld [vmem:[%s3 + $0xe0] sm:$0xff]
  %v3876 = vld [vmem:[%s3 + $0xe8] sm:$0xff]
  %v3877 = vld [vmem:[%s3 + $0xf0] sm:$0xff]
  %v3878 = vld [vmem:[%s3 + $0xf8] sm:$0xff]
  %v3879 = vld [vmem:[%s3 + $0x100] sm:$0xff]
  %v3880 = vld [vmem:[%s3 + $0x108] sm:$0xff]
  %v3881 = vld [vmem:[%s3 + $0x110] sm:$0xff]
  %v3882 = vld [vmem:[%s3 + $0x118] sm:$0xff]
  %v3883 = vld [vmem:[%s3 + $0x120] sm:$0xff]
  %v3884 = vld [vmem:[%s3 + $0x128] sm:$0xff]
  %v3885 = vld [vmem:[%s3 + $0x130] sm:$0xff]
  %v3886 = vld [vmem:[%s3 + $0x138] sm:$0xff]
  %v3887 = vld [vmem:[%s3 + $0x140] sm:$0xff]
  %v3888 = vld [vmem:[%s3 + $0x148] sm:$0xff]
  %v3889 = vld [vmem:[%s3 + $0x150] sm:$0xff]
  %v3890 = vld [vmem:[%s3 + $0x158] sm:$0xff]
  %v3891 = vld [vmem:[%s3 + $0x160] sm:$0xff]
  %v3892 = vld [vmem:[%s3 + $0x168] sm:$0xff]
  %v3893 = vld [vmem:[%s3 + $0x170] sm:$0xff]
  %v3894 = vld [vmem:[%s3 + $0x178] sm:$0xff]
  %v3895 = vld [vmem:[%s3 + $0x180] sm:$0xff]
  %v3896 = vld [vmem:[%s3 + $0x188] sm:$0xff]
  %v3897 = vld [vmem:[%s3 + $0x190] sm:$0xff]
  %v3898 = vld [vmem:[%s3 + $0x198] sm:$0xff]
  %v3899 = vld [vmem:[%s3 + $0x1a0] sm:$0xff]
  %v3900 = vld [vmem:[%s3 + $0x1a8] sm:$0xff]
  %v3901 = vld [vmem:[%s3 + $0x1b0] sm:$0xff]
  %v3902 = vld [vmem:[%s3 + $0x1b8] sm:$0xff]
  %v3903 = vld [vmem:[%s3 + $0x1c0] sm:$0xff]
  %v3904 = vld [vmem:[%s3 + $0x1c8] sm:$0xff]
  %v3905 = vld [vmem:[%s3 + $0x1d0] sm:$0xff]
  %v3906 = vld [vmem:[%s3 + $0x1d8] sm:$0xff]
  %v3907 = vld [vmem:[%s3 + $0x1e0] sm:$0xff]
  %v3908 = vld [vmem:[%s3 + $0x1e8] sm:$0xff]
  %v3909 = vld [vmem:[%s3 + $0x1f0] sm:$0xff]
  %v3910 = vld [vmem:[%s3 + $0x1f8] sm:$0xff]
  %v3911 = vld [vmem:[%s4] sm:$0xf]
  %v3913 = vlaneseq
  %v3914 = vshrl.u32 %v3913, 7
  %v3915 = vsub.s32 0, %v3914
  %v3916 = vrot.slane %v3911, %v3915
  %v3917 = vlaneseq
  %v3918 = vshrl.u32 %v3917, 7
  %v3919 = vsub.s32 1, %v3918
  %v3920 = vrot.slane %v3911, %v3919
  %v3921 = vlaneseq
  %v3922 = vshrl.u32 %v3921, 7
  %v3923 = vsub.s32 2, %v3922
  %v3924 = vrot.slane %v3911, %v3923
  %v3925 = vlaneseq
  %v3926 = vshrl.u32 %v3925, 7
  %v3927 = vsub.s32 3, %v3926
  %v3928 = vrot.slane %v3911, %v3927
  %v3997 = vunpack.c.l.b16 %v3847
  %v3998 = vunpack.c.h.b16 %v3847
  %v3999 = vunpack.c.l.b16 %v3848
  %v4000 = vunpack.c.h.b16 %v3848
  %v4001 = vunpack.c.l.b16 %v3849
  %v4002 = vunpack.c.h.b16 %v3849
  %v4003 = vunpack.c.l.b16 %v3850
  %v4004 = vunpack.c.h.b16 %v3850
  %v4005 = vunpack.c.l.b16 %v3851
  %v4006 = vunpack.c.h.b16 %v3851
  %v4007 = vunpack.c.l.b16 %v3852
  %v4008 = vunpack.c.h.b16 %v3852
  %v4009 = vunpack.c.l.b16 %v3853
  %v4010 = vunpack.c.h.b16 %v3853
  %v4011 = vunpack.c.l.b16 %v3854
  %v4012 = vunpack.c.h.b16 %v3854
  %v4013 = vunpack.c.l.b16 %v3855
  %v4014 = vunpack.c.h.b16 %v3855
  %v4015 = vunpack.c.l.b16 %v3856
  %v4016 = vunpack.c.h.b16 %v3856
  %v4017 = vunpack.c.l.b16 %v3857
  %v4018 = vunpack.c.h.b16 %v3857
  %v4019 = vunpack.c.l.b16 %v3858
  %v4020 = vunpack.c.h.b16 %v3858
  %v4021 = vunpack.c.l.b16 %v3859
  %v4022 = vunpack.c.h.b16 %v3859
  %v4023 = vunpack.c.l.b16 %v3860
  %v4024 = vunpack.c.h.b16 %v3860
  %v4025 = vunpack.c.l.b16 %v3861
  %v4026 = vunpack.c.h.b16 %v3861
  %v4027 = vunpack.c.l.b16 %v3862
  %v4028 = vunpack.c.h.b16 %v3862
  %v4029 = vunpack.c.l.b16 %v3863
  %v4030 = vunpack.c.h.b16 %v3863
  %v4031 = vunpack.c.l.b16 %v3864
  %v4032 = vunpack.c.h.b16 %v3864
  %v4033 = vunpack.c.l.b16 %v3865
  %v4034 = vunpack.c.h.b16 %v3865
  %v4035 = vunpack.c.l.b16 %v3866
  %v4036 = vunpack.c.h.b16 %v3866
  %v4037 = vunpack.c.l.b16 %v3867
  %v4038 = vunpack.c.h.b16 %v3867
  %v4039 = vunpack.c.l.b16 %v3868
  %v4040 = vunpack.c.h.b16 %v3868
  %v4041 = vunpack.c.l.b16 %v3869
  %v4042 = vunpack.c.h.b16 %v3869
  %v4043 = vunpack.c.l.b16 %v3870
  %v4044 = vunpack.c.h.b16 %v3870
  %v4045 = vunpack.c.l.b16 %v3871
  %v4046 = vunpack.c.h.b16 %v3871
  %v4047 = vunpack.c.l.b16 %v3872
  %v4048 = vunpack.c.h.b16 %v3872
  %v4049 = vunpack.c.l.b16 %v3873
  %v4050 = vunpack.c.h.b16 %v3873
  %v4051 = vunpack.c.l.b16 %v3874
  %v4052 = vunpack.c.h.b16 %v3874
  %v4053 = vunpack.c.l.b16 %v3875
  %v4054 = vunpack.c.h.b16 %v3875
  %v4055 = vunpack.c.l.b16 %v3876
  %v4056 = vunpack.c.h.b16 %v3876
  %v4057 = vunpack.c.l.b16 %v3877
  %v4058 = vunpack.c.h.b16 %v3877
  %v4059 = vunpack.c.l.b16 %v3878
  %v4060 = vunpack.c.h.b16 %v3878
  %v4061 = vunpack.c.l.b16 %v3879
  %v4062 = vunpack.c.h.b16 %v3879
  %v4063 = vunpack.c.l.b16 %v3880
  %v4064 = vunpack.c.h.b16 %v3880
  %v4065 = vunpack.c.l.b16 %v3881
  %v4066 = vunpack.c.h.b16 %v3881
  %v4067 = vunpack.c.l.b16 %v3882
  %v4068 = vunpack.c.h.b16 %v3882
  %v4069 = vunpack.c.l.b16 %v3883
  %v4070 = vunpack.c.h.b16 %v3883
  %v4071 = vunpack.c.l.b16 %v3884
  %v4072 = vunpack.c.h.b16 %v3884
  %v4073 = vunpack.c.l.b16 %v3885
  %v4074 = vunpack.c.h.b16 %v3885
  %v4075 = vunpack.c.l.b16 %v3886
  %v4076 = vunpack.c.h.b16 %v3886
  %v4077 = vunpack.c.l.b16 %v3887
  %v4078 = vunpack.c.h.b16 %v3887
  %v4079 = vunpack.c.l.b16 %v3888
  %v4080 = vunpack.c.h.b16 %v3888
  %v4081 = vunpack.c.l.b16 %v3889
  %v4082 = vunpack.c.h.b16 %v3889
  %v4083 = vunpack.c.l.b16 %v3890
  %v4084 = vunpack.c.h.b16 %v3890
  %v4085 = vunpack.c.l.b16 %v3891
  %v4086 = vunpack.c.h.b16 %v3891
  %v4087 = vunpack.c.l.b16 %v3892
  %v4088 = vunpack.c.h.b16 %v3892
  %v4089 = vunpack.c.l.b16 %v3893
  %v4090 = vunpack.c.h.b16 %v3893
  %v4091 = vunpack.c.l.b16 %v3894
  %v4092 = vunpack.c.h.b16 %v3894
  %v4093 = vunpack.c.l.b16 %v3895
  %v4094 = vunpack.c.h.b16 %v3895
  %v4095 = vunpack.c.l.b16 %v3896
  %v4096 = vunpack.c.h.b16 %v3896
  %v4097 = vunpack.c.l.b16 %v3897
  %v4098 = vunpack.c.h.b16 %v3897
  %v4099 = vunpack.c.l.b16 %v3898
  %v4100 = vunpack.c.h.b16 %v3898
  %v4101 = vunpack.c.l.b16 %v3899
  %v4102 = vunpack.c.h.b16 %v3899
  %v4103 = vunpack.c.l.b16 %v3900
  %v4104 = vunpack.c.h.b16 %v3900
  %v4105 = vunpack.c.l.b16 %v3901
  %v4106 = vunpack.c.h.b16 %v3901
  %v4107 = vunpack.c.l.b16 %v3902
  %v4108 = vunpack.c.h.b16 %v3902
  %v4109 = vunpack.c.l.b16 %v3903
  %v4110 = vunpack.c.h.b16 %v3903
  %v4111 = vunpack.c.l.b16 %v3904
  %v4112 = vunpack.c.h.b16 %v3904
  %v4113 = vunpack.c.l.b16 %v3905
  %v4114 = vunpack.c.h.b16 %v3905
  %v4115 = vunpack.c.l.b16 %v3906
  %v4116 = vunpack.c.h.b16 %v3906
  %v4117 = vunpack.c.l.b16 %v3907
  %v4118 = vunpack.c.h.b16 %v3907
  %v4119 = vunpack.c.l.b16 %v3908
  %v4120 = vunpack.c.h.b16 %v3908
  %v4121 = vunpack.c.l.b16 %v3909
  %v4122 = vunpack.c.h.b16 %v3909
  %v4123 = vunpack.c.l.b16 %v3910
  %v4124 = vunpack.c.h.b16 %v3910
  %v4125 = vpack.c.b16 %v4001, %v3997
  %v4126 = vpack.c.b16 %v4002, %v3998
  %v4127 = vpack.c.b16 %v4003, %v3999
  %v4128 = vpack.c.b16 %v4004, %v4000
  %v4129 = vpack.c.b16 %v4009, %v4005
  %v4130 = vpack.c.b16 %v4010, %v4006
  %v4131 = vpack.c.b16 %v4011, %v4007
  %v4132 = vpack.c.b16 %v4012, %v4008
  %v4133 = vpack.c.b16 %v4017, %v4013
  %v4134 = vpack.c.b16 %v4018, %v4014
  %v4135 = vpack.c.b16 %v4019, %v4015
  %v4136 = vpack.c.b16 %v4020, %v4016
  %v4137 = vpack.c.b16 %v4025, %v4021
  %v4138 = vpack.c.b16 %v4026, %v4022
  %v4139 = vpack.c.b16 %v4027, %v4023
  %v4140 = vpack.c.b16 %v4028, %v4024
  %v4141 = vpack.c.b16 %v4033, %v4029
  %v4142 = vpack.c.b16 %v4034, %v4030
  %v4143 = vpack.c.b16 %v4035, %v4031
  %v4144 = vpack.c.b16 %v4036, %v4032
  %v4145 = vpack.c.b16 %v4041, %v4037
  %v4146 = vpack.c.b16 %v4042, %v4038
  %v4147 = vpack.c.b16 %v4043, %v4039
  %v4148 = vpack.c.b16 %v4044, %v4040
  %v4149 = vpack.c.b16 %v4049, %v4045
  %v4150 = vpack.c.b16 %v4050, %v4046
  %v4151 = vpack.c.b16 %v4051, %v4047
  %v4152 = vpack.c.b16 %v4052, %v4048
  %v4153 = vpack.c.b16 %v4057, %v4053
  %v4154 = vpack.c.b16 %v4058, %v4054
  %v4155 = vpack.c.b16 %v4059, %v4055
  %v4156 = vpack.c.b16 %v4060, %v4056
  %v4157 = vpack.c.b16 %v4065, %v4061
  %v4158 = vpack.c.b16 %v4066, %v4062
  %v4159 = vpack.c.b16 %v4067, %v4063
  %v4160 = vpack.c.b16 %v4068, %v4064
  %v4161 = vpack.c.b16 %v4073, %v4069
  %v4162 = vpack.c.b16 %v4074, %v4070
  %v4163 = vpack.c.b16 %v4075, %v4071
  %v4164 = vpack.c.b16 %v4076, %v4072
  %v4165 = vpack.c.b16 %v4081, %v4077
  %v4166 = vpack.c.b16 %v4082, %v4078
  %v4167 = vpack.c.b16 %v4083, %v4079
  %v4168 = vpack.c.b16 %v4084, %v4080
  %v4169 = vpack.c.b16 %v4089, %v4085
  %v4170 = vpack.c.b16 %v4090, %v4086
  %v4171 = vpack.c.b16 %v4091, %v4087
  %v4172 = vpack.c.b16 %v4092, %v4088
  %v4173 = vpack.c.b16 %v4097, %v4093
  %v4174 = vpack.c.b16 %v4098, %v4094
  %v4175 = vpack.c.b16 %v4099, %v4095
  %v4176 = vpack.c.b16 %v4100, %v4096
  %v4177 = vpack.c.b16 %v4105, %v4101
  %v4178 = vpack.c.b16 %v4106, %v4102
  %v4179 = vpack.c.b16 %v4107, %v4103
  %v4180 = vpack.c.b16 %v4108, %v4104
  %v4181 = vpack.c.b16 %v4113, %v4109
  %v4182 = vpack.c.b16 %v4114, %v4110
  %v4183 = vpack.c.b16 %v4115, %v4111
  %v4184 = vpack.c.b16 %v4116, %v4112
  %v4185 = vpack.c.b16 %v4121, %v4117
  %v4186 = vpack.c.b16 %v4122, %v4118
  %v4187 = vpack.c.b16 %v4123, %v4119
  %v4188 = vpack.c.b16 %v4124, %v4120
  %4253 = vmatprep.subr.bf16.mxu0 %v4126
  %4254 = vmatpush1.bf16.msra.mxu0 %v4125
  %4255 = vmatprep.subr.bf16.mxu0 %v4130
  %4256 = vmatpush1.bf16.msra.mxu0 %v4129
  %4257 = vmatprep.subr.bf16.mxu0 %v4134
  %4258 = vmatpush1.bf16.msra.mxu0 %v4133
  %4259 = vmatprep.subr.bf16.mxu0 %v4138
  %4260 = vmatpush1.bf16.msra.mxu0 %v4137
  %4261 = vmatprep.subr.bf16.mxu0 %v4142
  %4262 = vmatpush1.bf16.msra.mxu0 %v4141
  %4263 = vmatprep.subr.bf16.mxu0 %v4146
  %4264 = vmatpush1.bf16.msra.mxu0 %v4145
  %4265 = vmatprep.subr.bf16.mxu0 %v4150
  %4266 = vmatpush1.bf16.msra.mxu0 %v4149
  %4267 = vmatprep.subr.bf16.mxu0 %v4154
  %4268 = vmatpush1.bf16.msra.mxu0 %v4153
  %4269 = vmatprep.subr.bf16.mxu0 %v4158
  %4270 = vmatpush1.bf16.msra.mxu0 %v4157
  %4271 = vmatprep.subr.bf16.mxu0 %v4162
  %4272 = vmatpush1.bf16.msra.mxu0 %v4161
  %4273 = vmatprep.subr.bf16.mxu0 %v4166
  %4274 = vmatpush1.bf16.msra.mxu0 %v4165
  %4275 = vmatprep.subr.bf16.mxu0 %v4170
  %4276 = vmatpush1.bf16.msra.mxu0 %v4169
  %4277 = vmatprep.subr.bf16.mxu0 %v4174
  %4278 = vmatpush1.bf16.msra.mxu0 %v4173
  %4279 = vmatprep.subr.bf16.mxu0 %v4178
  %4280 = vmatpush1.bf16.msra.mxu0 %v4177
  %4281 = vmatprep.subr.bf16.mxu0 %v4182
  %4282 = vmatpush1.bf16.msra.mxu0 %v4181
  %4283 = vmatprep.subr.bf16.mxu0 %v4186
  %4284 = vmatpush1.bf16.msra.mxu0 %v4185
  %4285 = vmatprep.mubr.bf16.mxu0 %v3846
  %4286 = vmatmul.mubr.bf16.gmra.mrb[0].mxu0 %v3845
  %v4287 = vpop.f32.mrb[0].mxu0
  %v4288 = vadd.f32 %v3916, %v4287
  %v4289 = vpop.f32.mrb[0].mxu0
  %v4290 = vadd.f32 %v3920, %v4289
  %v4291 = vpop.f32.mrb[0].mxu0
  %v4292 = vpop.f32.mrb[0].mxu0
  %4293 = vdwg.mxu0
  %4294 = vmatprep.subr.bf16.mxu0 %v4128
  %4295 = vmatpush1.bf16.msra.mxu0 %v4127
  %4296 = vmatprep.subr.bf16.mxu0 %v4132
  %4297 = vmatpush1.bf16.msra.mxu0 %v4131
  %4298 = vmatprep.subr.bf16.mxu0 %v4136
  %4299 = vmatpush1.bf16.msra.mxu0 %v4135
  %4300 = vmatprep.subr.bf16.mxu0 %v4140
  %4301 = vmatpush1.bf16.msra.mxu0 %v4139
  %4302 = vmatprep.subr.bf16.mxu0 %v4144
  %4303 = vmatpush1.bf16.msra.mxu0 %v4143
  %4304 = vmatprep.subr.bf16.mxu0 %v4148
  %4305 = vmatpush1.bf16.msra.mxu0 %v4147
  %4306 = vmatprep.subr.bf16.mxu0 %v4152
  %4307 = vmatpush1.bf16.msra.mxu0 %v4151
  %4308 = vmatprep.subr.bf16.mxu0 %v4156
  %4309 = vmatpush1.bf16.msra.mxu0 %v4155
  %4310 = vmatprep.subr.bf16.mxu0 %v4160
  %4311 = vmatpush1.bf16.msra.mxu0 %v4159
  %4312 = vmatprep.subr.bf16.mxu0 %v4164
  %4313 = vmatpush1.bf16.msra.mxu0 %v4163
  %4314 = vmatprep.subr.bf16.mxu0 %v4168
  %4315 = vmatpush1.bf16.msra.mxu0 %v4167
  %4316 = vmatprep.subr.bf16.mxu0 %v4172
  %4317 = vmatpush1.bf16.msra.mxu0 %v4171
  %4318 = vmatprep.subr.bf16.mxu0 %v4176
  %4319 = vmatpush1.bf16.msra.mxu0 %v4175
  %4320 = vmatprep.subr.bf16.mxu0 %v4180
  %4321 = vmatpush1.bf16.msra.mxu0 %v4179
  %4322 = vmatprep.subr.bf16.mxu0 %v4184
  %4323 = vmatpush1.bf16.msra.mxu0 %v4183
  %4324 = vmatprep.subr.bf16.mxu0 %v4188
  %4325 = vmatpush1.bf16.msra.mxu0 %v4187
  %4326 = vmatprep.mubr.bf16.mxu0 %v3846
  %4327 = vmatmul.mubr.bf16.gmra.mrb[0].mxu0 %v3845
  %v4328 = vpop.f32.mrb[0].mxu0
  %v4329 = vadd.f32 %v3924, %v4328
  %v4330 = vpop.f32.mrb[0].mxu0
  %v4331 = vadd.f32 %v3928, %v4330
  %v4332 = vpop.f32.mrb[0].mxu0
  %v4333 = vpop.f32.mrb[0].mxu0
  %4334 = vdwg.mxu0
  %v4335 = vxor.u32 %v4288, 2147483648
  %v4336 = vmul.f32 %v4335, 1.442695
  %v4337 = vpow.pop %v4336
  %v4338 = vadd.f32 %v4337, 1.0
  %v4339 = vrcp.pop %v4338
  %v4340 = vmul.f32 1.0, %v4339
  %v4341 = vxor.u32 %v4290, 2147483648
  %v4342 = vmul.f32 %v4341, 1.442695
  %v4343 = vpow.pop %v4342
  %v4344 = vadd.f32 %v4343, 1.0
  %v4345 = vrcp.pop %v4344
  %v4346 = vmul.f32 1.0, %v4345
  %v4347 = vxor.u32 %v4329, 2147483648
  %v4348 = vmul.f32 %v4347, 1.442695
  %v4349 = vpow.pop %v4348
  %v4350 = vadd.f32 %v4349, 1.0
  %v4351 = vrcp.pop %v4350
  %v4352 = vmul.f32 1.0, %v4351
  %v4353 = vtanh.pop %v4331
  %v4354 = vmul.f32 %v4340, %v4353
  %v4355 = vmul.f32 %v4346, %v3594
  %v4356 = vadd.f32 %v4354, %v4355
  %v4357 = vtanh.pop %v4356
  %v4358 = vmul.f32 %v4352, %v4357
  %4359 = vst [vmem:[#allocation2] sm:$0xff] %v4358
  %v4360 = vpack.c.bf16 %v4358, %v4358
  %s4361 = scalar_lea.vmem %s5, 256
  %v4362 = vld [vmem:[%s4361] sm:$0xf]
  %v4363 = vld [vmem:[%s4361 + $0x4] sm:$0xf]
  %v4364 = vld [vmem:[%s4361 + $0x8] sm:$0xf]
  %v4365 = vld [vmem:[%s4361 + $0xc] sm:$0xf]
  %v4366 = vld [vmem:[%s4361 + $0x10] sm:$0xf]
  %v4367 = vld [vmem:[%s4361 + $0x14] sm:$0xf]
  %v4368 = vld [vmem:[%s4361 + $0x18] sm:$0xf]
  %v4369 = vld [vmem:[%s4361 + $0x1c] sm:$0xf]
  %v4370 = vld [vmem:[%s4361 + $0x20] sm:$0xf]
  %v4371 = vld [vmem:[%s4361 + $0x24] sm:$0xf]
  %v4372 = vld [vmem:[%s4361 + $0x28] sm:$0xf]
  %v4373 = vld [vmem:[%s4361 + $0x2c] sm:$0xf]
  %v4374 = vld [vmem:[%s4361 + $0x30] sm:$0xf]
  %v4375 = vld [vmem:[%s4361 + $0x34] sm:$0xf]
  %v4376 = vld [vmem:[%s4361 + $0x38] sm:$0xf]
  %v4377 = vld [vmem:[%s4361 + $0x3c] sm:$0xf]
  %s4378 = scalar_lea.vmem %s6, 4
  %v4379 = vld [vmem:[%s4378] sm:$0x1]
  %v4381 = vlaneseq
  %v4382 = vshrl.u32 %v4381, 7
  %v4383 = vsub.s32 0, %v4382
  %v4384 = vrot.slane %v4379, %v4383
  %v4402 = vunpack.c.l.b16 %v4362
  %v4403 = vunpack.c.l.b16 %v4363
  %v4404 = vunpack.c.l.b16 %v4364
  %v4405 = vunpack.c.l.b16 %v4365
  %v4406 = vunpack.c.l.b16 %v4366
  %v4407 = vunpack.c.l.b16 %v4367
  %v4408 = vunpack.c.l.b16 %v4368
  %v4409 = vunpack.c.l.b16 %v4369
  %v4410 = vunpack.c.l.b16 %v4370
  %v4411 = vunpack.c.l.b16 %v4371
  %v4412 = vunpack.c.l.b16 %v4372
  %v4413 = vunpack.c.l.b16 %v4373
  %v4414 = vunpack.c.l.b16 %v4374
  %v4415 = vunpack.c.l.b16 %v4375
  %v4416 = vunpack.c.l.b16 %v4376
  %v4417 = vunpack.c.l.b16 %v4377
  %v4418 = vpack.c.b16 %v4403, %v4402
  %v4419 = vpack.c.b16 %v4405, %v4404
  %v4420 = vpack.c.b16 %v4407, %v4406
  %v4421 = vpack.c.b16 %v4409, %v4408
  %v4422 = vpack.c.b16 %v4411, %v4410
  %v4423 = vpack.c.b16 %v4413, %v4412
  %v4424 = vpack.c.b16 %v4415, %v4414
  %v4425 = vpack.c.b16 %v4417, %v4416
  %4434 = vmatprep.subr.bf16.mxu0 0
  %4435 = vmatpush1.bf16.msra.mxu0 %v4418
  %4436 = vmatprep.subr.bf16.mxu0 0
  %4437 = vmatpush1.bf16.msra.mxu0 %v4419
  %4438 = vmatprep.subr.bf16.mxu0 0
  %4439 = vmatpush1.bf16.msra.mxu0 %v4420
  %4440 = vmatprep.subr.bf16.mxu0 0
  %4441 = vmatpush1.bf16.msra.mxu0 %v4421
  %4442 = vmatprep.subr.bf16.mxu0 0
  %4443 = vmatpush1.bf16.msra.mxu0 %v4422
  %4444 = vmatprep.subr.bf16.mxu0 0
  %4445 = vmatpush1.bf16.msra.mxu0 %v4423
  %4446 = vmatprep.subr.bf16.mxu0 0
  %4447 = vmatpush1.bf16.msra.mxu0 %v4424
  %4448 = vmatprep.subr.bf16.mxu0 0
  %4449 = vmatpush1.bf16.msra.mxu0 %v4425
  %4450 = vmatprep.subr.bf16.mxu0 0
  %4451 = vmatpush1.bf16.msra.mxu0 0
  %4452 = vmatprep.subr.bf16.mxu0 0
  %4453 = vmatpush1.bf16.msra.mxu0 0
  %4454 = vmatprep.subr.bf16.mxu0 0
  %4455 = vmatpush1.bf16.msra.mxu0 0
  %4456 = vmatprep.subr.bf16.mxu0 0
  %4457 = vmatpush1.bf16.msra.mxu0 0
  %4458 = vmatprep.subr.bf16.mxu0 0
  %4459 = vmatpush1.bf16.msra.mxu0 0
  %4460 = vmatprep.subr.bf16.mxu0 0
  %4461 = vmatpush1.bf16.msra.mxu0 0
  %4462 = vmatprep.subr.bf16.mxu0 0
  %4463 = vmatpush1.bf16.msra.mxu0 0
  %4464 = vmatprep.subr.bf16.mxu0 0
  %4465 = vmatpush1.bf16.msra.mxu0 0
  %4466 = vmatprep.mubr.bf16.mxu0 0
  %4467 = vmatmul.mubr.bf16.gmra.mrb[0].mxu0 %v4360
  %v4468 = vpop.f32.mrb[0].mxu0
  %v4469 = vadd.f32 %v4384, %v4468
  %v4470 = vpop.f32.mrb[0].mxu0
  %v4471 = vpop.f32.mrb[0].mxu0
  %v4472 = vpop.f32.mrb[0].mxu0
  %4473 = vdwg.mxu0
  %4474 = vmax.xlane.f32.xlu0 %v4469
  %v4475 = vpop.xlane.xlu0 %4474
  %vm4476 = vcmp.eq.f32.partialorder %v4469, %v4475
  %v4477 = vsel %vm4476, %v667, 128
  %v4478 = vand.u32 %v4477, 65535
  %v4479 = vshra.s32 %v4477, 16
  %v4480 = vcvt.s32.f32 %v4478
  %v4481 = vcvt.s32.f32 %v4479
  %4482 = vmin.xlane.f32.xlu0 %v4481
  %v4483 = vpop.xlane.xlu0 %4482
  %vm4484 = vcmp.eq.f32.partialorder %v4481, %v4483
  %v4485 = vsel %vm4484, %v4480, inf
  %4486 = vmin.xlane.f32.xlu0 %v4485
  %v4487 = vpop.xlane.xlu0 %4486
  %v4488 = vcvt.f32.s32 %v4487
  %v4489 = vcvt.f32.s32 %v4483
  %v4490 = vshll.u32 %v4489, 16
  %v4491 = vadd.s32 %v4490, %v4488
  %vm4492 = vcmp.eq.s32.totalorder %v667, %v4491
  %v4493 = vsel %vm4492, 1, 0
  %v4494 = vcvt.s32.f32 %v4493
  %v4495 = vpack.c.bf16 %v4494, %v4494
  %v4496 = vld [vmem:[%s7] sm:$0xf]
  %v4497 = vld [vmem:[%s7 + $0x4] sm:$0xf]
  %v4498 = vld [vmem:[%s7 + $0x8] sm:$0xf]
  %v4499 = vld [vmem:[%s7 + $0xc] sm:$0xf]
  %v4500 = vld [vmem:[%s7 + $0x10] sm:$0xf]
  %v4501 = vld [vmem:[%s7 + $0x14] sm:$0xf]
  %v4502 = vld [vmem:[%s7 + $0x18] sm:$0xf]
  %v4503 = vld [vmem:[%s7 + $0x1c] sm:$0xf]
  %v4504 = vld [vmem:[%s7 + $0x20] sm:$0xf]
  %v4505 = vld [vmem:[%s7 + $0x24] sm:$0xf]
  %v4506 = vld [vmem:[%s7 + $0x28] sm:$0xf]
  %v4507 = vld [vmem:[%s7 + $0x2c] sm:$0xf]
  %v4508 = vld [vmem:[%s7 + $0x30] sm:$0xf]
  %v4509 = vld [vmem:[%s7 + $0x34] sm:$0xf]
  %v4510 = vld [vmem:[%s7 + $0x38] sm:$0xf]
  %v4511 = vld [vmem:[%s7 + $0x3c] sm:$0xf]
  %v4528 = vunpack.c.l.b16 %v4496
  %v4529 = vunpack.c.l.b16 %v4497
  %v4530 = vunpack.c.l.b16 %v4498
  %v4531 = vunpack.c.l.b16 %v4499
  %v4532 = vunpack.c.l.b16 %v4500
  %v4533 = vunpack.c.l.b16 %v4501
  %v4534 = vunpack.c.l.b16 %v4502
  %v4535 = vunpack.c.l.b16 %v4503
  %v4536 = vunpack.c.l.b16 %v4504
  %v4537 = vunpack.c.l.b16 %v4505
  %v4538 = vunpack.c.l.b16 %v4506
  %v4539 = vunpack.c.l.b16 %v4507
  %v4540 = vunpack.c.l.b16 %v4508
  %v4541 = vunpack.c.l.b16 %v4509
  %v4542 = vunpack.c.l.b16 %v4510
  %v4543 = vunpack.c.l.b16 %v4511
  %v4544 = vpack.c.b16 %v4529, %v4528
  %v4545 = vpack.c.b16 %v4531, %v4530
  %v4546 = vpack.c.b16 %v4533, %v4532
  %v4547 = vpack.c.b16 %v4535, %v4534
  %v4548 = vpack.c.b16 %v4537, %v4536
  %v4549 = vpack.c.b16 %v4539, %v4538
  %v4550 = vpack.c.b16 %v4541, %v4540
  %v4551 = vpack.c.b16 %v4543, %v4542
  %4560 = vmatprep.subr.bf16.mxu0 0
  %4561 = vmatpush1.bf16.msra.mxu0 %v4544
  %4562 = vmatprep.subr.bf16.mxu0 0
  %4563 = vmatpush1.bf16.msra.mxu0 %v4545
  %4564 = vmatprep.subr.bf16.mxu0 0
  %4565 = vmatpush1.bf16.msra.mxu0 %v4546
  %4566 = vmatprep.subr.bf16.mxu0 0
  %4567 = vmatpush1.bf16.msra.mxu0 %v4547
  %4568 = vmatprep.subr.bf16.mxu0 0
  %4569 = vmatpush1.bf16.msra.mxu0 %v4548
  %4570 = vmatprep.subr.bf16.mxu0 0
  %4571 = vmatpush1.bf16.msra.mxu0 %v4549
  %4572 = vmatprep.subr.bf16.mxu0 0
  %4573 = vmatpush1.bf16.msra.mxu0 %v4550
  %4574 = vmatprep.subr.bf16.mxu0 0
  %4575 = vmatpush1.bf16.msra.mxu0 %v4551
  %4576 = vmatprep.subr.bf16.mxu0 0
  %4577 = vmatpush1.bf16.msra.mxu0 0
  %4578 = vmatprep.subr.bf16.mxu0 0
  %4579 = vmatpush1.bf16.msra.mxu0 0
  %4580 = vmatprep.subr.bf16.mxu0 0
  %4581 = vmatpush1.bf16.msra.mxu0 0
  %4582 = vmatprep.subr.bf16.mxu0 0
  %4583 = vmatpush1.bf16.msra.mxu0 0
  %4584 = vmatprep.subr.bf16.mxu0 0
  %4585 = vmatpush1.bf16.msra.mxu0 0
  %4586 = vmatprep.subr.bf16.mxu0 0
  %4587 = vmatpush1.bf16.msra.mxu0 0
  %4588 = vmatprep.subr.bf16.mxu0 0
  %4589 = vmatpush1.bf16.msra.mxu0 0
  %4590 = vmatprep.subr.bf16.mxu0 0
  %4591 = vmatpush1.bf16.msra.mxu0 0
  %4592 = vmatprep.mubr.bf16.mxu0 0
  %4593 = vmatmul.mubr.bf16.gmra.mrb[0].mxu0 %v4495
  %v4594 = vpop.f32.mrb[0].mxu0
  %v4595 = vadd.f32 0.0, %v4594
  %v4596 = vpop.f32.mrb[0].mxu0
  %v4597 = vpop.f32.mrb[0].mxu0
  %v4598 = vpop.f32.mrb[0].mxu0
  %4599 = vdwg.mxu0
  %4600 = vst [vmem:[#allocation2 + $0x8] sm:$0xff] %v4595
  %s4601 = scalar_lea.vmem %s8, 40
  %4602 = vst [vmem:[%s4601] sm:$0xff] %v4469
  %s4603 = scalar_lea.vmem %s9, 40
  %4604 = vst [vmem:[%s4603] sm:$0xff] %v4356
  %v4605 = vld [vmem:[#allocation2] sm:$0xff]
  %v4606 = vld [vmem:[#allocation2 + $0x8] sm:$0xff]
  %v4607 = vpack.c.bf16 %v4605, %v4605
  %v4608 = vpack.c.bf16 %v4606, %v4606
  %v4609 = vld [vmem:[%s3] sm:$0xff]
  %v4610 = vld [vmem:[%s3 + $0x8] sm:$0xff]
  %v4611 = vld [vmem:[%s3 + $0x10] sm:$0xff]
  %v4612 = vld [vmem:[%s3 + $0x18] sm:$0xff]
  %v4613 = vld [vmem:[%s3 + $0x20] sm:$0xff]
  %v4614 = vld [vmem:[%s3 + $0x28] sm:$0xff]
  %v4615 = vld [vmem:[%s3 + $0x30] sm:$0xff]
  %v4616 = vld [vmem:[%s3 + $0x38] sm:$0xff]
  %v4617 = vld [vmem:[%s3 + $0x40] sm:$0xff]
  %v4618 = vld [vmem:[%s3 + $0x48] sm:$0xff]
  %v4619 = vld [vmem:[%s3 + $0x50] sm:$0xff]
  %v4620 = vld [vmem:[%s3 + $0x58] sm:$0xff]
  %v4621 = vld [vmem:[%s3 + $0x60] sm:$0xff]
  %v4622 = vld [vmem:[%s3 + $0x68] sm:$0xff]
  %v4623 = vld [vmem:[%s3 + $0x70] sm:$0xff]
  %v4624 = vld [vmem:[%s3 + $0x78] sm:$0xff]
  %v4625 = vld [vmem:[%s3 + $0x80] sm:$0xff]
  %v4626 = vld [vmem:[%s3 + $0x88] sm:$0xff]
  %v4627 = vld [vmem:[%s3 + $0x90] sm:$0xff]
  %v4628 = vld [vmem:[%s3 + $0x98] sm:$0xff]
  %v4629 = vld [vmem:[%s3 + $0xa0] sm:$0xff]
  %v4630 = vld [vmem:[%s3 + $0xa8] sm:$0xff]
  %v4631 = vld [vmem:[%s3 + $0xb0] sm:$0xff]
  %v4632 = vld [vmem:[%s3 + $0xb8] sm:$0xff]
  %v4633 = vld [vmem:[%s3 + $0xc0] sm:$0xff]
  %v4634 = vld [vmem:[%s3 + $0xc8] sm:$0xff]
  %v4635 = vld [vmem:[%s3 + $0xd0] sm:$0xff]
  %v4636 = vld [vmem:[%s3 + $0xd8] sm:$0xff]
  %v4637 = vld [vmem:[%s3 + $0xe0] sm:$0xff]
  %v4638 = vld [vmem:[%s3 + $0xe8] sm:$0xff]
  %v4639 = vld [vmem:[%s3 + $0xf0] sm:$0xff]
  %v4640 = vld [vmem:[%s3 + $0xf8] sm:$0xff]
  %v4641 = vld [vmem:[%s3 + $0x100] sm:$0xff]
  %v4642 = vld [vmem:[%s3 + $0x108] sm:$0xff]
  %v4643 = vld [vmem:[%s3 + $0x110] sm:$0xff]
  %v4644 = vld [vmem:[%s3 + $0x118] sm:$0xff]
  %v4645 = vld [vmem:[%s3 + $0x120] sm:$0xff]
  %v4646 = vld [vmem:[%s3 + $0x128] sm:$0xff]
  %v4647 = vld [vmem:[%s3 + $0x130] sm:$0xff]
  %v4648 = vld [vmem:[%s3 + $0x138] sm:$0xff]
  %v4649 = vld [vmem:[%s3 + $0x140] sm:$0xff]
  %v4650 = vld [vmem:[%s3 + $0x148] sm:$0xff]
  %v4651 = vld [vmem:[%s3 + $0x150] sm:$0xff]
  %v4652 = vld [vmem:[%s3 + $0x158] sm:$0xff]
  %v4653 = vld [vmem:[%s3 + $0x160] sm:$0xff]
  %v4654 = vld [vmem:[%s3 + $0x168] sm:$0xff]
  %v4655 = vld [vmem:[%s3 + $0x170] sm:$0xff]
  %v4656 = vld [vmem:[%s3 + $0x178] sm:$0xff]
  %v4657 = vld [vmem:[%s3 + $0x180] sm:$0xff]
  %v4658 = vld [vmem:[%s3 + $0x188] sm:$0xff]
  %v4659 = vld [vmem:[%s3 + $0x190] sm:$0xff]
  %v4660 = vld [vmem:[%s3 + $0x198] sm:$0xff]
  %v4661 = vld [vmem:[%s3 + $0x1a0] sm:$0xff]
  %v4662 = vld [vmem:[%s3 + $0x1a8] sm:$0xff]
  %v4663 = vld [vmem:[%s3 + $0x1b0] sm:$0xff]
  %v4664 = vld [vmem:[%s3 + $0x1b8] sm:$0xff]
  %v4665 = vld [vmem:[%s3 + $0x1c0] sm:$0xff]
  %v4666 = vld [vmem:[%s3 + $0x1c8] sm:$0xff]
  %v4667 = vld [vmem:[%s3 + $0x1d0] sm:$0xff]
  %v4668 = vld [vmem:[%s3 + $0x1d8] sm:$0xff]
  %v4669 = vld [vmem:[%s3 + $0x1e0] sm:$0xff]
  %v4670 = vld [vmem:[%s3 + $0x1e8] sm:$0xff]
  %v4671 = vld [vmem:[%s3 + $0x1f0] sm:$0xff]
  %v4672 = vld [vmem:[%s3 + $0x1f8] sm:$0xff]
  %v4673 = vld [vmem:[%s4] sm:$0xf]
  %v4675 = vlaneseq
  %v4676 = vshrl.u32 %v4675, 7
  %v4677 = vsub.s32 0, %v4676
  %v4678 = vrot.slane %v4673, %v4677
  %v4679 = vlaneseq
  %v4680 = vshrl.u32 %v4679, 7
  %v4681 = vsub.s32 1, %v4680
  %v4682 = vrot.slane %v4673, %v4681
  %v4683 = vlaneseq
  %v4684 = vshrl.u32 %v4683, 7
  %v4685 = vsub.s32 2, %v4684
  %v4686 = vrot.slane %v4673, %v4685
  %v4687 = vlaneseq
  %v4688 = vshrl.u32 %v4687, 7
  %v4689 = vsub.s32 3, %v4688
  %v4690 = vrot.slane %v4673, %v4689
  %v4759 = vunpack.c.l.b16 %v4609
  %v4760 = vunpack.c.h.b16 %v4609
  %v4761 = vunpack.c.l.b16 %v4610
  %v4762 = vunpack.c.h.b16 %v4610
  %v4763 = vunpack.c.l.b16 %v4611
  %v4764 = vunpack.c.h.b16 %v4611
  %v4765 = vunpack.c.l.b16 %v4612
  %v4766 = vunpack.c.h.b16 %v4612
  %v4767 = vunpack.c.l.b16 %v4613
  %v4768 = vunpack.c.h.b16 %v4613
  %v4769 = vunpack.c.l.b16 %v4614
  %v4770 = vunpack.c.h.b16 %v4614
  %v4771 = vunpack.c.l.b16 %v4615
  %v4772 = vunpack.c.h.b16 %v4615
  %v4773 = vunpack.c.l.b16 %v4616
  %v4774 = vunpack.c.h.b16 %v4616
  %v4775 = vunpack.c.l.b16 %v4617
  %v4776 = vunpack.c.h.b16 %v4617
  %v4777 = vunpack.c.l.b16 %v4618
  %v4778 = vunpack.c.h.b16 %v4618
  %v4779 = vunpack.c.l.b16 %v4619
  %v4780 = vunpack.c.h.b16 %v4619
  %v4781 = vunpack.c.l.b16 %v4620
  %v4782 = vunpack.c.h.b16 %v4620
  %v4783 = vunpack.c.l.b16 %v4621
  %v4784 = vunpack.c.h.b16 %v4621
  %v4785 = vunpack.c.l.b16 %v4622
  %v4786 = vunpack.c.h.b16 %v4622
  %v4787 = vunpack.c.l.b16 %v4623
  %v4788 = vunpack.c.h.b16 %v4623
  %v4789 = vunpack.c.l.b16 %v4624
  %v4790 = vunpack.c.h.b16 %v4624
  %v4791 = vunpack.c.l.b16 %v4625
  %v4792 = vunpack.c.h.b16 %v4625
  %v4793 = vunpack.c.l.b16 %v4626
  %v4794 = vunpack.c.h.b16 %v4626
  %v4795 = vunpack.c.l.b16 %v4627
  %v4796 = vunpack.c.h.b16 %v4627
  %v4797 = vunpack.c.l.b16 %v4628
  %v4798 = vunpack.c.h.b16 %v4628
  %v4799 = vunpack.c.l.b16 %v4629
  %v4800 = vunpack.c.h.b16 %v4629
  %v4801 = vunpack.c.l.b16 %v4630
  %v4802 = vunpack.c.h.b16 %v4630
  %v4803 = vunpack.c.l.b16 %v4631
  %v4804 = vunpack.c.h.b16 %v4631
  %v4805 = vunpack.c.l.b16 %v4632
  %v4806 = vunpack.c.h.b16 %v4632
  %v4807 = vunpack.c.l.b16 %v4633
  %v4808 = vunpack.c.h.b16 %v4633
  %v4809 = vunpack.c.l.b16 %v4634
  %v4810 = vunpack.c.h.b16 %v4634
  %v4811 = vunpack.c.l.b16 %v4635
  %v4812 = vunpack.c.h.b16 %v4635
  %v4813 = vunpack.c.l.b16 %v4636
  %v4814 = vunpack.c.h.b16 %v4636
  %v4815 = vunpack.c.l.b16 %v4637
  %v4816 = vunpack.c.h.b16 %v4637
  %v4817 = vunpack.c.l.b16 %v4638
  %v4818 = vunpack.c.h.b16 %v4638
  %v4819 = vunpack.c.l.b16 %v4639
  %v4820 = vunpack.c.h.b16 %v4639
  %v4821 = vunpack.c.l.b16 %v4640
  %v4822 = vunpack.c.h.b16 %v4640
  %v4823 = vunpack.c.l.b16 %v4641
  %v4824 = vunpack.c.h.b16 %v4641
  %v4825 = vunpack.c.l.b16 %v4642
  %v4826 = vunpack.c.h.b16 %v4642
  %v4827 = vunpack.c.l.b16 %v4643
  %v4828 = vunpack.c.h.b16 %v4643
  %v4829 = vunpack.c.l.b16 %v4644
  %v4830 = vunpack.c.h.b16 %v4644
  %v4831 = vunpack.c.l.b16 %v4645
  %v4832 = vunpack.c.h.b16 %v4645
  %v4833 = vunpack.c.l.b16 %v4646
  %v4834 = vunpack.c.h.b16 %v4646
  %v4835 = vunpack.c.l.b16 %v4647
  %v4836 = vunpack.c.h.b16 %v4647
  %v4837 = vunpack.c.l.b16 %v4648
  %v4838 = vunpack.c.h.b16 %v4648
  %v4839 = vunpack.c.l.b16 %v4649
  %v4840 = vunpack.c.h.b16 %v4649
  %v4841 = vunpack.c.l.b16 %v4650
  %v4842 = vunpack.c.h.b16 %v4650
  %v4843 = vunpack.c.l.b16 %v4651
  %v4844 = vunpack.c.h.b16 %v4651
  %v4845 = vunpack.c.l.b16 %v4652
  %v4846 = vunpack.c.h.b16 %v4652
  %v4847 = vunpack.c.l.b16 %v4653
  %v4848 = vunpack.c.h.b16 %v4653
  %v4849 = vunpack.c.l.b16 %v4654
  %v4850 = vunpack.c.h.b16 %v4654
  %v4851 = vunpack.c.l.b16 %v4655
  %v4852 = vunpack.c.h.b16 %v4655
  %v4853 = vunpack.c.l.b16 %v4656
  %v4854 = vunpack.c.h.b16 %v4656
  %v4855 = vunpack.c.l.b16 %v4657
  %v4856 = vunpack.c.h.b16 %v4657
  %v4857 = vunpack.c.l.b16 %v4658
  %v4858 = vunpack.c.h.b16 %v4658
  %v4859 = vunpack.c.l.b16 %v4659
  %v4860 = vunpack.c.h.b16 %v4659
  %v4861 = vunpack.c.l.b16 %v4660
  %v4862 = vunpack.c.h.b16 %v4660
  %v4863 = vunpack.c.l.b16 %v4661
  %v4864 = vunpack.c.h.b16 %v4661
  %v4865 = vunpack.c.l.b16 %v4662
  %v4866 = vunpack.c.h.b16 %v4662
  %v4867 = vunpack.c.l.b16 %v4663
  %v4868 = vunpack.c.h.b16 %v4663
  %v4869 = vunpack.c.l.b16 %v4664
  %v4870 = vunpack.c.h.b16 %v4664
  %v4871 = vunpack.c.l.b16 %v4665
  %v4872 = vunpack.c.h.b16 %v4665
  %v4873 = vunpack.c.l.b16 %v4666
  %v4874 = vunpack.c.h.b16 %v4666
  %v4875 = vunpack.c.l.b16 %v4667
  %v4876 = vunpack.c.h.b16 %v4667
  %v4877 = vunpack.c.l.b16 %v4668
  %v4878 = vunpack.c.h.b16 %v4668
  %v4879 = vunpack.c.l.b16 %v4669
  %v4880 = vunpack.c.h.b16 %v4669
  %v4881 = vunpack.c.l.b16 %v4670
  %v4882 = vunpack.c.h.b16 %v4670
  %v4883 = vunpack.c.l.b16 %v4671
  %v4884 = vunpack.c.h.b16 %v4671
  %v4885 = vunpack.c.l.b16 %v4672
  %v4886 = vunpack.c.h.b16 %v4672
  %v4887 = vpack.c.b16 %v4763, %v4759
  %v4888 = vpack.c.b16 %v4764, %v4760
  %v4889 = vpack.c.b16 %v4765, %v4761
  %v4890 = vpack.c.b16 %v4766, %v4762
  %v4891 = vpack.c.b16 %v4771, %v4767
  %v4892 = vpack.c.b16 %v4772, %v4768
  %v4893 = vpack.c.b16 %v4773, %v4769
  %v4894 = vpack.c.b16 %v4774, %v4770
  %v4895 = vpack.c.b16 %v4779, %v4775
  %v4896 = vpack.c.b16 %v4780, %v4776
  %v4897 = vpack.c.b16 %v4781, %v4777
  %v4898 = vpack.c.b16 %v4782, %v4778
  %v4899 = vpack.c.b16 %v4787, %v4783
  %v4900 = vpack.c.b16 %v4788, %v4784
  %v4901 = vpack.c.b16 %v4789, %v4785
  %v4902 = vpack.c.b16 %v4790, %v4786
  %v4903 = vpack.c.b16 %v4795, %v4791
  %v4904 = vpack.c.b16 %v4796, %v4792
  %v4905 = vpack.c.b16 %v4797, %v4793
  %v4906 = vpack.c.b16 %v4798, %v4794
  %v4907 = vpack.c.b16 %v4803, %v4799
  %v4908 = vpack.c.b16 %v4804, %v4800
  %v4909 = vpack.c.b16 %v4805, %v4801
  %v4910 = vpack.c.b16 %v4806, %v4802
  %v4911 = vpack.c.b16 %v4811, %v4807
  %v4912 = vpack.c.b16 %v4812, %v4808
  %v4913 = vpack.c.b16 %v4813, %v4809
  %v4914 = vpack.c.b16 %v4814, %v4810
  %v4915 = vpack.c.b16 %v4819, %v4815
  %v4916 = vpack.c.b16 %v4820, %v4816
  %v4917 = vpack.c.b16 %v4821, %v4817
  %v4918 = vpack.c.b16 %v4822, %v4818
  %v4919 = vpack.c.b16 %v4827, %v4823
  %v4920 = vpack.c.b16 %v4828, %v4824
  %v4921 = vpack.c.b16 %v4829, %v4825
  %v4922 = vpack.c.b16 %v4830, %v4826
  %v4923 = vpack.c.b16 %v4835, %v4831
  %v4924 = vpack.c.b16 %v4836, %v4832
  %v4925 = vpack.c.b16 %v4837, %v4833
  %v4926 = vpack.c.b16 %v4838, %v4834
  %v4927 = vpack.c.b16 %v4843, %v4839
  %v4928 = vpack.c.b16 %v4844, %v4840
  %v4929 = vpack.c.b16 %v4845, %v4841
  %v4930 = vpack.c.b16 %v4846, %v4842
  %v4931 = vpack.c.b16 %v4851, %v4847
  %v4932 = vpack.c.b16 %v4852, %v4848
  %v4933 = vpack.c.b16 %v4853, %v4849
  %v4934 = vpack.c.b16 %v4854, %v4850
  %v4935 = vpack.c.b16 %v4859, %v4855
  %v4936 = vpack.c.b16 %v4860, %v4856
  %v4937 = vpack.c.b16 %v4861, %v4857
  %v4938 = vpack.c.b16 %v4862, %v4858
  %v4939 = vpack.c.b16 %v4867, %v4863
  %v4940 = vpack.c.b16 %v4868, %v4864
  %v4941 = vpack.c.b16 %v4869, %v4865
  %v4942 = vpack.c.b16 %v4870, %v4866
  %v4943 = vpack.c.b16 %v4875, %v4871
  %v4944 = vpack.c.b16 %v4876, %v4872
  %v4945 = vpack.c.b16 %v4877, %v4873
  %v4946 = vpack.c.b16 %v4878, %v4874
  %v4947 = vpack.c.b16 %v4883, %v4879
  %v4948 = vpack.c.b16 %v4884, %v4880
  %v4949 = vpack.c.b16 %v4885, %v4881
  %v4950 = vpack.c.b16 %v4886, %v4882
  %5015 = vmatprep.subr.bf16.mxu0 %v4888
  %5016 = vmatpush1.bf16.msra.mxu0 %v4887
  %5017 = vmatprep.subr.bf16.mxu0 %v4892
  %5018 = vmatpush1.bf16.msra.mxu0 %v4891
  %5019 = vmatprep.subr.bf16.mxu0 %v4896
  %5020 = vmatpush1.bf16.msra.mxu0 %v4895
  %5021 = vmatprep.subr.bf16.mxu0 %v4900
  %5022 = vmatpush1.bf16.msra.mxu0 %v4899
  %5023 = vmatprep.subr.bf16.mxu0 %v4904
  %5024 = vmatpush1.bf16.msra.mxu0 %v4903
  %5025 = vmatprep.subr.bf16.mxu0 %v4908
  %5026 = vmatpush1.bf16.msra.mxu0 %v4907
  %5027 = vmatprep.subr.bf16.mxu0 %v4912
  %5028 = vmatpush1.bf16.msra.mxu0 %v4911
  %5029 = vmatprep.subr.bf16.mxu0 %v4916
  %5030 = vmatpush1.bf16.msra.mxu0 %v4915
  %5031 = vmatprep.subr.bf16.mxu0 %v4920
  %5032 = vmatpush1.bf16.msra.mxu0 %v4919
  %5033 = vmatprep.subr.bf16.mxu0 %v4924
  %5034 = vmatpush1.bf16.msra.mxu0 %v4923
  %5035 = vmatprep.subr.bf16.mxu0 %v4928
  %5036 = vmatpush1.bf16.msra.mxu0 %v4927
  %5037 = vmatprep.subr.bf16.mxu0 %v4932
  %5038 = vmatpush1.bf16.msra.mxu0 %v4931
  %5039 = vmatprep.subr.bf16.mxu0 %v4936
  %5040 = vmatpush1.bf16.msra.mxu0 %v4935
  %5041 = vmatprep.subr.bf16.mxu0 %v4940
  %5042 = vmatpush1.bf16.msra.mxu0 %v4939
  %5043 = vmatprep.subr.bf16.mxu0 %v4944
  %5044 = vmatpush1.bf16.msra.mxu0 %v4943
  %5045 = vmatprep.subr.bf16.mxu0 %v4948
  %5046 = vmatpush1.bf16.msra.mxu0 %v4947
  %5047 = vmatprep.mubr.bf16.mxu0 %v4608
  %5048 = vmatmul.mubr.bf16.gmra.mrb[0].mxu0 %v4607
  %v5049 = vpop.f32.mrb[0].mxu0
  %v5050 = vadd.f32 %v4678, %v5049
  %v5051 = vpop.f32.mrb[0].mxu0
  %v5052 = vadd.f32 %v4682, %v5051
  %v5053 = vpop.f32.mrb[0].mxu0
  %v5054 = vpop.f32.mrb[0].mxu0
  %5055 = vdwg.mxu0
  %5056 = vmatprep.subr.bf16.mxu0 %v4890
  %5057 = vmatpush1.bf16.msra.mxu0 %v4889
  %5058 = vmatprep.subr.bf16.mxu0 %v4894
  %5059 = vmatpush1.bf16.msra.mxu0 %v4893
  %5060 = vmatprep.subr.bf16.mxu0 %v4898
  %5061 = vmatpush1.bf16.msra.mxu0 %v4897
  %5062 = vmatprep.subr.bf16.mxu0 %v4902
  %5063 = vmatpush1.bf16.msra.mxu0 %v4901
  %5064 = vmatprep.subr.bf16.mxu0 %v4906
  %5065 = vmatpush1.bf16.msra.mxu0 %v4905
  %5066 = vmatprep.subr.bf16.mxu0 %v4910
  %5067 = vmatpush1.bf16.msra.mxu0 %v4909
  %5068 = vmatprep.subr.bf16.mxu0 %v4914
  %5069 = vmatpush1.bf16.msra.mxu0 %v4913
  %5070 = vmatprep.subr.bf16.mxu0 %v4918
  %5071 = vmatpush1.bf16.msra.mxu0 %v4917
  %5072 = vmatprep.subr.bf16.mxu0 %v4922
  %5073 = vmatpush1.bf16.msra.mxu0 %v4921
  %5074 = vmatprep.subr.bf16.mxu0 %v4926
  %5075 = vmatpush1.bf16.msra.mxu0 %v4925
  %5076 = vmatprep.subr.bf16.mxu0 %v4930
  %5077 = vmatpush1.bf16.msra.mxu0 %v4929
  %5078 = vmatprep.subr.bf16.mxu0 %v4934
  %5079 = vmatpush1.bf16.msra.mxu0 %v4933
  %5080 = vmatprep.subr.bf16.mxu0 %v4938
  %5081 = vmatpush1.bf16.msra.mxu0 %v4937
  %5082 = vmatprep.subr.bf16.mxu0 %v4942
  %5083 = vmatpush1.bf16.msra.mxu0 %v4941
  %5084 = vmatprep.subr.bf16.mxu0 %v4946
  %5085 = vmatpush1.bf16.msra.mxu0 %v4945
  %5086 = vmatprep.subr.bf16.mxu0 %v4950
  %5087 = vmatpush1.bf16.msra.mxu0 %v4949
  %5088 = vmatprep.mubr.bf16.mxu0 %v4608
  %5089 = vmatmul.mubr.bf16.gmra.mrb[0].mxu0 %v4607
  %v5090 = vpop.f32.mrb[0].mxu0
  %v5091 = vadd.f32 %v4686, %v5090
  %v5092 = vpop.f32.mrb[0].mxu0
  %v5093 = vadd.f32 %v4690, %v5092
  %v5094 = vpop.f32.mrb[0].mxu0
  %v5095 = vpop.f32.mrb[0].mxu0
  %5096 = vdwg.mxu0
  %v5097 = vxor.u32 %v5050, 2147483648
  %v5098 = vmul.f32 %v5097, 1.442695
  %v5099 = vpow.pop %v5098
  %v5100 = vadd.f32 %v5099, 1.0
  %v5101 = vrcp.pop %v5100
  %v5102 = vmul.f32 1.0, %v5101
  %v5103 = vxor.u32 %v5052, 2147483648
  %v5104 = vmul.f32 %v5103, 1.442695
  %v5105 = vpow.pop %v5104
  %v5106 = vadd.f32 %v5105, 1.0
  %v5107 = vrcp.pop %v5106
  %v5108 = vmul.f32 1.0, %v5107
  %v5109 = vxor.u32 %v5091, 2147483648
  %v5110 = vmul.f32 %v5109, 1.442695
  %v5111 = vpow.pop %v5110
  %v5112 = vadd.f32 %v5111, 1.0
  %v5113 = vrcp.pop %v5112
  %v5114 = vmul.f32 1.0, %v5113
  %v5115 = vtanh.pop %v5093
  %v5116 = vmul.f32 %v5102, %v5115
  %v5117 = vmul.f32 %v5108, %v4356
  %v5118 = vadd.f32 %v5116, %v5117
  %v5119 = vtanh.pop %v5118
  %v5120 = vmul.f32 %v5114, %v5119
  %5121 = vst [vmem:[#allocation2] sm:$0xff] %v5120
  %v5122 = vpack.c.bf16 %v5120, %v5120
  %s5123 = scalar_lea.vmem %s5, 320
  %v5124 = vld [vmem:[%s5123] sm:$0xf]
  %v5125 = vld [vmem:[%s5123 + $0x4] sm:$0xf]
  %v5126 = vld [vmem:[%s5123 + $0x8] sm:$0xf]
  %v5127 = vld [vmem:[%s5123 + $0xc] sm:$0xf]
  %v5128 = vld [vmem:[%s5123 + $0x10] sm:$0xf]
  %v5129 = vld [vmem:[%s5123 + $0x14] sm:$0xf]
  %v5130 = vld [vmem:[%s5123 + $0x18] sm:$0xf]
  %v5131 = vld [vmem:[%s5123 + $0x1c] sm:$0xf]
  %v5132 = vld [vmem:[%s5123 + $0x20] sm:$0xf]
  %v5133 = vld [vmem:[%s5123 + $0x24] sm:$0xf]
  %v5134 = vld [vmem:[%s5123 + $0x28] sm:$0xf]
  %v5135 = vld [vmem:[%s5123 + $0x2c] sm:$0xf]
  %v5136 = vld [vmem:[%s5123 + $0x30] sm:$0xf]
  %v5137 = vld [vmem:[%s5123 + $0x34] sm:$0xf]
  %v5138 = vld [vmem:[%s5123 + $0x38] sm:$0xf]
  %v5139 = vld [vmem:[%s5123 + $0x3c] sm:$0xf]
  %s5140 = scalar_lea.vmem %s6, 5
  %v5141 = vld [vmem:[%s5140] sm:$0x1]
  %v5143 = vlaneseq
  %v5144 = vshrl.u32 %v5143, 7
  %v5145 = vsub.s32 0, %v5144
  %v5146 = vrot.slane %v5141, %v5145
  %v5164 = vunpack.c.l.b16 %v5124
  %v5165 = vunpack.c.l.b16 %v5125
  %v5166 = vunpack.c.l.b16 %v5126
  %v5167 = vunpack.c.l.b16 %v5127
  %v5168 = vunpack.c.l.b16 %v5128
  %v5169 = vunpack.c.l.b16 %v5129
  %v5170 = vunpack.c.l.b16 %v5130
  %v5171 = vunpack.c.l.b16 %v5131
  %v5172 = vunpack.c.l.b16 %v5132
  %v5173 = vunpack.c.l.b16 %v5133
  %v5174 = vunpack.c.l.b16 %v5134
  %v5175 = vunpack.c.l.b16 %v5135
  %v5176 = vunpack.c.l.b16 %v5136
  %v5177 = vunpack.c.l.b16 %v5137
  %v5178 = vunpack.c.l.b16 %v5138
  %v5179 = vunpack.c.l.b16 %v5139
  %v5180 = vpack.c.b16 %v5165, %v5164
  %v5181 = vpack.c.b16 %v5167, %v5166
  %v5182 = vpack.c.b16 %v5169, %v5168
  %v5183 = vpack.c.b16 %v5171, %v5170
  %v5184 = vpack.c.b16 %v5173, %v5172
  %v5185 = vpack.c.b16 %v5175, %v5174
  %v5186 = vpack.c.b16 %v5177, %v5176
  %v5187 = vpack.c.b16 %v5179, %v5178
  %5196 = vmatprep.subr.bf16.mxu0 0
  %5197 = vmatpush1.bf16.msra.mxu0 %v5180
  %5198 = vmatprep.subr.bf16.mxu0 0
  %5199 = vmatpush1.bf16.msra.mxu0 %v5181
  %5200 = vmatprep.subr.bf16.mxu0 0
  %5201 = vmatpush1.bf16.msra.mxu0 %v5182
  %5202 = vmatprep.subr.bf16.mxu0 0
  %5203 = vmatpush1.bf16.msra.mxu0 %v5183
  %5204 = vmatprep.subr.bf16.mxu0 0
  %5205 = vmatpush1.bf16.msra.mxu0 %v5184
  %5206 = vmatprep.subr.bf16.mxu0 0
  %5207 = vmatpush1.bf16.msra.mxu0 %v5185
  %5208 = vmatprep.subr.bf16.mxu0 0
  %5209 = vmatpush1.bf16.msra.mxu0 %v5186
  %5210 = vmatprep.subr.bf16.mxu0 0
  %5211 = vmatpush1.bf16.msra.mxu0 %v5187
  %5212 = vmatprep.subr.bf16.mxu0 0
  %5213 = vmatpush1.bf16.msra.mxu0 0
  %5214 = vmatprep.subr.bf16.mxu0 0
  %5215 = vmatpush1.bf16.msra.mxu0 0
  %5216 = vmatprep.subr.bf16.mxu0 0
  %5217 = vmatpush1.bf16.msra.mxu0 0
  %5218 = vmatprep.subr.bf16.mxu0 0
  %5219 = vmatpush1.bf16.msra.mxu0 0
  %5220 = vmatprep.subr.bf16.mxu0 0
  %5221 = vmatpush1.bf16.msra.mxu0 0
  %5222 = vmatprep.subr.bf16.mxu0 0
  %5223 = vmatpush1.bf16.msra.mxu0 0
  %5224 = vmatprep.subr.bf16.mxu0 0
  %5225 = vmatpush1.bf16.msra.mxu0 0
  %5226 = vmatprep.subr.bf16.mxu0 0
  %5227 = vmatpush1.bf16.msra.mxu0 0
  %5228 = vmatprep.mubr.bf16.mxu0 0
  %5229 = vmatmul.mubr.bf16.gmra.mrb[0].mxu0 %v5122
  %v5230 = vpop.f32.mrb[0].mxu0
  %v5231 = vadd.f32 %v5146, %v5230
  %v5232 = vpop.f32.mrb[0].mxu0
  %v5233 = vpop.f32.mrb[0].mxu0
  %v5234 = vpop.f32.mrb[0].mxu0
  %5235 = vdwg.mxu0
  %5236 = vmax.xlane.f32.xlu0 %v5231
  %v5237 = vpop.xlane.xlu0 %5236
  %vm5238 = vcmp.eq.f32.partialorder %v5231, %v5237
  %v5239 = vsel %vm5238, %v667, 128
  %v5240 = vand.u32 %v5239, 65535
  %v5241 = vshra.s32 %v5239, 16
  %v5242 = vcvt.s32.f32 %v5240
  %v5243 = vcvt.s32.f32 %v5241
  %5244 = vmin.xlane.f32.xlu0 %v5243
  %v5245 = vpop.xlane.xlu0 %5244
  %vm5246 = vcmp.eq.f32.partialorder %v5243, %v5245
  %v5247 = vsel %vm5246, %v5242, inf
  %5248 = vmin.xlane.f32.xlu0 %v5247
  %v5249 = vpop.xlane.xlu0 %5248
  %v5250 = vcvt.f32.s32 %v5249
  %v5251 = vcvt.f32.s32 %v5245
  %v5252 = vshll.u32 %v5251, 16
  %v5253 = vadd.s32 %v5252, %v5250
  %vm5254 = vcmp.eq.s32.totalorder %v667, %v5253
  %v5255 = vsel %vm5254, 1, 0
  %v5256 = vcvt.s32.f32 %v5255
  %v5257 = vpack.c.bf16 %v5256, %v5256
  %v5258 = vld [vmem:[%s7] sm:$0xf]
  %v5259 = vld [vmem:[%s7 + $0x4] sm:$0xf]
  %v5260 = vld [vmem:[%s7 + $0x8] sm:$0xf]
  %v5261 = vld [vmem:[%s7 + $0xc] sm:$0xf]
  %v5262 = vld [vmem:[%s7 + $0x10] sm:$0xf]
  %v5263 = vld [vmem:[%s7 + $0x14] sm:$0xf]
  %v5264 = vld [vmem:[%s7 + $0x18] sm:$0xf]
  %v5265 = vld [vmem:[%s7 + $0x1c] sm:$0xf]
  %v5266 = vld [vmem:[%s7 + $0x20] sm:$0xf]
  %v5267 = vld [vmem:[%s7 + $0x24] sm:$0xf]
  %v5268 = vld [vmem:[%s7 + $0x28] sm:$0xf]
  %v5269 = vld [vmem:[%s7 + $0x2c] sm:$0xf]
  %v5270 = vld [vmem:[%s7 + $0x30] sm:$0xf]
  %v5271 = vld [vmem:[%s7 + $0x34] sm:$0xf]
  %v5272 = vld [vmem:[%s7 + $0x38] sm:$0xf]
  %v5273 = vld [vmem:[%s7 + $0x3c] sm:$0xf]
  %v5290 = vunpack.c.l.b16 %v5258
  %v5291 = vunpack.c.l.b16 %v5259
  %v5292 = vunpack.c.l.b16 %v5260
  %v5293 = vunpack.c.l.b16 %v5261
  %v5294 = vunpack.c.l.b16 %v5262
  %v5295 = vunpack.c.l.b16 %v5263
  %v5296 = vunpack.c.l.b16 %v5264
  %v5297 = vunpack.c.l.b16 %v5265
  %v5298 = vunpack.c.l.b16 %v5266
  %v5299 = vunpack.c.l.b16 %v5267
  %v5300 = vunpack.c.l.b16 %v5268
  %v5301 = vunpack.c.l.b16 %v5269
  %v5302 = vunpack.c.l.b16 %v5270
  %v5303 = vunpack.c.l.b16 %v5271
  %v5304 = vunpack.c.l.b16 %v5272
  %v5305 = vunpack.c.l.b16 %v5273
  %v5306 = vpack.c.b16 %v5291, %v5290
  %v5307 = vpack.c.b16 %v5293, %v5292
  %v5308 = vpack.c.b16 %v5295, %v5294
  %v5309 = vpack.c.b16 %v5297, %v5296
  %v5310 = vpack.c.b16 %v5299, %v5298
  %v5311 = vpack.c.b16 %v5301, %v5300
  %v5312 = vpack.c.b16 %v5303, %v5302
  %v5313 = vpack.c.b16 %v5305, %v5304
  %5322 = vmatprep.subr.bf16.mxu0 0
  %5323 = vmatpush1.bf16.msra.mxu0 %v5306
  %5324 = vmatprep.subr.bf16.mxu0 0
  %5325 = vmatpush1.bf16.msra.mxu0 %v5307
  %5326 = vmatprep.subr.bf16.mxu0 0
  %5327 = vmatpush1.bf16.msra.mxu0 %v5308
  %5328 = vmatprep.subr.bf16.mxu0 0
  %5329 = vmatpush1.bf16.msra.mxu0 %v5309
  %5330 = vmatprep.subr.bf16.mxu0 0
  %5331 = vmatpush1.bf16.msra.mxu0 %v5310
  %5332 = vmatprep.subr.bf16.mxu0 0
  %5333 = vmatpush1.bf16.msra.mxu0 %v5311
  %5334 = vmatprep.subr.bf16.mxu0 0
  %5335 = vmatpush1.bf16.msra.mxu0 %v5312
  %5336 = vmatprep.subr.bf16.mxu0 0
  %5337 = vmatpush1.bf16.msra.mxu0 %v5313
  %5338 = vmatprep.subr.bf16.mxu0 0
  %5339 = vmatpush1.bf16.msra.mxu0 0
  %5340 = vmatprep.subr.bf16.mxu0 0
  %5341 = vmatpush1.bf16.msra.mxu0 0
  %5342 = vmatprep.subr.bf16.mxu0 0
  %5343 = vmatpush1.bf16.msra.mxu0 0
  %5344 = vmatprep.subr.bf16.mxu0 0
  %5345 = vmatpush1.bf16.msra.mxu0 0
  %5346 = vmatprep.subr.bf16.mxu0 0
  %5347 = vmatpush1.bf16.msra.mxu0 0
  %5348 = vmatprep.subr.bf16.mxu0 0
  %5349 = vmatpush1.bf16.msra.mxu0 0
  %5350 = vmatprep.subr.bf16.mxu0 0
  %5351 = vmatpush1.bf16.msra.mxu0 0
  %5352 = vmatprep.subr.bf16.mxu0 0
  %5353 = vmatpush1.bf16.msra.mxu0 0
  %5354 = vmatprep.mubr.bf16.mxu0 0
  %5355 = vmatmul.mubr.bf16.gmra.mrb[0].mxu0 %v5257
  %v5356 = vpop.f32.mrb[0].mxu0
  %v5357 = vadd.f32 0.0, %v5356
  %v5358 = vpop.f32.mrb[0].mxu0
  %v5359 = vpop.f32.mrb[0].mxu0
  %v5360 = vpop.f32.mrb[0].mxu0
  %5361 = vdwg.mxu0
  %5362 = vst [vmem:[#allocation2 + $0x8] sm:$0xff] %v5357
  %s5363 = scalar_lea.vmem %s8, 48
  %5364 = vst [vmem:[%s5363] sm:$0xff] %v5231
  %s5365 = scalar_lea.vmem %s9, 48
  %5366 = vst [vmem:[%s5365] sm:$0xff] %v5118
  %v5367 = vld [vmem:[#allocation2] sm:$0xff]
  %v5368 = vld [vmem:[#allocation2 + $0x8] sm:$0xff]
  %v5369 = vpack.c.bf16 %v5367, %v5367
  %v5370 = vpack.c.bf16 %v5368, %v5368
  %v5371 = vld [vmem:[%s3] sm:$0xff]
  %v5372 = vld [vmem:[%s3 + $0x8] sm:$0xff]
  %v5373 = vld [vmem:[%s3 + $0x10] sm:$0xff]
  %v5374 = vld [vmem:[%s3 + $0x18] sm:$0xff]
  %v5375 = vld [vmem:[%s3 + $0x20] sm:$0xff]
  %v5376 = vld [vmem:[%s3 + $0x28] sm:$0xff]
  %v5377 = vld [vmem:[%s3 + $0x30] sm:$0xff]
  %v5378 = vld [vmem:[%s3 + $0x38] sm:$0xff]
  %v5379 = vld [vmem:[%s3 + $0x40] sm:$0xff]
  %v5380 = vld [vmem:[%s3 + $0x48] sm:$0xff]
  %v5381 = vld [vmem:[%s3 + $0x50] sm:$0xff]
  %v5382 = vld [vmem:[%s3 + $0x58] sm:$0xff]
  %v5383 = vld [vmem:[%s3 + $0x60] sm:$0xff]
  %v5384 = vld [vmem:[%s3 + $0x68] sm:$0xff]
  %v5385 = vld [vmem:[%s3 + $0x70] sm:$0xff]
  %v5386 = vld [vmem:[%s3 + $0x78] sm:$0xff]
  %v5387 = vld [vmem:[%s3 + $0x80] sm:$0xff]
  %v5388 = vld [vmem:[%s3 + $0x88] sm:$0xff]
  %v5389 = vld [vmem:[%s3 + $0x90] sm:$0xff]
  %v5390 = vld [vmem:[%s3 + $0x98] sm:$0xff]
  %v5391 = vld [vmem:[%s3 + $0xa0] sm:$0xff]
  %v5392 = vld [vmem:[%s3 + $0xa8] sm:$0xff]
  %v5393 = vld [vmem:[%s3 + $0xb0] sm:$0xff]
  %v5394 = vld [vmem:[%s3 + $0xb8] sm:$0xff]
  %v5395 = vld [vmem:[%s3 + $0xc0] sm:$0xff]
  %v5396 = vld [vmem:[%s3 + $0xc8] sm:$0xff]
  %v5397 = vld [vmem:[%s3 + $0xd0] sm:$0xff]
  %v5398 = vld [vmem:[%s3 + $0xd8] sm:$0xff]
  %v5399 = vld [vmem:[%s3 + $0xe0] sm:$0xff]
  %v5400 = vld [vmem:[%s3 + $0xe8] sm:$0xff]
  %v5401 = vld [vmem:[%s3 + $0xf0] sm:$0xff]
  %v5402 = vld [vmem:[%s3 + $0xf8] sm:$0xff]
  %v5403 = vld [vmem:[%s3 + $0x100] sm:$0xff]
  %v5404 = vld [vmem:[%s3 + $0x108] sm:$0xff]
  %v5405 = vld [vmem:[%s3 + $0x110] sm:$0xff]
  %v5406 = vld [vmem:[%s3 + $0x118] sm:$0xff]
  %v5407 = vld [vmem:[%s3 + $0x120] sm:$0xff]
  %v5408 = vld [vmem:[%s3 + $0x128] sm:$0xff]
  %v5409 = vld [vmem:[%s3 + $0x130] sm:$0xff]
  %v5410 = vld [vmem:[%s3 + $0x138] sm:$0xff]
  %v5411 = vld [vmem:[%s3 + $0x140] sm:$0xff]
  %v5412 = vld [vmem:[%s3 + $0x148] sm:$0xff]
  %v5413 = vld [vmem:[%s3 + $0x150] sm:$0xff]
  %v5414 = vld [vmem:[%s3 + $0x158] sm:$0xff]
  %v5415 = vld [vmem:[%s3 + $0x160] sm:$0xff]
  %v5416 = vld [vmem:[%s3 + $0x168] sm:$0xff]
  %v5417 = vld [vmem:[%s3 + $0x170] sm:$0xff]
  %v5418 = vld [vmem:[%s3 + $0x178] sm:$0xff]
  %v5419 = vld [vmem:[%s3 + $0x180] sm:$0xff]
  %v5420 = vld [vmem:[%s3 + $0x188] sm:$0xff]
  %v5421 = vld [vmem:[%s3 + $0x190] sm:$0xff]
  %v5422 = vld [vmem:[%s3 + $0x198] sm:$0xff]
  %v5423 = vld [vmem:[%s3 + $0x1a0] sm:$0xff]
  %v5424 = vld [vmem:[%s3 + $0x1a8] sm:$0xff]
  %v5425 = vld [vmem:[%s3 + $0x1b0] sm:$0xff]
  %v5426 = vld [vmem:[%s3 + $0x1b8] sm:$0xff]
  %v5427 = vld [vmem:[%s3 + $0x1c0] sm:$0xff]
  %v5428 = vld [vmem:[%s3 + $0x1c8] sm:$0xff]
  %v5429 = vld [vmem:[%s3 + $0x1d0] sm:$0xff]
  %v5430 = vld [vmem:[%s3 + $0x1d8] sm:$0xff]
  %v5431 = vld [vmem:[%s3 + $0x1e0] sm:$0xff]
  %v5432 = vld [vmem:[%s3 + $0x1e8] sm:$0xff]
  %v5433 = vld [vmem:[%s3 + $0x1f0] sm:$0xff]
  %v5434 = vld [vmem:[%s3 + $0x1f8] sm:$0xff]
  %v5435 = vld [vmem:[%s4] sm:$0xf]
  %v5437 = vlaneseq
  %v5438 = vshrl.u32 %v5437, 7
  %v5439 = vsub.s32 0, %v5438
  %v5440 = vrot.slane %v5435, %v5439
  %v5441 = vlaneseq
  %v5442 = vshrl.u32 %v5441, 7
  %v5443 = vsub.s32 1, %v5442
  %v5444 = vrot.slane %v5435, %v5443
  %v5445 = vlaneseq
  %v5446 = vshrl.u32 %v5445, 7
  %v5447 = vsub.s32 2, %v5446
  %v5448 = vrot.slane %v5435, %v5447
  %v5449 = vlaneseq
  %v5450 = vshrl.u32 %v5449, 7
  %v5451 = vsub.s32 3, %v5450
  %v5452 = vrot.slane %v5435, %v5451
  %v5521 = vunpack.c.l.b16 %v5371
  %v5522 = vunpack.c.h.b16 %v5371
  %v5523 = vunpack.c.l.b16 %v5372
  %v5524 = vunpack.c.h.b16 %v5372
  %v5525 = vunpack.c.l.b16 %v5373
  %v5526 = vunpack.c.h.b16 %v5373
  %v5527 = vunpack.c.l.b16 %v5374
  %v5528 = vunpack.c.h.b16 %v5374
  %v5529 = vunpack.c.l.b16 %v5375
  %v5530 = vunpack.c.h.b16 %v5375
  %v5531 = vunpack.c.l.b16 %v5376
  %v5532 = vunpack.c.h.b16 %v5376
  %v5533 = vunpack.c.l.b16 %v5377
  %v5534 = vunpack.c.h.b16 %v5377
  %v5535 = vunpack.c.l.b16 %v5378
  %v5536 = vunpack.c.h.b16 %v5378
  %v5537 = vunpack.c.l.b16 %v5379
  %v5538 = vunpack.c.h.b16 %v5379
  %v5539 = vunpack.c.l.b16 %v5380
  %v5540 = vunpack.c.h.b16 %v5380
  %v5541 = vunpack.c.l.b16 %v5381
  %v5542 = vunpack.c.h.b16 %v5381
  %v5543 = vunpack.c.l.b16 %v5382
  %v5544 = vunpack.c.h.b16 %v5382
  %v5545 = vunpack.c.l.b16 %v5383
  %v5546 = vunpack.c.h.b16 %v5383
  %v5547 = vunpack.c.l.b16 %v5384
  %v5548 = vunpack.c.h.b16 %v5384
  %v5549 = vunpack.c.l.b16 %v5385
  %v5550 = vunpack.c.h.b16 %v5385
  %v5551 = vunpack.c.l.b16 %v5386
  %v5552 = vunpack.c.h.b16 %v5386
  %v5553 = vunpack.c.l.b16 %v5387
  %v5554 = vunpack.c.h.b16 %v5387
  %v5555 = vunpack.c.l.b16 %v5388
  %v5556 = vunpack.c.h.b16 %v5388
  %v5557 = vunpack.c.l.b16 %v5389
  %v5558 = vunpack.c.h.b16 %v5389
  %v5559 = vunpack.c.l.b16 %v5390
  %v5560 = vunpack.c.h.b16 %v5390
  %v5561 = vunpack.c.l.b16 %v5391
  %v5562 = vunpack.c.h.b16 %v5391
  %v5563 = vunpack.c.l.b16 %v5392
  %v5564 = vunpack.c.h.b16 %v5392
  %v5565 = vunpack.c.l.b16 %v5393
  %v5566 = vunpack.c.h.b16 %v5393
  %v5567 = vunpack.c.l.b16 %v5394
  %v5568 = vunpack.c.h.b16 %v5394
  %v5569 = vunpack.c.l.b16 %v5395
  %v5570 = vunpack.c.h.b16 %v5395
  %v5571 = vunpack.c.l.b16 %v5396
  %v5572 = vunpack.c.h.b16 %v5396
  %v5573 = vunpack.c.l.b16 %v5397
  %v5574 = vunpack.c.h.b16 %v5397
  %v5575 = vunpack.c.l.b16 %v5398
  %v5576 = vunpack.c.h.b16 %v5398
  %v5577 = vunpack.c.l.b16 %v5399
  %v5578 = vunpack.c.h.b16 %v5399
  %v5579 = vunpack.c.l.b16 %v5400
  %v5580 = vunpack.c.h.b16 %v5400
  %v5581 = vunpack.c.l.b16 %v5401
  %v5582 = vunpack.c.h.b16 %v5401
  %v5583 = vunpack.c.l.b16 %v5402
  %v5584 = vunpack.c.h.b16 %v5402
  %v5585 = vunpack.c.l.b16 %v5403
  %v5586 = vunpack.c.h.b16 %v5403
  %v5587 = vunpack.c.l.b16 %v5404
  %v5588 = vunpack.c.h.b16 %v5404
  %v5589 = vunpack.c.l.b16 %v5405
  %v5590 = vunpack.c.h.b16 %v5405
  %v5591 = vunpack.c.l.b16 %v5406
  %v5592 = vunpack.c.h.b16 %v5406
  %v5593 = vunpack.c.l.b16 %v5407
  %v5594 = vunpack.c.h.b16 %v5407
  %v5595 = vunpack.c.l.b16 %v5408
  %v5596 = vunpack.c.h.b16 %v5408
  %v5597 = vunpack.c.l.b16 %v5409
  %v5598 = vunpack.c.h.b16 %v5409
  %v5599 = vunpack.c.l.b16 %v5410
  %v5600 = vunpack.c.h.b16 %v5410
  %v5601 = vunpack.c.l.b16 %v5411
  %v5602 = vunpack.c.h.b16 %v5411
  %v5603 = vunpack.c.l.b16 %v5412
  %v5604 = vunpack.c.h.b16 %v5412
  %v5605 = vunpack.c.l.b16 %v5413
  %v5606 = vunpack.c.h.b16 %v5413
  %v5607 = vunpack.c.l.b16 %v5414
  %v5608 = vunpack.c.h.b16 %v5414
  %v5609 = vunpack.c.l.b16 %v5415
  %v5610 = vunpack.c.h.b16 %v5415
  %v5611 = vunpack.c.l.b16 %v5416
  %v5612 = vunpack.c.h.b16 %v5416
  %v5613 = vunpack.c.l.b16 %v5417
  %v5614 = vunpack.c.h.b16 %v5417
  %v5615 = vunpack.c.l.b16 %v5418
  %v5616 = vunpack.c.h.b16 %v5418
  %v5617 = vunpack.c.l.b16 %v5419
  %v5618 = vunpack.c.h.b16 %v5419
  %v5619 = vunpack.c.l.b16 %v5420
  %v5620 = vunpack.c.h.b16 %v5420
  %v5621 = vunpack.c.l.b16 %v5421
  %v5622 = vunpack.c.h.b16 %v5421
  %v5623 = vunpack.c.l.b16 %v5422
  %v5624 = vunpack.c.h.b16 %v5422
  %v5625 = vunpack.c.l.b16 %v5423
  %v5626 = vunpack.c.h.b16 %v5423
  %v5627 = vunpack.c.l.b16 %v5424
  %v5628 = vunpack.c.h.b16 %v5424
  %v5629 = vunpack.c.l.b16 %v5425
  %v5630 = vunpack.c.h.b16 %v5425
  %v5631 = vunpack.c.l.b16 %v5426
  %v5632 = vunpack.c.h.b16 %v5426
  %v5633 = vunpack.c.l.b16 %v5427
  %v5634 = vunpack.c.h.b16 %v5427
  %v5635 = vunpack.c.l.b16 %v5428
  %v5636 = vunpack.c.h.b16 %v5428
  %v5637 = vunpack.c.l.b16 %v5429
  %v5638 = vunpack.c.h.b16 %v5429
  %v5639 = vunpack.c.l.b16 %v5430
  %v5640 = vunpack.c.h.b16 %v5430
  %v5641 = vunpack.c.l.b16 %v5431
  %v5642 = vunpack.c.h.b16 %v5431
  %v5643 = vunpack.c.l.b16 %v5432
  %v5644 = vunpack.c.h.b16 %v5432
  %v5645 = vunpack.c.l.b16 %v5433
  %v5646 = vunpack.c.h.b16 %v5433
  %v5647 = vunpack.c.l.b16 %v5434
  %v5648 = vunpack.c.h.b16 %v5434
  %v5649 = vpack.c.b16 %v5525, %v5521
  %v5650 = vpack.c.b16 %v5526, %v5522
  %v5651 = vpack.c.b16 %v5527, %v5523
  %v5652 = vpack.c.b16 %v5528, %v5524
  %v5653 = vpack.c.b16 %v5533, %v5529
  %v5654 = vpack.c.b16 %v5534, %v5530
  %v5655 = vpack.c.b16 %v5535, %v5531
  %v5656 = vpack.c.b16 %v5536, %v5532
  %v5657 = vpack.c.b16 %v5541, %v5537
  %v5658 = vpack.c.b16 %v5542, %v5538
  %v5659 = vpack.c.b16 %v5543, %v5539
  %v5660 = vpack.c.b16 %v5544, %v5540
  %v5661 = vpack.c.b16 %v5549, %v5545
  %v5662 = vpack.c.b16 %v5550, %v5546
  %v5663 = vpack.c.b16 %v5551, %v5547
  %v5664 = vpack.c.b16 %v5552, %v5548
  %v5665 = vpack.c.b16 %v5557, %v5553
  %v5666 = vpack.c.b16 %v5558, %v5554
  %v5667 = vpack.c.b16 %v5559, %v5555
  %v5668 = vpack.c.b16 %v5560, %v5556
  %v5669 = vpack.c.b16 %v5565, %v5561
  %v5670 = vpack.c.b16 %v5566, %v5562
  %v5671 = vpack.c.b16 %v5567, %v5563
  %v5672 = vpack.c.b16 %v5568, %v5564
  %v5673 = vpack.c.b16 %v5573, %v5569
  %v5674 = vpack.c.b16 %v5574, %v5570
  %v5675 = vpack.c.b16 %v5575, %v5571
  %v5676 = vpack.c.b16 %v5576, %v5572
  %v5677 = vpack.c.b16 %v5581, %v5577
  %v5678 = vpack.c.b16 %v5582, %v5578
  %v5679 = vpack.c.b16 %v5583, %v5579
  %v5680 = vpack.c.b16 %v5584, %v5580
  %v5681 = vpack.c.b16 %v5589, %v5585
  %v5682 = vpack.c.b16 %v5590, %v5586
  %v5683 = vpack.c.b16 %v5591, %v5587
  %v5684 = vpack.c.b16 %v5592, %v5588
  %v5685 = vpack.c.b16 %v5597, %v5593
  %v5686 = vpack.c.b16 %v5598, %v5594
  %v5687 = vpack.c.b16 %v5599, %v5595
  %v5688 = vpack.c.b16 %v5600, %v5596
  %v5689 = vpack.c.b16 %v5605, %v5601
  %v5690 = vpack.c.b16 %v5606, %v5602
  %v5691 = vpack.c.b16 %v5607, %v5603
  %v5692 = vpack.c.b16 %v5608, %v5604
  %v5693 = vpack.c.b16 %v5613, %v5609
  %v5694 = vpack.c.b16 %v5614, %v5610
  %v5695 = vpack.c.b16 %v5615, %v5611
  %v5696 = vpack.c.b16 %v5616, %v5612
  %v5697 = vpack.c.b16 %v5621, %v5617
  %v5698 = vpack.c.b16 %v5622, %v5618
  %v5699 = vpack.c.b16 %v5623, %v5619
  %v5700 = vpack.c.b16 %v5624, %v5620
  %v5701 = vpack.c.b16 %v5629, %v5625
  %v5702 = vpack.c.b16 %v5630, %v5626
  %v5703 = vpack.c.b16 %v5631, %v5627
  %v5704 = vpack.c.b16 %v5632, %v5628
  %v5705 = vpack.c.b16 %v5637, %v5633
  %v5706 = vpack.c.b16 %v5638, %v5634
  %v5707 = vpack.c.b16 %v5639, %v5635
  %v5708 = vpack.c.b16 %v5640, %v5636
  %v5709 = vpack.c.b16 %v5645, %v5641
  %v5710 = vpack.c.b16 %v5646, %v5642
  %v5711 = vpack.c.b16 %v5647, %v5643
  %v5712 = vpack.c.b16 %v5648, %v5644
  %5777 = vmatprep.subr.bf16.mxu0 %v5650
  %5778 = vmatpush1.bf16.msra.mxu0 %v5649
  %5779 = vmatprep.subr.bf16.mxu0 %v5654
  %5780 = vmatpush1.bf16.msra.mxu0 %v5653
  %5781 = vmatprep.subr.bf16.mxu0 %v5658
  %5782 = vmatpush1.bf16.msra.mxu0 %v5657
  %5783 = vmatprep.subr.bf16.mxu0 %v5662
  %5784 = vmatpush1.bf16.msra.mxu0 %v5661
  %5785 = vmatprep.subr.bf16.mxu0 %v5666
  %5786 = vmatpush1.bf16.msra.mxu0 %v5665
  %5787 = vmatprep.subr.bf16.mxu0 %v5670
  %5788 = vmatpush1.bf16.msra.mxu0 %v5669
  %5789 = vmatprep.subr.bf16.mxu0 %v5674
  %5790 = vmatpush1.bf16.msra.mxu0 %v5673
  %5791 = vmatprep.subr.bf16.mxu0 %v5678
  %5792 = vmatpush1.bf16.msra.mxu0 %v5677
  %5793 = vmatprep.subr.bf16.mxu0 %v5682
  %5794 = vmatpush1.bf16.msra.mxu0 %v5681
  %5795 = vmatprep.subr.bf16.mxu0 %v5686
  %5796 = vmatpush1.bf16.msra.mxu0 %v5685
  %5797 = vmatprep.subr.bf16.mxu0 %v5690
  %5798 = vmatpush1.bf16.msra.mxu0 %v5689
  %5799 = vmatprep.subr.bf16.mxu0 %v5694
  %5800 = vmatpush1.bf16.msra.mxu0 %v5693
  %5801 = vmatprep.subr.bf16.mxu0 %v5698
  %5802 = vmatpush1.bf16.msra.mxu0 %v5697
  %5803 = vmatprep.subr.bf16.mxu0 %v5702
  %5804 = vmatpush1.bf16.msra.mxu0 %v5701
  %5805 = vmatprep.subr.bf16.mxu0 %v5706
  %5806 = vmatpush1.bf16.msra.mxu0 %v5705
  %5807 = vmatprep.subr.bf16.mxu0 %v5710
  %5808 = vmatpush1.bf16.msra.mxu0 %v5709
  %5809 = vmatprep.mubr.bf16.mxu0 %v5370
  %5810 = vmatmul.mubr.bf16.gmra.mrb[0].mxu0 %v5369
  %v5811 = vpop.f32.mrb[0].mxu0
  %v5812 = vadd.f32 %v5440, %v5811
  %v5813 = vpop.f32.mrb[0].mxu0
  %v5814 = vadd.f32 %v5444, %v5813
  %v5815 = vpop.f32.mrb[0].mxu0
  %v5816 = vpop.f32.mrb[0].mxu0
  %5817 = vdwg.mxu0
  %5818 = vmatprep.subr.bf16.mxu0 %v5652
  %5819 = vmatpush1.bf16.msra.mxu0 %v5651
  %5820 = vmatprep.subr.bf16.mxu0 %v5656
  %5821 = vmatpush1.bf16.msra.mxu0 %v5655
  %5822 = vmatprep.subr.bf16.mxu0 %v5660
  %5823 = vmatpush1.bf16.msra.mxu0 %v5659
  %5824 = vmatprep.subr.bf16.mxu0 %v5664
  %5825 = vmatpush1.bf16.msra.mxu0 %v5663
  %5826 = vmatprep.subr.bf16.mxu0 %v5668
  %5827 = vmatpush1.bf16.msra.mxu0 %v5667
  %5828 = vmatprep.subr.bf16.mxu0 %v5672
  %5829 = vmatpush1.bf16.msra.mxu0 %v5671
  %5830 = vmatprep.subr.bf16.mxu0 %v5676
  %5831 = vmatpush1.bf16.msra.mxu0 %v5675
  %5832 = vmatprep.subr.bf16.mxu0 %v5680
  %5833 = vmatpush1.bf16.msra.mxu0 %v5679
  %5834 = vmatprep.subr.bf16.mxu0 %v5684
  %5835 = vmatpush1.bf16.msra.mxu0 %v5683
  %5836 = vmatprep.subr.bf16.mxu0 %v5688
  %5837 = vmatpush1.bf16.msra.mxu0 %v5687
  %5838 = vmatprep.subr.bf16.mxu0 %v5692
  %5839 = vmatpush1.bf16.msra.mxu0 %v5691
  %5840 = vmatprep.subr.bf16.mxu0 %v5696
  %5841 = vmatpush1.bf16.msra.mxu0 %v5695
  %5842 = vmatprep.subr.bf16.mxu0 %v5700
  %5843 = vmatpush1.bf16.msra.mxu0 %v5699
  %5844 = vmatprep.subr.bf16.mxu0 %v5704
  %5845 = vmatpush1.bf16.msra.mxu0 %v5703
  %5846 = vmatprep.subr.bf16.mxu0 %v5708
  %5847 = vmatpush1.bf16.msra.mxu0 %v5707
  %5848 = vmatprep.subr.bf16.mxu0 %v5712
  %5849 = vmatpush1.bf16.msra.mxu0 %v5711
  %5850 = vmatprep.mubr.bf16.mxu0 %v5370
  %5851 = vmatmul.mubr.bf16.gmra.mrb[0].mxu0 %v5369
  %v5852 = vpop.f32.mrb[0].mxu0
  %v5853 = vadd.f32 %v5448, %v5852
  %v5854 = vpop.f32.mrb[0].mxu0
  %v5855 = vadd.f32 %v5452, %v5854
  %v5856 = vpop.f32.mrb[0].mxu0
  %v5857 = vpop.f32.mrb[0].mxu0
  %5858 = vdwg.mxu0
  %v5859 = vxor.u32 %v5812, 2147483648
  %v5860 = vmul.f32 %v5859, 1.442695
  %v5861 = vpow.pop %v5860
  %v5862 = vadd.f32 %v5861, 1.0
  %v5863 = vrcp.pop %v5862
  %v5864 = vmul.f32 1.0, %v5863
  %v5865 = vxor.u32 %v5814, 2147483648
  %v5866 = vmul.f32 %v5865, 1.442695
  %v5867 = vpow.pop %v5866
  %v5868 = vadd.f32 %v5867, 1.0
  %v5869 = vrcp.pop %v5868
  %v5870 = vmul.f32 1.0, %v5869
  %v5871 = vxor.u32 %v5853, 2147483648
  %v5872 = vmul.f32 %v5871, 1.442695
  %v5873 = vpow.pop %v5872
  %v5874 = vadd.f32 %v5873, 1.0
  %v5875 = vrcp.pop %v5874
  %v5876 = vmul.f32 1.0, %v5875
  %v5877 = vtanh.pop %v5855
  %v5878 = vmul.f32 %v5864, %v5877
  %v5879 = vmul.f32 %v5870, %v5118
  %v5880 = vadd.f32 %v5878, %v5879
  %v5881 = vtanh.pop %v5880
  %v5882 = vmul.f32 %v5876, %v5881
  %5883 = vst [vmem:[#allocation2] sm:$0xff] %v5882
  %v5884 = vpack.c.bf16 %v5882, %v5882
  %s5885 = scalar_lea.vmem %s5, 384
  %v5886 = vld [vmem:[%s5885] sm:$0xf]
  %v5887 = vld [vmem:[%s5885 + $0x4] sm:$0xf]
  %v5888 = vld [vmem:[%s5885 + $0x8] sm:$0xf]
  %v5889 = vld [vmem:[%s5885 + $0xc] sm:$0xf]
  %v5890 = vld [vmem:[%s5885 + $0x10] sm:$0xf]
  %v5891 = vld [vmem:[%s5885 + $0x14] sm:$0xf]
  %v5892 = vld [vmem:[%s5885 + $0x18] sm:$0xf]
  %v5893 = vld [vmem:[%s5885 + $0x1c] sm:$0xf]
  %v5894 = vld [vmem:[%s5885 + $0x20] sm:$0xf]
  %v5895 = vld [vmem:[%s5885 + $0x24] sm:$0xf]
  %v5896 = vld [vmem:[%s5885 + $0x28] sm:$0xf]
  %v5897 = vld [vmem:[%s5885 + $0x2c] sm:$0xf]
  %v5898 = vld [vmem:[%s5885 + $0x30] sm:$0xf]
  %v5899 = vld [vmem:[%s5885 + $0x34] sm:$0xf]
  %v5900 = vld [vmem:[%s5885 + $0x38] sm:$0xf]
  %v5901 = vld [vmem:[%s5885 + $0x3c] sm:$0xf]
  %s5902 = scalar_lea.vmem %s6, 6
  %v5903 = vld [vmem:[%s5902] sm:$0x1]
  %v5905 = vlaneseq
  %v5906 = vshrl.u32 %v5905, 7
  %v5907 = vsub.s32 0, %v5906
  %v5908 = vrot.slane %v5903, %v5907
  %v5926 = vunpack.c.l.b16 %v5886
  %v5927 = vunpack.c.l.b16 %v5887
  %v5928 = vunpack.c.l.b16 %v5888
  %v5929 = vunpack.c.l.b16 %v5889
  %v5930 = vunpack.c.l.b16 %v5890
  %v5931 = vunpack.c.l.b16 %v5891
  %v5932 = vunpack.c.l.b16 %v5892
  %v5933 = vunpack.c.l.b16 %v5893
  %v5934 = vunpack.c.l.b16 %v5894
  %v5935 = vunpack.c.l.b16 %v5895
  %v5936 = vunpack.c.l.b16 %v5896
  %v5937 = vunpack.c.l.b16 %v5897
  %v5938 = vunpack.c.l.b16 %v5898
  %v5939 = vunpack.c.l.b16 %v5899
  %v5940 = vunpack.c.l.b16 %v5900
  %v5941 = vunpack.c.l.b16 %v5901
  %v5942 = vpack.c.b16 %v5927, %v5926
  %v5943 = vpack.c.b16 %v5929, %v5928
  %v5944 = vpack.c.b16 %v5931, %v5930
  %v5945 = vpack.c.b16 %v5933, %v5932
  %v5946 = vpack.c.b16 %v5935, %v5934
  %v5947 = vpack.c.b16 %v5937, %v5936
  %v5948 = vpack.c.b16 %v5939, %v5938
  %v5949 = vpack.c.b16 %v5941, %v5940
  %5958 = vmatprep.subr.bf16.mxu0 0
  %5959 = vmatpush1.bf16.msra.mxu0 %v5942
  %5960 = vmatprep.subr.bf16.mxu0 0
  %5961 = vmatpush1.bf16.msra.mxu0 %v5943
  %5962 = vmatprep.subr.bf16.mxu0 0
  %5963 = vmatpush1.bf16.msra.mxu0 %v5944
  %5964 = vmatprep.subr.bf16.mxu0 0
  %5965 = vmatpush1.bf16.msra.mxu0 %v5945
  %5966 = vmatprep.subr.bf16.mxu0 0
  %5967 = vmatpush1.bf16.msra.mxu0 %v5946
  %5968 = vmatprep.subr.bf16.mxu0 0
  %5969 = vmatpush1.bf16.msra.mxu0 %v5947
  %5970 = vmatprep.subr.bf16.mxu0 0
  %5971 = vmatpush1.bf16.msra.mxu0 %v5948
  %5972 = vmatprep.subr.bf16.mxu0 0
  %5973 = vmatpush1.bf16.msra.mxu0 %v5949
  %5974 = vmatprep.subr.bf16.mxu0 0
  %5975 = vmatpush1.bf16.msra.mxu0 0
  %5976 = vmatprep.subr.bf16.mxu0 0
  %5977 = vmatpush1.bf16.msra.mxu0 0
  %5978 = vmatprep.subr.bf16.mxu0 0
  %5979 = vmatpush1.bf16.msra.mxu0 0
  %5980 = vmatprep.subr.bf16.mxu0 0
  %5981 = vmatpush1.bf16.msra.mxu0 0
  %5982 = vmatprep.subr.bf16.mxu0 0
  %5983 = vmatpush1.bf16.msra.mxu0 0
  %5984 = vmatprep.subr.bf16.mxu0 0
  %5985 = vmatpush1.bf16.msra.mxu0 0
  %5986 = vmatprep.subr.bf16.mxu0 0
  %5987 = vmatpush1.bf16.msra.mxu0 0
  %5988 = vmatprep.subr.bf16.mxu0 0
  %5989 = vmatpush1.bf16.msra.mxu0 0
  %5990 = vmatprep.mubr.bf16.mxu0 0
  %5991 = vmatmul.mubr.bf16.gmra.mrb[0].mxu0 %v5884
  %v5992 = vpop.f32.mrb[0].mxu0
  %v5993 = vadd.f32 %v5908, %v5992
  %v5994 = vpop.f32.mrb[0].mxu0
  %v5995 = vpop.f32.mrb[0].mxu0
  %v5996 = vpop.f32.mrb[0].mxu0
  %5997 = vdwg.mxu0
  %5998 = vmax.xlane.f32.xlu0 %v5993
  %v5999 = vpop.xlane.xlu0 %5998
  %vm6000 = vcmp.eq.f32.partialorder %v5993, %v5999
  %v6001 = vsel %vm6000, %v667, 128
  %v6002 = vand.u32 %v6001, 65535
  %v6003 = vshra.s32 %v6001, 16
  %v6004 = vcvt.s32.f32 %v6002
  %v6005 = vcvt.s32.f32 %v6003
  %6006 = vmin.xlane.f32.xlu0 %v6005
  %v6007 = vpop.xlane.xlu0 %6006
  %vm6008 = vcmp.eq.f32.partialorder %v6005, %v6007
  %v6009 = vsel %vm6008, %v6004, inf
  %6010 = vmin.xlane.f32.xlu0 %v6009
  %v6011 = vpop.xlane.xlu0 %6010
  %v6012 = vcvt.f32.s32 %v6011
  %v6013 = vcvt.f32.s32 %v6007
  %v6014 = vshll.u32 %v6013, 16
  %v6015 = vadd.s32 %v6014, %v6012
  %vm6016 = vcmp.eq.s32.totalorder %v667, %v6015
  %v6017 = vsel %vm6016, 1, 0
  %v6018 = vcvt.s32.f32 %v6017
  %v6019 = vpack.c.bf16 %v6018, %v6018
  %v6020 = vld [vmem:[%s7] sm:$0xf]
  %v6021 = vld [vmem:[%s7 + $0x4] sm:$0xf]
  %v6022 = vld [vmem:[%s7 + $0x8] sm:$0xf]
  %v6023 = vld [vmem:[%s7 + $0xc] sm:$0xf]
  %v6024 = vld [vmem:[%s7 + $0x10] sm:$0xf]
  %v6025 = vld [vmem:[%s7 + $0x14] sm:$0xf]
  %v6026 = vld [vmem:[%s7 + $0x18] sm:$0xf]
  %v6027 = vld [vmem:[%s7 + $0x1c] sm:$0xf]
  %v6028 = vld [vmem:[%s7 + $0x20] sm:$0xf]
  %v6029 = vld [vmem:[%s7 + $0x24] sm:$0xf]
  %v6030 = vld [vmem:[%s7 + $0x28] sm:$0xf]
  %v6031 = vld [vmem:[%s7 + $0x2c] sm:$0xf]
  %v6032 = vld [vmem:[%s7 + $0x30] sm:$0xf]
  %v6033 = vld [vmem:[%s7 + $0x34] sm:$0xf]
  %v6034 = vld [vmem:[%s7 + $0x38] sm:$0xf]
  %v6035 = vld [vmem:[%s7 + $0x3c] sm:$0xf]
  %v6052 = vunpack.c.l.b16 %v6020
  %v6053 = vunpack.c.l.b16 %v6021
  %v6054 = vunpack.c.l.b16 %v6022
  %v6055 = vunpack.c.l.b16 %v6023
  %v6056 = vunpack.c.l.b16 %v6024
  %v6057 = vunpack.c.l.b16 %v6025
  %v6058 = vunpack.c.l.b16 %v6026
  %v6059 = vunpack.c.l.b16 %v6027
  %v6060 = vunpack.c.l.b16 %v6028
  %v6061 = vunpack.c.l.b16 %v6029
  %v6062 = vunpack.c.l.b16 %v6030
  %v6063 = vunpack.c.l.b16 %v6031
  %v6064 = vunpack.c.l.b16 %v6032
  %v6065 = vunpack.c.l.b16 %v6033
  %v6066 = vunpack.c.l.b16 %v6034
  %v6067 = vunpack.c.l.b16 %v6035
  %v6068 = vpack.c.b16 %v6053, %v6052
  %v6069 = vpack.c.b16 %v6055, %v6054
  %v6070 = vpack.c.b16 %v6057, %v6056
  %v6071 = vpack.c.b16 %v6059, %v6058
  %v6072 = vpack.c.b16 %v6061, %v6060
  %v6073 = vpack.c.b16 %v6063, %v6062
  %v6074 = vpack.c.b16 %v6065, %v6064
  %v6075 = vpack.c.b16 %v6067, %v6066
  %6084 = vmatprep.subr.bf16.mxu0 0
  %6085 = vmatpush1.bf16.msra.mxu0 %v6068
  %6086 = vmatprep.subr.bf16.mxu0 0
  %6087 = vmatpush1.bf16.msra.mxu0 %v6069
  %6088 = vmatprep.subr.bf16.mxu0 0
  %6089 = vmatpush1.bf16.msra.mxu0 %v6070
  %6090 = vmatprep.subr.bf16.mxu0 0
  %6091 = vmatpush1.bf16.msra.mxu0 %v6071
  %6092 = vmatprep.subr.bf16.mxu0 0
  %6093 = vmatpush1.bf16.msra.mxu0 %v6072
  %6094 = vmatprep.subr.bf16.mxu0 0
  %6095 = vmatpush1.bf16.msra.mxu0 %v6073
  %6096 = vmatprep.subr.bf16.mxu0 0
  %6097 = vmatpush1.bf16.msra.mxu0 %v6074
  %6098 = vmatprep.subr.bf16.mxu0 0
  %6099 = vmatpush1.bf16.msra.mxu0 %v6075
  %6100 = vmatprep.subr.bf16.mxu0 0
  %6101 = vmatpush1.bf16.msra.mxu0 0
  %6102 = vmatprep.subr.bf16.mxu0 0
  %6103 = vmatpush1.bf16.msra.mxu0 0
  %6104 = vmatprep.subr.bf16.mxu0 0
  %6105 = vmatpush1.bf16.msra.mxu0 0
  %6106 = vmatprep.subr.bf16.mxu0 0
  %6107 = vmatpush1.bf16.msra.mxu0 0
  %6108 = vmatprep.subr.bf16.mxu0 0
  %6109 = vmatpush1.bf16.msra.mxu0 0
  %6110 = vmatprep.subr.bf16.mxu0 0
  %6111 = vmatpush1.bf16.msra.mxu0 0
  %6112 = vmatprep.subr.bf16.mxu0 0
  %6113 = vmatpush1.bf16.msra.mxu0 0
  %6114 = vmatprep.subr.bf16.mxu0 0
  %6115 = vmatpush1.bf16.msra.mxu0 0
  %6116 = vmatprep.mubr.bf16.mxu0 0
  %6117 = vmatmul.mubr.bf16.gmra.mrb[0].mxu0 %v6019
  %v6118 = vpop.f32.mrb[0].mxu0
  %v6119 = vadd.f32 0.0, %v6118
  %v6120 = vpop.f32.mrb[0].mxu0
  %v6121 = vpop.f32.mrb[0].mxu0
  %v6122 = vpop.f32.mrb[0].mxu0
  %6123 = vdwg.mxu0
  %6124 = vst [vmem:[#allocation2 + $0x8] sm:$0xff] %v6119
  %s6125 = scalar_lea.vmem %s8, 56
  %6126 = vst [vmem:[%s6125] sm:$0xff] %v5993
  %s6127 = scalar_lea.vmem %s9, 56
  %6128 = vst [vmem:[%s6127] sm:$0xff] %v5880
  // Predicated region
  $region34: #{decoder_lstm_forward.1} parent=0 // pred_check
    _
  $region35: #{decoder_lstm_forward.1} parent=0 // pred_check_branch
    %6130 = sbr.rel (0) target = $region37
  $region36: #{decoder_lstm_forward.1} parent=0 // pred_region
    _
  $region37: #{decoder_lstm_forward.1} parent=0 // pred_fallthru
    _
  // Predicated region
  $region38: #{decoder_lstm_forward.1} parent=0 // pred_check
    _
  $region39: #{decoder_lstm_forward.1} parent=0 // pred_check_branch
    %6132 = sbr.rel (0) target = $region41
  $region40: #{decoder_lstm_forward.1} parent=0 // pred_region
    _
  $region41: #{decoder_lstm_forward.1} parent=0 // pred_fallthru
    _
  // Predicated region
  $region42: #{decoder_lstm_forward.1} parent=0 // pred_check
    _
  $region43: #{decoder_lstm_forward.1} parent=0 // pred_check_branch
    %6134 = sbr.rel (0) target = $region45
  $region44: #{decoder_lstm_forward.1} parent=0 // pred_region
    _
  $region45: #{decoder_lstm_forward.1} parent=0 // pred_fallthru
    _
  // Predicated region
  $region46: #{decoder_lstm_forward.1} parent=0 // pred_check
    _
  $region47: #{decoder_lstm_forward.1} parent=0 // pred_check_branch
    %6136 = sbr.rel (0) target = $region49
  $region48: #{decoder_lstm_forward.1} parent=0 // pred_region
    _
  $region49: #{decoder_lstm_forward.1} parent=0 // pred_fallthru
    _

</llo_original>
